<compile_context>
chip_gen: v7x
topology: tpu7x:2x2x1
jax: 0.10.0
libtpu: 0.0.40
codegen_flags: <defaults>
</compile_context>

<pallas_src>
import functools

import jax
import jax.numpy as jnp
from jax.experimental import pallas as pl
from jax.experimental.pallas import tpu as pltpu

# Small synthetic BertConfig
CFG = dict(vocab=128, hidden=32, heads=4, layers=2, intermediate=64,
           max_pos=64, type_vocab=2, eps=1e-12)


def _round_up(x, m):
    return ((x + m - 1) // m) * m


# ------------------------------ fused tower kernel ------------------------------

def _bert_tower_kernel(emb_ref, mask_ref, eg_ref, eb_ref,
                       wqkv_ref, bqkv_ref, wo_ref, bo_ref, ag_ref, ab_ref,
                       w1_ref, b1_ref, w2_ref, b2_ref, fg_ref, fb_ref,
                       wp_ref, bp_ref, out_ref, x_ref,
                       *, B, S, nH, Dhp, Hp, Hreal, eps):
    """Grid = (tower, layer).  One grid step = one transformer layer of one tower.

    Padding invariant: activation columns >= Hreal (and padded per-head dims)
    are exactly zero and stay zero through every op, because weight rows/cols
    and LayerNorm gamma/beta are zero-padded.
    """
    l = pl.program_id(1)
    n_layers = pl.num_programs(1)
    BS = B * S

    # Feature mask so LayerNorm statistics run over the Hreal real features only.
    feat = (jax.lax.broadcasted_iota(jnp.int32, (1, Hp), 1) < Hreal).astype(jnp.float32)
    inv_h = 1.0 / float(Hreal)

    def layernorm(x, g, b):
        mu = jnp.sum(x, axis=-1, keepdims=True) * inv_h
        xc = (x - mu) * feat
        var = jnp.sum(xc * xc, axis=-1, keepdims=True) * inv_h
        return xc * jax.lax.rsqrt(var + eps) * g + b

    # ---- first layer step: embedding LayerNorm seeds the resident activation ----
    @pl.when(l == 0)
    def _():
        x_ref[...] = layernorm(emb_ref[0].astype(jnp.float32), eg_ref[0], eb_ref[0])

    x = x_ref[...]
    xb = x.astype(jnp.bfloat16)

    # Additive key-padding mask, [B, 1, S] (per batch row; no cross-batch scores).
    # A row whose mask is all zeros softmaxes uniformly over masked keys --
    # harmless for CLS pooling.
    add_mask = jnp.where(mask_ref[0] > 0, 0.0, -10000.0).astype(jnp.float32)[:, None, :]

    # ---- self-attention ----
    # 1/sqrt(Dh) is folded into the Q weights/bias at pack time.
    attn = bo_ref[0, 0].astype(jnp.float32)          # (1, Hp); broadcasts on first add
    for h in range(nH):
        qkv_h = jnp.dot(xb, wqkv_ref[0, 0, h],
                        preferred_element_type=jnp.float32) + bqkv_ref[0, 0, h]
        # 128-lane-aligned splits (Dhp is a multiple of 128) -> no relayout.
        q_h = qkv_h[:, 0:Dhp].reshape(B, S, Dhp).astype(jnp.bfloat16)
        k_h = qkv_h[:, Dhp:2 * Dhp].reshape(B, S, Dhp).astype(jnp.bfloat16)
        v_h = qkv_h[:, 2 * Dhp:3 * Dhp].reshape(B, S, Dhp).astype(jnp.bfloat16)
        s_h = jnp.einsum('bqd,bkd->bqk', q_h, k_h,
                         preferred_element_type=jnp.float32) + add_mask
        s_h = s_h - jnp.max(s_h, axis=-1, keepdims=True)
        p_h = jnp.exp(s_h)
        p_h = p_h / jnp.sum(p_h, axis=-1, keepdims=True)   # exact softmax (parity)
        ctx_h = jnp.einsum('bqk,bkd->bqd', p_h.astype(jnp.bfloat16), v_h,
                           preferred_element_type=jnp.float32)
        # Head merge folded into the accumulated output projection (no concat).
        attn = attn + jnp.dot(ctx_h.reshape(BS, Dhp).astype(jnp.bfloat16),
                              wo_ref[0, 0, h], preferred_element_type=jnp.float32)
    x = layernorm(attn + x, ag_ref[0, 0], ab_ref[0, 0])

    # ---- feed-forward ----
    hmid = jnp.dot(x.astype(jnp.bfloat16), w1_ref[0, 0],
                   preferred_element_type=jnp.float32) + b1_ref[0, 0]
    # TODO(synk): HF BERT uses exact erf-GELU; tanh approximation kept because
    # erf is not guaranteed to have a Mosaic lowering.
    hmid = jax.nn.gelu(hmid, approximate=True)
    ffn = jnp.dot(hmid.astype(jnp.bfloat16), w2_ref[0, 0],
                  preferred_element_type=jnp.float32) + b2_ref[0, 0]
    x = layernorm(ffn + x, fg_ref[0, 0], fb_ref[0, 0])

    x_ref[...] = x

    # ---- pooler: tanh(W @ hidden[:, 0] + b), last layer step only ----
    @pl.when(l == n_layers - 1)
    def _():
        cls = x_ref[pl.ds(0, B, stride=S), :]        # all CLS rows in one strided read
        pooled = jnp.tanh(jnp.dot(cls.astype(jnp.bfloat16), wp_ref[0],
                                  preferred_element_type=jnp.float32) + bp_ref[0])
        out_ref[0] = pooled.astype(out_ref.dtype)


# ------------------------- parameters & packing -------------------------

def _lin(key, din, dout):
    return {'w': jax.random.normal(key, (din, dout), jnp.float32) * 0.02,
            'b': jnp.zeros((dout,), jnp.float32)}


def init_bert_params(key, cfg):
    H, I = cfg['hidden'], cfg['intermediate']
    keys = jax.random.split(key, 4 + cfg['layers'])
    params = {
        'word_emb': jax.random.normal(keys[0], (cfg['vocab'], H), jnp.float32) * 0.02,
        'pos_emb': jax.random.normal(keys[1], (cfg['max_pos'], H), jnp.float32) * 0.02,
        'type_emb': jax.random.normal(keys[2], (cfg['type_vocab'], H), jnp.float32) * 0.02,
        'emb_ln_g': jnp.ones((H,), jnp.float32),
        'emb_ln_b': jnp.zeros((H,), jnp.float32),
        'pooler': _lin(keys[3], H, H),
        'layers': [],
    }
    for l in range(cfg['layers']):
        lk = jax.random.split(keys[4 + l], 6)
        params['layers'].append({
            'q': _lin(lk[0], H, H), 'k': _lin(lk[1], H, H), 'v': _lin(lk[2], H, H),
            'attn_out': _lin(lk[3], H, H),
            'attn_ln_g': jnp.ones((H,), jnp.float32),
            'attn_ln_b': jnp.zeros((H,), jnp.float32),
            'ffn_in': _lin(lk[4], H, I), 'ffn_out': _lin(lk[5], I, H),
            'ffn_ln_g': jnp.ones((H,), jnp.float32),
            'ffn_ln_b': jnp.zeros((H,), jnp.float32),
        })
    return params


def pack_tower(params, cfg, Hp, Ip, Dhp):
    """Pack one tower into per-layer, head-major, lane-padded tensors.

    Q/K/V are fused per head into a single [Hp, 3*Dhp] block (1/sqrt(Dh) folded
    into Q); matmul weights are bf16, biases/LayerNorm params stay f32.  All
    padding (including LayerNorm gamma/beta) is zero so padded lanes stay zero.
    """
    H, I, nH = cfg['hidden'], cfg['intermediate'], cfg['heads']
    Dh = H // nH
    scale = 1.0 / float(Dh) ** 0.5

    def pad2(w, r, c):
        return jnp.zeros((r, c), jnp.float32).at[:w.shape[0], :w.shape[1]].set(w)

    def pad_row(v, c):
        return jnp.zeros((1, c), jnp.float32).at[0, :v.shape[0]].set(v)

    acc = {k: [] for k in ('wqkv', 'bqkv', 'wo', 'bo', 'ag', 'ab',
                           'w1', 'b1', 'w2', 'b2', 'fg', 'fb')}
    for lyr in params['layers']:
        wq, wk, wv = lyr['q']['w'] * scale, lyr['k']['w'], lyr['v']['w']
        bq, bk, bv = lyr['q']['b'] * scale, lyr['k']['b'], lyr['v']['b']
        w_heads, b_heads, wo_heads = [], [], []
        for h in range(nH):
            sl = slice(h * Dh, (h + 1) * Dh)
            blk = jnp.zeros((Hp, 3 * Dhp), jnp.float32)
            blk = blk.at[:H, 0:Dh].set(wq[:, sl])
            blk = blk.at[:H, Dhp:Dhp + Dh].set(wk[:, sl])
            blk = blk.at[:H, 2 * Dhp:2 * Dhp + Dh].set(wv[:, sl])
            w_heads.append(blk)
            bb = jnp.zeros((1, 3 * Dhp), jnp.float32)
            bb = bb.at[0, 0:Dh].set(bq[sl])
            bb = bb.at[0, Dhp:Dhp + Dh].set(bk[sl])
            bb = bb.at[0, 2 * Dhp:2 * Dhp + Dh].set(bv[sl])
            b_heads.append(bb)
            ob = jnp.zeros((Dhp, Hp), jnp.float32)
            ob = ob.at[:Dh, :H].set(lyr['attn_out']['w'][sl, :])
            wo_heads.append(ob)
        acc['wqkv'].append(jnp.stack(w_heads, 0))
        acc['bqkv'].append(jnp.stack(b_heads, 0))
        acc['wo'].append(jnp.stack(wo_heads, 0))
        acc['bo'].append(pad_row(lyr['attn_out']['b'], Hp))
        acc['ag'].append(pad_row(lyr['attn_ln_g'], Hp))
        acc['ab'].append(pad_row(lyr['attn_ln_b'], Hp))
        acc['w1'].append(pad2(lyr['ffn_in']['w'], Hp, Ip))
        acc['b1'].append(pad_row(lyr['ffn_in']['b'], Ip))
        acc['w2'].append(pad2(lyr['ffn_out']['w'], Ip, Hp))
        acc['b2'].append(pad_row(lyr['ffn_out']['b'], Hp))
        acc['fg'].append(pad_row(lyr['ffn_ln_g'], Hp))
        acc['fb'].append(pad_row(lyr['ffn_ln_b'], Hp))

    packed = {k: jnp.stack(v, axis=0) for k, v in acc.items()}
    for k in ('wqkv', 'wo', 'w1', 'w2'):
        packed[k] = packed[k].astype(jnp.bfloat16)
    packed['eg'] = pad_row(params['emb_ln_g'], Hp)
    packed['eb'] = pad_row(params['emb_ln_b'], Hp)
    packed['wp'] = pad2(params['pooler']['w'], Hp, Hp).astype(jnp.bfloat16)
    packed['bp'] = pad_row(params['pooler']['b'], Hp)
    return packed


# ------------------------------- forward --------------------------------

def classifier_forward(stacked, emb2, mask2, cfg, B, S, Hp, Ip, Dhp):
    H, nH, L = cfg['hidden'], cfg['heads'], cfg['layers']
    BS = B * S
    T = emb2.shape[0]      # number of towers (2)

    def tower_spec(*tail):
        nz = len(tail)
        return pl.BlockSpec((1,) + tail, lambda t, l, nz=nz: (t,) + (0,) * nz)

    def layer_spec(*tail):
        nz = len(tail)
        return pl.BlockSpec((1, 1) + tail, lambda t, l, nz=nz: (t, l) + (0,) * nz)

    in_specs = [
        tower_spec(BS, Hp),                              # embedding sums (pre-LN)
        tower_spec(B, S),                                # raw int attention mask
        tower_spec(1, Hp), tower_spec(1, Hp),            # embedding LayerNorm
        layer_spec(nH, Hp, 3 * Dhp),                     # fused per-head QKV weights
        layer_spec(nH, 1, 3 * Dhp),                      # fused per-head QKV bias
        layer_spec(nH, Dhp, Hp), layer_spec(1, Hp),      # attention output dense
        layer_spec(1, Hp), layer_spec(1, Hp),            # attention LayerNorm
        layer_spec(Hp, Ip), layer_spec(1, Ip),           # FFN in
        layer_spec(Ip, Hp), layer_spec(1, Hp),           # FFN out
        layer_spec(1, Hp), layer_spec(1, Hp),            # FFN LayerNorm
        tower_spec(Hp, Hp), tower_spec(1, Hp),           # pooler
    ]

    kern = functools.partial(_bert_tower_kernel, B=B, S=S, nH=nH, Dhp=Dhp,
                             Hp=Hp, Hreal=H, eps=cfg['eps'])

    # Advisory cost estimate (matmul flops dominate).
    mm_layer = (2 * BS * Hp * 3 * Dhp * nH              # per-head fused QKV
                + 2 * B * nH * S * S * Dhp * 2          # scores + context
                + 2 * BS * Dhp * Hp * nH                # output projection
                + 2 * BS * Hp * Ip * 2)                 # FFN
    flops = T * (L * mm_layer + 2 * B * Hp * Hp)
    transcendentals = T * (L * (B * nH * S * S + BS * Ip) + B * Hp)
    w_bytes_layer = (2 * (nH * Hp * 3 * Dhp + nH * Dhp * Hp + 2 * Hp * Ip)
                     + 4 * (nH * 3 * Dhp + 4 * Hp + Ip + Hp))
    bytes_accessed = T * (L * w_bytes_layer + 4 * BS * Hp + 4 * B * S
                          + 2 * Hp * Hp + 8 * Hp + 4 * B * Hp)

    out = pl.pallas_call(
        kern,
        out_shape=jax.ShapeDtypeStruct((T, B, Hp), jnp.float32),
        grid_spec=pltpu.PrefetchScalarGridSpec(
            num_scalar_prefetch=0,
            grid=(T, L),
            in_specs=in_specs,
            out_specs=pl.BlockSpec((1, B, Hp), lambda t, l: (t, 0, 0)),
            scratch_shapes=[pltpu.VMEM((BS, Hp), jnp.float32)],   # resident activations
        ),
        compiler_params=pltpu.CompilerParams(
            # tower axis -> 2 TensorCores on v7x; layer axis carries the
            # resident activation scratch (sequential / "arbitrary").
            dimension_semantics=("parallel", "arbitrary"),
            # Raise scoped VMEM above the 16 MiB v5e default (still well under
            # v7x's 64 MiB physical).  If per-layer weight DMA is exposed at
            # real sizes, sweep pipeline_mode=pl.Buffered(3) on the weight specs.
            vmem_limit_bytes=32 * 1024 * 1024,
        ),
        cost_estimate=pl.CostEstimate(flops=flops,
                                      transcendentals=transcendentals,
                                      bytes_accessed=bytes_accessed),
    )(emb2, mask2,
      stacked['eg'], stacked['eb'],
      stacked['wqkv'], stacked['bqkv'], stacked['wo'], stacked['bo'],
      stacked['ag'], stacked['ab'],
      stacked['w1'], stacked['b1'], stacked['w2'], stacked['b2'],
      stacked['fg'], stacked['fb'],
      stacked['wp'], stacked['bp'])
    return out[0, :, :H], out[1, :, :H]


class BertClassifierPallas:
    """Mirrors DPR BertClassifier: two independent BERT towers, returns pooled outputs."""

    def __init__(self, key, cfg=CFG):
        self.cfg = cfg
        H = cfg['hidden']
        self.Hp = _round_up(H, 128)                       # lane-dense hidden dim
        self.Ip = _round_up(cfg['intermediate'], 128)     # lane-dense FFN dim
        self.Dhp = _round_up(H // cfg['heads'], 128)      # lane-aligned head dim
        kq, ka = jax.random.split(key)
        self.q_params = init_bert_params(kq, cfg)
        self.a_params = init_bert_params(ka, cfg)
        qp = pack_tower(self.q_params, cfg, self.Hp, self.Ip, self.Dhp)
        ap = pack_tower(self.a_params, cfg, self.Hp, self.Ip, self.Dhp)
        self.stacked = {k: jnp.stack([qp[k], ap[k]], axis=0) for k in qp}

    def _embed(self, params, input_ids):
        B, S = input_ids.shape
        H = self.cfg['hidden']
        # TODO(synk): embedding-table gathers stay in plain JAX (gather glue);
        # token_type_ids default to all-zeros, matching the PyTorch call.
        emb = (params['word_emb'][input_ids]
               + params['pos_emb'][:S][None, :, :]
               + params['type_emb'][0][None, None, :])
        emb = emb.reshape(B * S, H)
        return jnp.pad(emb, ((0, 0), (0, self.Hp - H)))

    def __call__(self, q_input_id, q_mask, a_input_id, a_mask):
        B, S = q_input_id.shape
        emb2 = jnp.stack([self._embed(self.q_params, q_input_id),
                          self._embed(self.a_params, a_input_id)], axis=0)
        mask2 = jnp.stack([q_mask, a_mask], axis=0).astype(jnp.int32)
        return classifier_forward(self.stacked, emb2, mask2, self.cfg,
                                  B, S, self.Hp, self.Ip, self.Dhp)


# ----------------------------------- main -----------------------------------

if __name__ == "__main__":
    key = jax.random.PRNGKey(0)
    k_param, k_q, k_a = jax.random.split(key, 3)

    B, S = 2, 8
    model = BertClassifierPallas(k_param)

    q_ids = jax.random.randint(k_q, (B, S), 0, CFG['vocab'], dtype=jnp.int32)
    a_ids = jax.random.randint(k_a, (B, S), 0, CFG['vocab'], dtype=jnp.int32)
    q_mask = jnp.ones((B, S), jnp.int32).at[:, -2:].set(0)   # last 2 tokens are padding
    a_mask = jnp.ones((B, S), jnp.int32)

    fwd = jax.jit(model.__call__)
    q_pooled, a_pooled = fwd(q_ids, q_mask, a_ids, a_mask)
    jax.block_until_ready((q_pooled, a_pooled))

    assert q_pooled.shape == (B, CFG['hidden'])
    assert a_pooled.shape == (B, CFG['hidden'])
    assert bool(jnp.all(jnp.isfinite(q_pooled))) and bool(jnp.all(jnp.isfinite(a_pooled)))
    print("KERNEL_OK")
</pallas_src>

<mosaic_0001>
module attributes {stable_mosaic.version = 11 : i64} {
  func.func @_bert_tower_kernel(%arg0: i32, %arg1: i32, %arg2: memref<1x16x128xf32, #tpu.memory_space<vmem>>, %arg3: memref<1x2x8xi32, #tpu.memory_space<vmem>>, %arg4: memref<1x1x128xf32, #tpu.memory_space<vmem>>, %arg5: memref<1x1x128xf32, #tpu.memory_space<vmem>>, %arg6: memref<1x1x4x128x384xbf16, #tpu.memory_space<vmem>>, %arg7: memref<1x1x4x1x384xf32, #tpu.memory_space<vmem>>, %arg8: memref<1x1x4x128x128xbf16, #tpu.memory_space<vmem>>, %arg9: memref<1x1x1x128xf32, #tpu.memory_space<vmem>>, %arg10: memref<1x1x1x128xf32, #tpu.memory_space<vmem>>, %arg11: memref<1x1x1x128xf32, #tpu.memory_space<vmem>>, %arg12: memref<1x1x128x128xbf16, #tpu.memory_space<vmem>>, %arg13: memref<1x1x1x128xf32, #tpu.memory_space<vmem>>, %arg14: memref<1x1x128x128xbf16, #tpu.memory_space<vmem>>, %arg15: memref<1x1x1x128xf32, #tpu.memory_space<vmem>>, %arg16: memref<1x1x1x128xf32, #tpu.memory_space<vmem>>, %arg17: memref<1x1x1x128xf32, #tpu.memory_space<vmem>>, %arg18: memref<1x128x128xbf16, #tpu.memory_space<vmem>>, %arg19: memref<1x1x128xf32, #tpu.memory_space<vmem>>, %arg20: memref<1x2x128xf32, #tpu.memory_space<vmem>>, %arg21: memref<16x128xf32, #tpu.memory_space<vmem>>) attributes {dimension_semantics = [#tpu.dimension_semantics<parallel>, #tpu.dimension_semantics<arbitrary>], iteration_bounds = array<i64: 2, 2>, scalar_prefetch = 0 : i64, scratch_operands = 1 : i64, tpu.core_type = #tpu.core_type<tc>, window_params = [{transform_indices = @transform_0, window_bounds = array<i64: 1, 16, 128>}, {transform_indices = @transform_1, window_bounds = array<i64: 1, 2, 8>}, {transform_indices = @transform_2, window_bounds = array<i64: 1, 1, 128>}, {transform_indices = @transform_3, window_bounds = array<i64: 1, 1, 128>}, {transform_indices = @transform_4, window_bounds = array<i64: 1, 1, 4, 128, 384>}, {transform_indices = @transform_5, window_bounds = array<i64: 1, 1, 4, 1, 384>}, {transform_indices = @transform_6, window_bounds = array<i64: 1, 1, 4, 128, 128>}, {transform_indices = @transform_7, window_bounds = array<i64: 1, 1, 1, 128>}, {transform_indices = @transform_8, window_bounds = array<i64: 1, 1, 1, 128>}, {transform_indices = @transform_9, window_bounds = array<i64: 1, 1, 1, 128>}, {transform_indices = @transform_10, window_bounds = array<i64: 1, 1, 128, 128>}, {transform_indices = @transform_11, window_bounds = array<i64: 1, 1, 1, 128>}, {transform_indices = @transform_12, window_bounds = array<i64: 1, 1, 128, 128>}, {transform_indices = @transform_13, window_bounds = array<i64: 1, 1, 1, 128>}, {transform_indices = @transform_14, window_bounds = array<i64: 1, 1, 1, 128>}, {transform_indices = @transform_15, window_bounds = array<i64: 1, 1, 1, 128>}, {transform_indices = @transform_16, window_bounds = array<i64: 1, 128, 128>}, {transform_indices = @transform_17, window_bounds = array<i64: 1, 1, 128>}, {transform_indices = @transform_18, window_bounds = array<i64: 1, 2, 128>}]} {
    %0 = tpu.iota {dimensions = array<i32: 1>} : vector<1x128xi32>
    %c32_i32 = arith.constant 32 : i32
    %1 = vector.broadcast %c32_i32 : i32 to vector<1x128xi32>
    %2 = arith.cmpi slt, %0, %1 : vector<1x128xi32>
    %3 = arith.extui %2 : vector<1x128xi1> to vector<1x128xi32>
    %4 = arith.sitofp %3 : vector<1x128xi32> to vector<1x128xf32>
    %c0_i32 = arith.constant 0 : i32
    %5 = arith.cmpi eq, %arg1, %c0_i32 : i32
    %6 = arith.extui %5 : i1 to i32
    %c0_i32_0 = arith.constant 0 : i32
    %7 = arith.cmpi ne, %6, %c0_i32_0 : i32
    scf.if %7 {
      %c0_143 = arith.constant 0 : index
      %c0_144 = arith.constant 0 : index
      %c0_145 = arith.constant 0 : index
      %252 = vector.load %arg2[%c0_143, %c0_144, %c0_145] : memref<1x16x128xf32, #tpu.memory_space<vmem>>, vector<1x16x128xf32>
      %253 = vector.shape_cast %252 : vector<1x16x128xf32> to vector<16x128xf32>
      %c0_146 = arith.constant 0 : index
      %c0_147 = arith.constant 0 : index
      %c0_148 = arith.constant 0 : index
      %254 = vector.load %arg4[%c0_146, %c0_147, %c0_148] : memref<1x1x128xf32, #tpu.memory_space<vmem>>, vector<1x1x128xf32>
      %255 = vector.shape_cast %254 : vector<1x1x128xf32> to vector<1x128xf32>
      %c0_149 = arith.constant 0 : index
      %c0_150 = arith.constant 0 : index
      %c0_151 = arith.constant 0 : index
      %256 = vector.load %arg5[%c0_149, %c0_150, %c0_151] : memref<1x1x128xf32, #tpu.memory_space<vmem>>, vector<1x1x128xf32>
      %257 = vector.shape_cast %256 : vector<1x1x128xf32> to vector<1x128xf32>
      %cst_152 = arith.constant dense<0.000000e+00> : vector<16xf32>
      %258 = vector.multi_reduction <add>, %253, %cst_152 [1] : vector<16x128xf32> to vector<16xf32>
      %259 = vector.shape_cast %258 : vector<16xf32> to vector<16x1xf32>
      %cst_153 = arith.constant 3.125000e-02 : f32
      %260 = vector.broadcast %cst_153 : f32 to vector<16x1xf32>
      %261 = arith.mulf %259, %260 : vector<16x1xf32>
      %262 = vector.broadcast %261 : vector<16x1xf32> to vector<16x128xf32>
      %263 = arith.subf %253, %262 : vector<16x128xf32>
      %264 = vector.broadcast %4 : vector<1x128xf32> to vector<16x128xf32>
      %265 = arith.mulf %263, %264 : vector<16x128xf32>
      %266 = arith.mulf %265, %265 : vector<16x128xf32>
      %cst_154 = arith.constant dense<0.000000e+00> : vector<16xf32>
      %267 = vector.multi_reduction <add>, %266, %cst_154 [1] : vector<16x128xf32> to vector<16xf32>
      %268 = vector.shape_cast %267 : vector<16xf32> to vector<16x1xf32>
      %cst_155 = arith.constant 3.125000e-02 : f32
      %269 = vector.broadcast %cst_155 : f32 to vector<16x1xf32>
      %270 = arith.mulf %268, %269 : vector<16x1xf32>
      %cst_156 = arith.constant 9.99999996E-13 : f32
      %271 = vector.broadcast %cst_156 : f32 to vector<16x1xf32>
      %272 = arith.addf %270, %271 : vector<16x1xf32>
      %273 = math.rsqrt %272 : vector<16x1xf32>
      %274 = vector.broadcast %273 : vector<16x1xf32> to vector<16x128xf32>
      %275 = arith.mulf %265, %274 : vector<16x128xf32>
      %276 = vector.broadcast %255 : vector<1x128xf32> to vector<16x128xf32>
      %277 = arith.mulf %275, %276 : vector<16x128xf32>
      %278 = vector.broadcast %257 : vector<1x128xf32> to vector<16x128xf32>
      %279 = arith.addf %277, %278 : vector<16x128xf32>
      %c0_157 = arith.constant 0 : index
      %c0_158 = arith.constant 0 : index
      %280 = vector.load %arg21[%c0_157, %c0_158] : memref<16x128xf32, #tpu.memory_space<vmem>>, vector<16x128xf32>
      tpu.vector_store %arg21[%c0_157, %c0_158], %279 {strides = array<i32>} : memref<16x128xf32, #tpu.memory_space<vmem>>, vector<16x128xf32>,
    } else {
    }
    %c0 = arith.constant 0 : index
    %c0_1 = arith.constant 0 : index
    %8 = vector.load %arg21[%c0, %c0_1] : memref<16x128xf32, #tpu.memory_space<vmem>>, vector<16x128xf32>
    %9 = arith.truncf %8 : vector<16x128xf32> to vector<16x128xbf16>
    %c0_2 = arith.constant 0 : index
    %c0_3 = arith.constant 0 : index
    %c0_4 = arith.constant 0 : index
    %10 = vector.load %arg3[%c0_2, %c0_3, %c0_4] : memref<1x2x8xi32, #tpu.memory_space<vmem>>, vector<1x2x8xi32>
    %11 = vector.shape_cast %10 : vector<1x2x8xi32> to vector<2x8xi32>
    %c0_i32_5 = arith.constant 0 : i32
    %12 = vector.broadcast %c0_i32_5 : i32 to vector<2x8xi32>
    %13 = arith.cmpi sgt, %11, %12 : vector<2x8xi32>
    %cst = arith.constant 0.000000e+00 : f32
    %cst_6 = arith.constant -1.000000e+04 : f32
    %14 = vector.broadcast %cst : f32 to vector<2x8xf32>
    %15 = vector.broadcast %cst_6 : f32 to vector<2x8xf32>
    %16 = arith.select %13, %14, %15 : vector<2x8xi1>, vector<2x8xf32>
    %17 = vector.shape_cast %16 : vector<2x8xf32> to vector<2x1x8xf32>
    %c0_7 = arith.constant 0 : index
    %c0_8 = arith.constant 0 : index
    %c0_9 = arith.constant 0 : index
    %c0_10 = arith.constant 0 : index
    %18 = vector.load %arg9[%c0_7, %c0_8, %c0_9, %c0_10] : memref<1x1x1x128xf32, #tpu.memory_space<vmem>>, vector<1x1x1x128xf32>
    %19 = vector.shape_cast %18 : vector<1x1x1x128xf32> to vector<1x128xf32>
    %c0_11 = arith.constant 0 : index
    %c0_12 = arith.constant 0 : index
    %c0_13 = arith.constant 0 : index
    %c0_14 = arith.constant 0 : index
    %c0_15 = arith.constant 0 : index
    %20 = vector.load %arg6[%c0_11, %c0_12, %c0_13, %c0_14, %c0_15] : memref<1x1x4x128x384xbf16, #tpu.memory_space<vmem>>, vector<1x1x1x128x384xbf16>
    %21 = vector.shape_cast %20 : vector<1x1x1x128x384xbf16> to vector<128x384xbf16>
    %cst_16 = arith.constant dense<0.000000e+00> : vector<16x384xf32>
    %22 = tpu.matmul %9, %21, %cst_16 {dimension_numbers = #tpu.dot_dimension_numbers<[1], [0], [0], [1], [0, 0, 1, 1], [], []>} : vector<16x128xbf16>, vector<128x384xbf16>, vector<16x384xf32> -> vector<16x384xf32>
    %c0_17 = arith.constant 0 : index
    %c0_18 = arith.constant 0 : index
    %c0_19 = arith.constant 0 : index
    %c0_20 = arith.constant 0 : index
    %c0_21 = arith.constant 0 : index
    %23 = vector.load %arg7[%c0_17, %c0_18, %c0_19, %c0_20, %c0_21] : memref<1x1x4x1x384xf32, #tpu.memory_space<vmem>>, vector<1x1x1x1x384xf32>
    %24 = vector.shape_cast %23 : vector<1x1x1x1x384xf32> to vector<1x384xf32>
    %25 = vector.broadcast %24 : vector<1x384xf32> to vector<16x384xf32>
    %26 = arith.addf %22, %25 : vector<16x384xf32>
    %27 = vector.extract_strided_slice %26 {offsets = [0, 0], sizes = [16, 128], strides = [1, 1]} : vector<16x384xf32> to vector<16x128xf32>
    %28 = vector.shape_cast %27 : vector<16x128xf32> to vector<2x8x128xf32>
    %29 = arith.truncf %28 : vector<2x8x128xf32> to vector<2x8x128xbf16>
    %30 = vector.extract_strided_slice %26 {offsets = [0, 128], sizes = [16, 128], strides = [1, 1]} : vector<16x384xf32> to vector<16x128xf32>
    %31 = vector.shape_cast %30 : vector<16x128xf32> to vector<2x8x128xf32>
    %32 = arith.truncf %31 : vector<2x8x128xf32> to vector<2x8x128xbf16>
    %33 = vector.extract_strided_slice %26 {offsets = [0, 256], sizes = [16, 128], strides = [1, 1]} : vector<16x384xf32> to vector<16x128xf32>
    %34 = vector.shape_cast %33 : vector<16x128xf32> to vector<2x8x128xf32>
    %35 = arith.truncf %34 : vector<2x8x128xf32> to vector<2x8x128xbf16>
    "tpu.trace_start"() <{level = 10 : i32, message = "bqd,bkd->bqk"}> : () -> ()
    %cst_22 = arith.constant dense<0.000000e+00> : vector<2x8x8xf32>
    %36 = tpu.matmul %29, %32, %cst_22 {dimension_numbers = #tpu.dot_dimension_numbers<[2], [2], [1], [1], [0, 0, 0, 1, 1, 1], [0], [0]>} : vector<2x8x128xbf16>, vector<2x8x128xbf16>, vector<2x8x8xf32> -> vector<2x8x8xf32>
    "tpu.trace_stop"() : () -> ()
    %37 = vector.broadcast %17 : vector<2x1x8xf32> to vector<2x8x8xf32>
    %38 = arith.addf %36, %37 : vector<2x8x8xf32>
    %cst_23 = arith.constant dense<0xFF800000> : vector<2x8xf32>
    %39 = vector.multi_reduction <maximumf>, %38, %cst_23 [2] : vector<2x8x8xf32> to vector<2x8xf32>
    %40 = vector.shape_cast %39 : vector<2x8xf32> to vector<2x8x1xf32>
    %41 = vector.broadcast %40 : vector<2x8x1xf32> to vector<2x8x8xf32>
    %42 = arith.subf %38, %41 : vector<2x8x8xf32>
    %43 = math.exp %42 : vector<2x8x8xf32>
    %cst_24 = arith.constant dense<0.000000e+00> : vector<2x8xf32>
    %44 = vector.multi_reduction <add>, %43, %cst_24 [2] : vector<2x8x8xf32> to vector<2x8xf32>
    %45 = vector.shape_cast %44 : vector<2x8xf32> to vector<2x8x1xf32>
    %46 = vector.broadcast %45 : vector<2x8x1xf32> to vector<2x8x8xf32>
    %47 = arith.divf %43, %46 : vector<2x8x8xf32>
    %48 = arith.truncf %47 : vector<2x8x8xf32> to vector<2x8x8xbf16>
    "tpu.trace_start"() <{level = 10 : i32, message = "bqk,bkd->bqd"}> : () -> ()
    %cst_25 = arith.constant dense<0.000000e+00> : vector<2x8x128xf32>
    %49 = tpu.matmul %48, %35, %cst_25 {dimension_numbers = #tpu.dot_dimension_numbers<[2], [1], [1], [2], [0, 0, 0, 1, 1, 2], [0], [0]>} : vector<2x8x8xbf16>, vector<2x8x128xbf16>, vector<2x8x128xf32> -> vector<2x8x128xf32>
    "tpu.trace_stop"() : () -> ()
    %50 = vector.shape_cast %49 : vector<2x8x128xf32> to vector<16x128xf32>
    %51 = arith.truncf %50 : vector<16x128xf32> to vector<16x128xbf16>
    %c0_26 = arith.constant 0 : index
    %c0_27 = arith.constant 0 : index
    %c0_28 = arith.constant 0 : index
    %c0_29 = arith.constant 0 : index
    %c0_30 = arith.constant 0 : index
    %52 = vector.load %arg8[%c0_26, %c0_27, %c0_28, %c0_29, %c0_30] : memref<1x1x4x128x128xbf16, #tpu.memory_space<vmem>>, vector<1x1x1x128x128xbf16>
    %53 = vector.shape_cast %52 : vector<1x1x1x128x128xbf16> to vector<128x128xbf16>
    %cst_31 = arith.constant dense<0.000000e+00> : vector<16x128xf32>
    %54 = tpu.matmul %51, %53, %cst_31 {dimension_numbers = #tpu.dot_dimension_numbers<[1], [0], [0], [1], [0, 0, 1, 1], [], []>} : vector<16x128xbf16>, vector<128x128xbf16>, vector<16x128xf32> -> vector<16x128xf32>
    %55 = vector.broadcast %19 : vector<1x128xf32> to vector<16x128xf32>
    %56 = arith.addf %55, %54 : vector<16x128xf32>
    %c0_32 = arith.constant 0 : index
    %c0_33 = arith.constant 0 : index
    %c1 = arith.constant 1 : index
    %c0_34 = arith.constant 0 : index
    %c0_35 = arith.constant 0 : index
    %57 = vector.load %arg6[%c0_32, %c0_33, %c1, %c0_34, %c0_35] : memref<1x1x4x128x384xbf16, #tpu.memory_space<vmem>>, vector<1x1x1x128x384xbf16>
    %58 = vector.shape_cast %57 : vector<1x1x1x128x384xbf16> to vector<128x384xbf16>
    %cst_36 = arith.constant dense<0.000000e+00> : vector<16x384xf32>
    %59 = tpu.matmul %9, %58, %cst_36 {dimension_numbers = #tpu.dot_dimension_numbers<[1], [0], [0], [1], [0, 0, 1, 1], [], []>} : vector<16x128xbf16>, vector<128x384xbf16>, vector<16x384xf32> -> vector<16x384xf32>
    %c0_37 = arith.constant 0 : index
    %c0_38 = arith.constant 0 : index
    %c1_39 = arith.constant 1 : index
    %c0_40 = arith.constant 0 : index
    %c0_41 = arith.constant 0 : index
    %60 = vector.load %arg7[%c0_37, %c0_38, %c1_39, %c0_40, %c0_41] : memref<1x1x4x1x384xf32, #tpu.memory_space<vmem>>, vector<1x1x1x1x384xf32>
    %61 = vector.shape_cast %60 : vector<1x1x1x1x384xf32> to vector<1x384xf32>
    %62 = vector.broadcast %61 : vector<1x384xf32> to vector<16x384xf32>
    %63 = arith.addf %59, %62 : vector<16x384xf32>
    %64 = vector.extract_strided_slice %63 {offsets = [0, 0], sizes = [16, 128], strides = [1, 1]} : vector<16x384xf32> to vector<16x128xf32>
    %65 = vector.shape_cast %64 : vector<16x128xf32> to vector<2x8x128xf32>
    %66 = arith.truncf %65 : vector<2x8x128xf32> to vector<2x8x128xbf16>
    %67 = vector.extract_strided_slice %63 {offsets = [0, 128], sizes = [16, 128], strides = [1, 1]} : vector<16x384xf32> to vector<16x128xf32>
    %68 = vector.shape_cast %67 : vector<16x128xf32> to vector<2x8x128xf32>
    %69 = arith.truncf %68 : vector<2x8x128xf32> to vector<2x8x128xbf16>
    %70 = vector.extract_strided_slice %63 {offsets = [0, 256], sizes = [16, 128], strides = [1, 1]} : vector<16x384xf32> to vector<16x128xf32>
    %71 = vector.shape_cast %70 : vector<16x128xf32> to vector<2x8x128xf32>
    %72 = arith.truncf %71 : vector<2x8x128xf32> to vector<2x8x128xbf16>
    "tpu.trace_start"() <{level = 10 : i32, message = "bqd,bkd->bqk"}> : () -> ()
    %cst_42 = arith.constant dense<0.000000e+00> : vector<2x8x8xf32>
    %73 = tpu.matmul %66, %69, %cst_42 {dimension_numbers = #tpu.dot_dimension_numbers<[2], [2], [1], [1], [0, 0, 0, 1, 1, 1], [0], [0]>} : vector<2x8x128xbf16>, vector<2x8x128xbf16>, vector<2x8x8xf32> -> vector<2x8x8xf32>
    "tpu.trace_stop"() : () -> ()
    %74 = vector.broadcast %17 : vector<2x1x8xf32> to vector<2x8x8xf32>
    %75 = arith.addf %73, %74 : vector<2x8x8xf32>
    %cst_43 = arith.constant dense<0xFF800000> : vector<2x8xf32>
    %76 = vector.multi_reduction <maximumf>, %75, %cst_43 [2] : vector<2x8x8xf32> to vector<2x8xf32>
    %77 = vector.shape_cast %76 : vector<2x8xf32> to vector<2x8x1xf32>
    %78 = vector.broadcast %77 : vector<2x8x1xf32> to vector<2x8x8xf32>
    %79 = arith.subf %75, %78 : vector<2x8x8xf32>
    %80 = math.exp %79 : vector<2x8x8xf32>
    %cst_44 = arith.constant dense<0.000000e+00> : vector<2x8xf32>
    %81 = vector.multi_reduction <add>, %80, %cst_44 [2] : vector<2x8x8xf32> to vector<2x8xf32>
    %82 = vector.shape_cast %81 : vector<2x8xf32> to vector<2x8x1xf32>
    %83 = vector.broadcast %82 : vector<2x8x1xf32> to vector<2x8x8xf32>
    %84 = arith.divf %80, %83 : vector<2x8x8xf32>
    %85 = arith.truncf %84 : vector<2x8x8xf32> to vector<2x8x8xbf16>
    "tpu.trace_start"() <{level = 10 : i32, message = "bqk,bkd->bqd"}> : () -> ()
    %cst_45 = arith.constant dense<0.000000e+00> : vector<2x8x128xf32>
    %86 = tpu.matmul %85, %72, %cst_45 {dimension_numbers = #tpu.dot_dimension_numbers<[2], [1], [1], [2], [0, 0, 0, 1, 1, 2], [0], [0]>} : vector<2x8x8xbf16>, vector<2x8x128xbf16>, vector<2x8x128xf32> -> vector<2x8x128xf32>
    "tpu.trace_stop"() : () -> ()
    %87 = vector.shape_cast %86 : vector<2x8x128xf32> to vector<16x128xf32>
    %88 = arith.truncf %87 : vector<16x128xf32> to vector<16x128xbf16>
    %c0_46 = arith.constant 0 : index
    %c0_47 = arith.constant 0 : index
    %c1_48 = arith.constant 1 : index
    %c0_49 = arith.constant 0 : index
    %c0_50 = arith.constant 0 : index
    %89 = vector.load %arg8[%c0_46, %c0_47, %c1_48, %c0_49, %c0_50] : memref<1x1x4x128x128xbf16, #tpu.memory_space<vmem>>, vector<1x1x1x128x128xbf16>
    %90 = vector.shape_cast %89 : vector<1x1x1x128x128xbf16> to vector<128x128xbf16>
    %cst_51 = arith.constant dense<0.000000e+00> : vector<16x128xf32>
    %91 = tpu.matmul %88, %90, %cst_51 {dimension_numbers = #tpu.dot_dimension_numbers<[1], [0], [0], [1], [0, 0, 1, 1], [], []>} : vector<16x128xbf16>, vector<128x128xbf16>, vector<16x128xf32> -> vector<16x128xf32>
    %92 = arith.addf %56, %91 : vector<16x128xf32>
    %c0_52 = arith.constant 0 : index
    %c0_53 = arith.constant 0 : index
    %c2 = arith.constant 2 : index
    %c0_54 = arith.constant 0 : index
    %c0_55 = arith.constant 0 : index
    %93 = vector.load %arg6[%c0_52, %c0_53, %c2, %c0_54, %c0_55] : memref<1x1x4x128x384xbf16, #tpu.memory_space<vmem>>, vector<1x1x1x128x384xbf16>
    %94 = vector.shape_cast %93 : vector<1x1x1x128x384xbf16> to vector<128x384xbf16>
    %cst_56 = arith.constant dense<0.000000e+00> : vector<16x384xf32>
    %95 = tpu.matmul %9, %94, %cst_56 {dimension_numbers = #tpu.dot_dimension_numbers<[1], [0], [0], [1], [0, 0, 1, 1], [], []>} : vector<16x128xbf16>, vector<128x384xbf16>, vector<16x384xf32> -> vector<16x384xf32>
    %c0_57 = arith.constant 0 : index
    %c0_58 = arith.constant 0 : index
    %c2_59 = arith.constant 2 : index
    %c0_60 = arith.constant 0 : index
    %c0_61 = arith.constant 0 : index
    %96 = vector.load %arg7[%c0_57, %c0_58, %c2_59, %c0_60, %c0_61] : memref<1x1x4x1x384xf32, #tpu.memory_space<vmem>>, vector<1x1x1x1x384xf32>
    %97 = vector.shape_cast %96 : vector<1x1x1x1x384xf32> to vector<1x384xf32>
    %98 = vector.broadcast %97 : vector<1x384xf32> to vector<16x384xf32>
    %99 = arith.addf %95, %98 : vector<16x384xf32>
    %100 = vector.extract_strided_slice %99 {offsets = [0, 0], sizes = [16, 128], strides = [1, 1]} : vector<16x384xf32> to vector<16x128xf32>
    %101 = vector.shape_cast %100 : vector<16x128xf32> to vector<2x8x128xf32>
    %102 = arith.truncf %101 : vector<2x8x128xf32> to vector<2x8x128xbf16>
    %103 = vector.extract_strided_slice %99 {offsets = [0, 128], sizes = [16, 128], strides = [1, 1]} : vector<16x384xf32> to vector<16x128xf32>
    %104 = vector.shape_cast %103 : vector<16x128xf32> to vector<2x8x128xf32>
    %105 = arith.truncf %104 : vector<2x8x128xf32> to vector<2x8x128xbf16>
    %106 = vector.extract_strided_slice %99 {offsets = [0, 256], sizes = [16, 128], strides = [1, 1]} : vector<16x384xf32> to vector<16x128xf32>
    %107 = vector.shape_cast %106 : vector<16x128xf32> to vector<2x8x128xf32>
    %108 = arith.truncf %107 : vector<2x8x128xf32> to vector<2x8x128xbf16>
    "tpu.trace_start"() <{level = 10 : i32, message = "bqd,bkd->bqk"}> : () -> ()
    %cst_62 = arith.constant dense<0.000000e+00> : vector<2x8x8xf32>
    %109 = tpu.matmul %102, %105, %cst_62 {dimension_numbers = #tpu.dot_dimension_numbers<[2], [2], [1], [1], [0, 0, 0, 1, 1, 1], [0], [0]>} : vector<2x8x128xbf16>, vector<2x8x128xbf16>, vector<2x8x8xf32> -> vector<2x8x8xf32>
    "tpu.trace_stop"() : () -> ()
    %110 = vector.broadcast %17 : vector<2x1x8xf32> to vector<2x8x8xf32>
    %111 = arith.addf %109, %110 : vector<2x8x8xf32>
    %cst_63 = arith.constant dense<0xFF800000> : vector<2x8xf32>
    %112 = vector.multi_reduction <maximumf>, %111, %cst_63 [2] : vector<2x8x8xf32> to vector<2x8xf32>
    %113 = vector.shape_cast %112 : vector<2x8xf32> to vector<2x8x1xf32>
    %114 = vector.broadcast %113 : vector<2x8x1xf32> to vector<2x8x8xf32>
    %115 = arith.subf %111, %114 : vector<2x8x8xf32>
    %116 = math.exp %115 : vector<2x8x8xf32>
    %cst_64 = arith.constant dense<0.000000e+00> : vector<2x8xf32>
    %117 = vector.multi_reduction <add>, %116, %cst_64 [2] : vector<2x8x8xf32> to vector<2x8xf32>
    %118 = vector.shape_cast %117 : vector<2x8xf32> to vector<2x8x1xf32>
    %119 = vector.broadcast %118 : vector<2x8x1xf32> to vector<2x8x8xf32>
    %120 = arith.divf %116, %119 : vector<2x8x8xf32>
    %121 = arith.truncf %120 : vector<2x8x8xf32> to vector<2x8x8xbf16>
    "tpu.trace_start"() <{level = 10 : i32, message = "bqk,bkd->bqd"}> : () -> ()
    %cst_65 = arith.constant dense<0.000000e+00> : vector<2x8x128xf32>
    %122 = tpu.matmul %121, %108, %cst_65 {dimension_numbers = #tpu.dot_dimension_numbers<[2], [1], [1], [2], [0, 0, 0, 1, 1, 2], [0], [0]>} : vector<2x8x8xbf16>, vector<2x8x128xbf16>, vector<2x8x128xf32> -> vector<2x8x128xf32>
    "tpu.trace_stop"() : () -> ()
    %123 = vector.shape_cast %122 : vector<2x8x128xf32> to vector<16x128xf32>
    %124 = arith.truncf %123 : vector<16x128xf32> to vector<16x128xbf16>
    %c0_66 = arith.constant 0 : index
    %c0_67 = arith.constant 0 : index
    %c2_68 = arith.constant 2 : index
    %c0_69 = arith.constant 0 : index
    %c0_70 = arith.constant 0 : index
    %125 = vector.load %arg8[%c0_66, %c0_67, %c2_68, %c0_69, %c0_70] : memref<1x1x4x128x128xbf16, #tpu.memory_space<vmem>>, vector<1x1x1x128x128xbf16>
    %126 = vector.shape_cast %125 : vector<1x1x1x128x128xbf16> to vector<128x128xbf16>
    %cst_71 = arith.constant dense<0.000000e+00> : vector<16x128xf32>
    %127 = tpu.matmul %124, %126, %cst_71 {dimension_numbers = #tpu.dot_dimension_numbers<[1], [0], [0], [1], [0, 0, 1, 1], [], []>} : vector<16x128xbf16>, vector<128x128xbf16>, vector<16x128xf32> -> vector<16x128xf32>
    %128 = arith.addf %92, %127 : vector<16x128xf32>
    %c0_72 = arith.constant 0 : index
    %c0_73 = arith.constant 0 : index
    %c3 = arith.constant 3 : index
    %c0_74 = arith.constant 0 : index
    %c0_75 = arith.constant 0 : index
    %129 = vector.load %arg6[%c0_72, %c0_73, %c3, %c0_74, %c0_75] : memref<1x1x4x128x384xbf16, #tpu.memory_space<vmem>>, vector<1x1x1x128x384xbf16>
    %130 = vector.shape_cast %129 : vector<1x1x1x128x384xbf16> to vector<128x384xbf16>
    %cst_76 = arith.constant dense<0.000000e+00> : vector<16x384xf32>
    %131 = tpu.matmul %9, %130, %cst_76 {dimension_numbers = #tpu.dot_dimension_numbers<[1], [0], [0], [1], [0, 0, 1, 1], [], []>} : vector<16x128xbf16>, vector<128x384xbf16>, vector<16x384xf32> -> vector<16x384xf32>
    %c0_77 = arith.constant 0 : index
    %c0_78 = arith.constant 0 : index
    %c3_79 = arith.constant 3 : index
    %c0_80 = arith.constant 0 : index
    %c0_81 = arith.constant 0 : index
    %132 = vector.load %arg7[%c0_77, %c0_78, %c3_79, %c0_80, %c0_81] : memref<1x1x4x1x384xf32, #tpu.memory_space<vmem>>, vector<1x1x1x1x384xf32>
    %133 = vector.shape_cast %132 : vector<1x1x1x1x384xf32> to vector<1x384xf32>
    %134 = vector.broadcast %133 : vector<1x384xf32> to vector<16x384xf32>
    %135 = arith.addf %131, %134 : vector<16x384xf32>
    %136 = vector.extract_strided_slice %135 {offsets = [0, 0], sizes = [16, 128], strides = [1, 1]} : vector<16x384xf32> to vector<16x128xf32>
    %137 = vector.shape_cast %136 : vector<16x128xf32> to vector<2x8x128xf32>
    %138 = arith.truncf %137 : vector<2x8x128xf32> to vector<2x8x128xbf16>
    %139 = vector.extract_strided_slice %135 {offsets = [0, 128], sizes = [16, 128], strides = [1, 1]} : vector<16x384xf32> to vector<16x128xf32>
    %140 = vector.shape_cast %139 : vector<16x128xf32> to vector<2x8x128xf32>
    %141 = arith.truncf %140 : vector<2x8x128xf32> to vector<2x8x128xbf16>
    %142 = vector.extract_strided_slice %135 {offsets = [0, 256], sizes = [16, 128], strides = [1, 1]} : vector<16x384xf32> to vector<16x128xf32>
    %143 = vector.shape_cast %142 : vector<16x128xf32> to vector<2x8x128xf32>
    %144 = arith.truncf %143 : vector<2x8x128xf32> to vector<2x8x128xbf16>
    "tpu.trace_start"() <{level = 10 : i32, message = "bqd,bkd->bqk"}> : () -> ()
    %cst_82 = arith.constant dense<0.000000e+00> : vector<2x8x8xf32>
    %145 = tpu.matmul %138, %141, %cst_82 {dimension_numbers = #tpu.dot_dimension_numbers<[2], [2], [1], [1], [0, 0, 0, 1, 1, 1], [0], [0]>} : vector<2x8x128xbf16>, vector<2x8x128xbf16>, vector<2x8x8xf32> -> vector<2x8x8xf32>
    "tpu.trace_stop"() : () -> ()
    %146 = vector.broadcast %17 : vector<2x1x8xf32> to vector<2x8x8xf32>
    %147 = arith.addf %145, %146 : vector<2x8x8xf32>
    %cst_83 = arith.constant dense<0xFF800000> : vector<2x8xf32>
    %148 = vector.multi_reduction <maximumf>, %147, %cst_83 [2] : vector<2x8x8xf32> to vector<2x8xf32>
    %149 = vector.shape_cast %148 : vector<2x8xf32> to vector<2x8x1xf32>
    %150 = vector.broadcast %149 : vector<2x8x1xf32> to vector<2x8x8xf32>
    %151 = arith.subf %147, %150 : vector<2x8x8xf32>
    %152 = math.exp %151 : vector<2x8x8xf32>
    %cst_84 = arith.constant dense<0.000000e+00> : vector<2x8xf32>
    %153 = vector.multi_reduction <add>, %152, %cst_84 [2] : vector<2x8x8xf32> to vector<2x8xf32>
    %154 = vector.shape_cast %153 : vector<2x8xf32> to vector<2x8x1xf32>
    %155 = vector.broadcast %154 : vector<2x8x1xf32> to vector<2x8x8xf32>
    %156 = arith.divf %152, %155 : vector<2x8x8xf32>
    %157 = arith.truncf %156 : vector<2x8x8xf32> to vector<2x8x8xbf16>
    "tpu.trace_start"() <{level = 10 : i32, message = "bqk,bkd->bqd"}> : () -> ()
    %cst_85 = arith.constant dense<0.000000e+00> : vector<2x8x128xf32>
    %158 = tpu.matmul %157, %144, %cst_85 {dimension_numbers = #tpu.dot_dimension_numbers<[2], [1], [1], [2], [0, 0, 0, 1, 1, 2], [0], [0]>} : vector<2x8x8xbf16>, vector<2x8x128xbf16>, vector<2x8x128xf32> -> vector<2x8x128xf32>
    "tpu.trace_stop"() : () -> ()
    %159 = vector.shape_cast %158 : vector<2x8x128xf32> to vector<16x128xf32>
    %160 = arith.truncf %159 : vector<16x128xf32> to vector<16x128xbf16>
    %c0_86 = arith.constant 0 : index
    %c0_87 = arith.constant 0 : index
    %c3_88 = arith.constant 3 : index
    %c0_89 = arith.constant 0 : index
    %c0_90 = arith.constant 0 : index
    %161 = vector.load %arg8[%c0_86, %c0_87, %c3_88, %c0_89, %c0_90] : memref<1x1x4x128x128xbf16, #tpu.memory_space<vmem>>, vector<1x1x1x128x128xbf16>
    %162 = vector.shape_cast %161 : vector<1x1x1x128x128xbf16> to vector<128x128xbf16>
    %cst_91 = arith.constant dense<0.000000e+00> : vector<16x128xf32>
    %163 = tpu.matmul %160, %162, %cst_91 {dimension_numbers = #tpu.dot_dimension_numbers<[1], [0], [0], [1], [0, 0, 1, 1], [], []>} : vector<16x128xbf16>, vector<128x128xbf16>, vector<16x128xf32> -> vector<16x128xf32>
    %164 = arith.addf %128, %163 : vector<16x128xf32>
    %165 = arith.addf %164, %8 : vector<16x128xf32>
    %c0_92 = arith.constant 0 : index
    %c0_93 = arith.constant 0 : index
    %c0_94 = arith.constant 0 : index
    %c0_95 = arith.constant 0 : index
    %166 = vector.load %arg10[%c0_92, %c0_93, %c0_94, %c0_95] : memref<1x1x1x128xf32, #tpu.memory_space<vmem>>, vector<1x1x1x128xf32>
    %167 = vector.shape_cast %166 : vector<1x1x1x128xf32> to vector<1x128xf32>
    %c0_96 = arith.constant 0 : index
    %c0_97 = arith.constant 0 : index
    %c0_98 = arith.constant 0 : index
    %c0_99 = arith.constant 0 : index
    %168 = vector.load %arg11[%c0_96, %c0_97, %c0_98, %c0_99] : memref<1x1x1x128xf32, #tpu.memory_space<vmem>>, vector<1x1x1x128xf32>
    %169 = vector.shape_cast %168 : vector<1x1x1x128xf32> to vector<1x128xf32>
    %cst_100 = arith.constant dense<0.000000e+00> : vector<16xf32>
    %170 = vector.multi_reduction <add>, %165, %cst_100 [1] : vector<16x128xf32> to vector<16xf32>
    %171 = vector.shape_cast %170 : vector<16xf32> to vector<16x1xf32>
    %cst_101 = arith.constant 3.125000e-02 : f32
    %172 = vector.broadcast %cst_101 : f32 to vector<16x1xf32>
    %173 = arith.mulf %171, %172 : vector<16x1xf32>
    %174 = vector.broadcast %173 : vector<16x1xf32> to vector<16x128xf32>
    %175 = arith.subf %165, %174 : vector<16x128xf32>
    %176 = vector.broadcast %4 : vector<1x128xf32> to vector<16x128xf32>
    %177 = arith.mulf %175, %176 : vector<16x128xf32>
    %178 = arith.mulf %177, %177 : vector<16x128xf32>
    %cst_102 = arith.constant dense<0.000000e+00> : vector<16xf32>
    %179 = vector.multi_reduction <add>, %178, %cst_102 [1] : vector<16x128xf32> to vector<16xf32>
    %180 = vector.shape_cast %179 : vector<16xf32> to vector<16x1xf32>
    %cst_103 = arith.constant 3.125000e-02 : f32
    %181 = vector.broadcast %cst_103 : f32 to vector<16x1xf32>
    %182 = arith.mulf %180, %181 : vector<16x1xf32>
    %cst_104 = arith.constant 9.99999996E-13 : f32
    %183 = vector.broadcast %cst_104 : f32 to vector<16x1xf32>
    %184 = arith.addf %182, %183 : vector<16x1xf32>
    %185 = math.rsqrt %184 : vector<16x1xf32>
    %186 = vector.broadcast %185 : vector<16x1xf32> to vector<16x128xf32>
    %187 = arith.mulf %177, %186 : vector<16x128xf32>
    %188 = vector.broadcast %167 : vector<1x128xf32> to vector<16x128xf32>
    %189 = arith.mulf %187, %188 : vector<16x128xf32>
    %190 = vector.broadcast %169 : vector<1x128xf32> to vector<16x128xf32>
    %191 = arith.addf %189, %190 : vector<16x128xf32>
    %192 = arith.truncf %191 : vector<16x128xf32> to vector<16x128xbf16>
    %c0_105 = arith.constant 0 : index
    %c0_106 = arith.constant 0 : index
    %c0_107 = arith.constant 0 : index
    %c0_108 = arith.constant 0 : index
    %193 = vector.load %arg12[%c0_105, %c0_106, %c0_107, %c0_108] : memref<1x1x128x128xbf16, #tpu.memory_space<vmem>>, vector<1x1x128x128xbf16>
    %194 = vector.shape_cast %193 : vector<1x1x128x128xbf16> to vector<128x128xbf16>
    %cst_109 = arith.constant dense<0.000000e+00> : vector<16x128xf32>
    %195 = tpu.matmul %192, %194, %cst_109 {dimension_numbers = #tpu.dot_dimension_numbers<[1], [0], [0], [1], [0, 0, 1, 1], [], []>} : vector<16x128xbf16>, vector<128x128xbf16>, vector<16x128xf32> -> vector<16x128xf32>
    %c0_110 = arith.constant 0 : index
    %c0_111 = arith.constant 0 : index
    %c0_112 = arith.constant 0 : index
    %c0_113 = arith.constant 0 : index
    %196 = vector.load %arg13[%c0_110, %c0_111, %c0_112, %c0_113] : memref<1x1x1x128xf32, #tpu.memory_space<vmem>>, vector<1x1x1x128xf32>
    %197 = vector.shape_cast %196 : vector<1x1x1x128xf32> to vector<1x128xf32>
    %198 = vector.broadcast %197 : vector<1x128xf32> to vector<16x128xf32>
    %199 = arith.addf %195, %198 : vector<16x128xf32>
    %200 = arith.mulf %199, %199 : vector<16x128xf32>
    %201 = arith.mulf %199, %200 : vector<16x128xf32>
    %cst_114 = arith.constant 4.471500e-02 : f32
    %202 = vector.broadcast %cst_114 : f32 to vector<16x128xf32>
    %203 = arith.mulf %202, %201 : vector<16x128xf32>
    %204 = arith.addf %199, %203 : vector<16x128xf32>
    %cst_115 = arith.constant 0.797884583 : f32
    %205 = vector.broadcast %cst_115 : f32 to vector<16x128xf32>
    %206 = arith.mulf %205, %204 : vector<16x128xf32>
    %207 = math.tanh %206 : vector<16x128xf32>
    %cst_116 = arith.constant 1.000000e+00 : f32
    %208 = vector.broadcast %cst_116 : f32 to vector<16x128xf32>
    %209 = arith.addf %208, %207 : vector<16x128xf32>
    %cst_117 = arith.constant 5.000000e-01 : f32
    %210 = vector.broadcast %cst_117 : f32 to vector<16x128xf32>
    %211 = arith.mulf %210, %209 : vector<16x128xf32>
    %212 = arith.mulf %199, %211 : vector<16x128xf32>
    %213 = arith.truncf %212 : vector<16x128xf32> to vector<16x128xbf16>
    %c0_118 = arith.constant 0 : index
    %c0_119 = arith.constant 0 : index
    %c0_120 = arith.constant 0 : index
    %c0_121 = arith.constant 0 : index
    %214 = vector.load %arg14[%c0_118, %c0_119, %c0_120, %c0_121] : memref<1x1x128x128xbf16, #tpu.memory_space<vmem>>, vector<1x1x128x128xbf16>
    %215 = vector.shape_cast %214 : vector<1x1x128x128xbf16> to vector<128x128xbf16>
    %cst_122 = arith.constant dense<0.000000e+00> : vector<16x128xf32>
    %216 = tpu.matmul %213, %215, %cst_122 {dimension_numbers = #tpu.dot_dimension_numbers<[1], [0], [0], [1], [0, 0, 1, 1], [], []>} : vector<16x128xbf16>, vector<128x128xbf16>, vector<16x128xf32> -> vector<16x128xf32>
    %c0_123 = arith.constant 0 : index
    %c0_124 = arith.constant 0 : index
    %c0_125 = arith.constant 0 : index
    %c0_126 = arith.constant 0 : index
    %217 = vector.load %arg15[%c0_123, %c0_124, %c0_125, %c0_126] : memref<1x1x1x128xf32, #tpu.memory_space<vmem>>, vector<1x1x1x128xf32>
    %218 = vector.shape_cast %217 : vector<1x1x1x128xf32> to vector<1x128xf32>
    %219 = vector.broadcast %218 : vector<1x128xf32> to vector<16x128xf32>
    %220 = arith.addf %216, %219 : vector<16x128xf32>
    %221 = arith.addf %220, %191 : vector<16x128xf32>
    %c0_127 = arith.constant 0 : index
    %c0_128 = arith.constant 0 : index
    %c0_129 = arith.constant 0 : index
    %c0_130 = arith.constant 0 : index
    %222 = vector.load %arg16[%c0_127, %c0_128, %c0_129, %c0_130] : memref<1x1x1x128xf32, #tpu.memory_space<vmem>>, vector<1x1x1x128xf32>
    %223 = vector.shape_cast %222 : vector<1x1x1x128xf32> to vector<1x128xf32>
    %c0_131 = arith.constant 0 : index
    %c0_132 = arith.constant 0 : index
    %c0_133 = arith.constant 0 : index
    %c0_134 = arith.constant 0 : index
    %224 = vector.load %arg17[%c0_131, %c0_132, %c0_133, %c0_134] : memref<1x1x1x128xf32, #tpu.memory_space<vmem>>, vector<1x1x1x128xf32>
    %225 = vector.shape_cast %224 : vector<1x1x1x128xf32> to vector<1x128xf32>
    %cst_135 = arith.constant dense<0.000000e+00> : vector<16xf32>
    %226 = vector.multi_reduction <add>, %221, %cst_135 [1] : vector<16x128xf32> to vector<16xf32>
    %227 = vector.shape_cast %226 : vector<16xf32> to vector<16x1xf32>
    %cst_136 = arith.constant 3.125000e-02 : f32
    %228 = vector.broadcast %cst_136 : f32 to vector<16x1xf32>
    %229 = arith.mulf %227, %228 : vector<16x1xf32>
    %230 = vector.broadcast %229 : vector<16x1xf32> to vector<16x128xf32>
    %231 = arith.subf %221, %230 : vector<16x128xf32>
    %232 = vector.broadcast %4 : vector<1x128xf32> to vector<16x128xf32>
    %233 = arith.mulf %231, %232 : vector<16x128xf32>
    %234 = arith.mulf %233, %233 : vector<16x128xf32>
    %cst_137 = arith.constant dense<0.000000e+00> : vector<16xf32>
    %235 = vector.multi_reduction <add>, %234, %cst_137 [1] : vector<16x128xf32> to vector<16xf32>
    %236 = vector.shape_cast %235 : vector<16xf32> to vector<16x1xf32>
    %cst_138 = arith.constant 3.125000e-02 : f32
    %237 = vector.broadcast %cst_138 : f32 to vector<16x1xf32>
    %238 = arith.mulf %236, %237 : vector<16x1xf32>
    %cst_139 = arith.constant 9.99999996E-13 : f32
    %239 = vector.broadcast %cst_139 : f32 to vector<16x1xf32>
    %240 = arith.addf %238, %239 : vector<16x1xf32>
    %241 = math.rsqrt %240 : vector<16x1xf32>
    %242 = vector.broadcast %241 : vector<16x1xf32> to vector<16x128xf32>
    %243 = arith.mulf %233, %242 : vector<16x128xf32>
    %244 = vector.broadcast %223 : vector<1x128xf32> to vector<16x128xf32>
    %245 = arith.mulf %243, %244 : vector<16x128xf32>
    %246 = vector.broadcast %225 : vector<1x128xf32> to vector<16x128xf32>
    %247 = arith.addf %245, %246 : vector<16x128xf32>
    %c0_140 = arith.constant 0 : index
    %c0_141 = arith.constant 0 : index
    %248 = vector.load %arg21[%c0_140, %c0_141] : memref<16x128xf32, #tpu.memory_space<vmem>>, vector<16x128xf32>
    tpu.vector_store %arg21[%c0_140, %c0_141], %247 {strides = array<i32>} : memref<16x128xf32, #tpu.memory_space<vmem>>, vector<16x128xf32>,
    %c1_i32 = arith.constant 1 : i32
    %249 = arith.cmpi eq, %arg1, %c1_i32 : i32
    %250 = arith.extui %249 : i1 to i32
    %c0_i32_142 = arith.constant 0 : i32
    %251 = arith.cmpi ne, %250, %c0_i32_142 : i32
    scf.if %251 {
      %c0_143 = arith.constant 0 : index
      %c0_144 = arith.constant 0 : index
      %252 = tpu.strided_load %arg21[%c0_143, %c0_144] {strides = array<i32: 8, 1>} : memref<16x128xf32, #tpu.memory_space<vmem>>, vector<2x128xf32>
      %253 = arith.truncf %252 : vector<2x128xf32> to vector<2x128xbf16>
      %c0_145 = arith.constant 0 : index
      %c0_146 = arith.constant 0 : index
      %c0_147 = arith.constant 0 : index
      %254 = vector.load %arg18[%c0_145, %c0_146, %c0_147] : memref<1x128x128xbf16, #tpu.memory_space<vmem>>, vector<1x128x128xbf16>
      %255 = vector.shape_cast %254 : vector<1x128x128xbf16> to vector<128x128xbf16>
      %cst_148 = arith.constant dense<0.000000e+00> : vector<2x128xf32>
      %256 = tpu.matmul %253, %255, %cst_148 {dimension_numbers = #tpu.dot_dimension_numbers<[1], [0], [0], [1], [0, 0, 1, 1], [], []>} : vector<2x128xbf16>, vector<128x128xbf16>, vector<2x128xf32> -> vector<2x128xf32>
      %c0_149 = arith.constant 0 : index
      %c0_150 = arith.constant 0 : index
      %c0_151 = arith.constant 0 : index
      %257 = vector.load %arg19[%c0_149, %c0_150, %c0_151] : memref<1x1x128xf32, #tpu.memory_space<vmem>>, vector<1x1x128xf32>
      %258 = vector.shape_cast %257 : vector<1x1x128xf32> to vector<1x128xf32>
      %259 = vector.broadcast %258 : vector<1x128xf32> to vector<2x128xf32>
      %260 = arith.addf %256, %259 : vector<2x128xf32>
      %261 = math.tanh %260 : vector<2x128xf32>
      %c0_152 = arith.constant 0 : index
      %c0_153 = arith.constant 0 : index
      %c0_154 = arith.constant 0 : index
      %262 = vector.load %arg20[%c0_152, %c0_153, %c0_154] : memref<1x2x128xf32, #tpu.memory_space<vmem>>, vector<1x2x128xf32>
      %263 = vector.shape_cast %262 : vector<1x2x128xf32> to vector<2x128xf32>
      %264 = vector.shape_cast %261 : vector<2x128xf32> to vector<1x2x128xf32>
      tpu.vector_store %arg20[%c0_152, %c0_153, %c0_154], %264 {strides = array<i32>} : memref<1x2x128xf32, #tpu.memory_space<vmem>>, vector<1x2x128xf32>,
    } else {
    }
    return
  }
  func.func @transform_0(%arg0: i32, %arg1: i32) -> (i32, i32, i32) {
    %c0_i32 = arith.constant 0 : i32
    %c0_i32_0 = arith.constant 0 : i32
    %c0_i32_1 = arith.constant 0 : i32
    return %arg0, %c0_i32, %c0_i32_0 : i32, i32, i32
  }
  func.func @transform_1(%arg0: i32, %arg1: i32) -> (i32, i32, i32) {
    %c0_i32 = arith.constant 0 : i32
    %c0_i32_0 = arith.constant 0 : i32
    %c0_i32_1 = arith.constant 0 : i32
    return %arg0, %c0_i32, %c0_i32_0 : i32, i32, i32
  }
  func.func @transform_2(%arg0: i32, %arg1: i32) -> (i32, i32, i32) {
    %c0_i32 = arith.constant 0 : i32
    %c0_i32_0 = arith.constant 0 : i32
    %c0_i32_1 = arith.constant 0 : i32
    return %arg0, %c0_i32, %c0_i32_0 : i32, i32, i32
  }
  func.func @transform_3(%arg0: i32, %arg1: i32) -> (i32, i32, i32) {
    %c0_i32 = arith.constant 0 : i32
    %c0_i32_0 = arith.constant 0 : i32
    %c0_i32_1 = arith.constant 0 : i32
    return %arg0, %c0_i32, %c0_i32_0 : i32, i32, i32
  }
  func.func @transform_4(%arg0: i32, %arg1: i32) -> (i32, i32, i32, i32, i32) {
    %c0_i32 = arith.constant 0 : i32
    %c0_i32_0 = arith.constant 0 : i32
    %c0_i32_1 = arith.constant 0 : i32
    %c0_i32_2 = arith.constant 0 : i32
    return %arg0, %arg1, %c0_i32, %c0_i32_0, %c0_i32_1 : i32, i32, i32, i32, i32
  }
  func.func @transform_5(%arg0: i32, %arg1: i32) -> (i32, i32, i32, i32, i32) {
    %c0_i32 = arith.constant 0 : i32
    %c0_i32_0 = arith.constant 0 : i32
    %c0_i32_1 = arith.constant 0 : i32
    %c0_i32_2 = arith.constant 0 : i32
    return %arg0, %arg1, %c0_i32, %c0_i32_0, %c0_i32_1 : i32, i32, i32, i32, i32
  }
  func.func @transform_6(%arg0: i32, %arg1: i32) -> (i32, i32, i32, i32, i32) {
    %c0_i32 = arith.constant 0 : i32
    %c0_i32_0 = arith.constant 0 : i32
    %c0_i32_1 = arith.constant 0 : i32
    %c0_i32_2 = arith.constant 0 : i32
    return %arg0, %arg1, %c0_i32, %c0_i32_0, %c0_i32_1 : i32, i32, i32, i32, i32
  }
  func.func @transform_7(%arg0: i32, %arg1: i32) -> (i32, i32, i32, i32) {
    %c0_i32 = arith.constant 0 : i32
    %c0_i32_0 = arith.constant 0 : i32
    %c0_i32_1 = arith.constant 0 : i32
    return %arg0, %arg1, %c0_i32, %c0_i32_0 : i32, i32, i32, i32
  }
  func.func @transform_8(%arg0: i32, %arg1: i32) -> (i32, i32, i32, i32) {
    %c0_i32 = arith.constant 0 : i32
    %c0_i32_0 = arith.constant 0 : i32
    %c0_i32_1 = arith.constant 0 : i32
    return %arg0, %arg1, %c0_i32, %c0_i32_0 : i32, i32, i32, i32
  }
  func.func @transform_9(%arg0: i32, %arg1: i32) -> (i32, i32, i32, i32) {
    %c0_i32 = arith.constant 0 : i32
    %c0_i32_0 = arith.constant 0 : i32
    %c0_i32_1 = arith.constant 0 : i32
    return %arg0, %arg1, %c0_i32, %c0_i32_0 : i32, i32, i32, i32
  }
  func.func @transform_10(%arg0: i32, %arg1: i32) -> (i32, i32, i32, i32) {
    %c0_i32 = arith.constant 0 : i32
    %c0_i32_0 = arith.constant 0 : i32
    %c0_i32_1 = arith.constant 0 : i32
    return %arg0, %arg1, %c0_i32, %c0_i32_0 : i32, i32, i32, i32
  }
  func.func @transform_11(%arg0: i32, %arg1: i32) -> (i32, i32, i32, i32) {
    %c0_i32 = arith.constant 0 : i32
    %c0_i32_0 = arith.constant 0 : i32
    %c0_i32_1 = arith.constant 0 : i32
    return %arg0, %arg1, %c0_i32, %c0_i32_0 : i32, i32, i32, i32
  }
  func.func @transform_12(%arg0: i32, %arg1: i32) -> (i32, i32, i32, i32) {
    %c0_i32 = arith.constant 0 : i32
    %c0_i32_0 = arith.constant 0 : i32
    %c0_i32_1 = arith.constant 0 : i32
    return %arg0, %arg1, %c0_i32, %c0_i32_0 : i32, i32, i32, i32
  }
  func.func @transform_13(%arg0: i32, %arg1: i32) -> (i32, i32, i32, i32) {
    %c0_i32 = arith.constant 0 : i32
    %c0_i32_0 = arith.constant 0 : i32
    %c0_i32_1 = arith.constant 0 : i32
    return %arg0, %arg1, %c0_i32, %c0_i32_0 : i32, i32, i32, i32
  }
  func.func @transform_14(%arg0: i32, %arg1: i32) -> (i32, i32, i32, i32) {
    %c0_i32 = arith.constant 0 : i32
    %c0_i32_0 = arith.constant 0 : i32
    %c0_i32_1 = arith.constant 0 : i32
    return %arg0, %arg1, %c0_i32, %c0_i32_0 : i32, i32, i32, i32
  }
  func.func @transform_15(%arg0: i32, %arg1: i32) -> (i32, i32, i32, i32) {
    %c0_i32 = arith.constant 0 : i32
    %c0_i32_0 = arith.constant 0 : i32
    %c0_i32_1 = arith.constant 0 : i32
    return %arg0, %arg1, %c0_i32, %c0_i32_0 : i32, i32, i32, i32
  }
  func.func @transform_16(%arg0: i32, %arg1: i32) -> (i32, i32, i32) {
    %c0_i32 = arith.constant 0 : i32
    %c0_i32_0 = arith.constant 0 : i32
    %c0_i32_1 = arith.constant 0 : i32
    return %arg0, %c0_i32, %c0_i32_0 : i32, i32, i32
  }
  func.func @transform_17(%arg0: i32, %arg1: i32) -> (i32, i32, i32) {
    %c0_i32 = arith.constant 0 : i32
    %c0_i32_0 = arith.constant 0 : i32
    %c0_i32_1 = arith.constant 0 : i32
    return %arg0, %c0_i32, %c0_i32_0 : i32, i32, i32
  }
  func.func @transform_18(%arg0: i32, %arg1: i32) -> (i32, i32, i32) {
    %c0_i32 = arith.constant 0 : i32
    %c0_i32_0 = arith.constant 0 : i32
    %c0_i32_1 = arith.constant 0 : i32
    return %arg0, %c0_i32, %c0_i32_0 : i32, i32, i32
  }
}

</mosaic_0001>

<llo_original>
// kernel: a_call__.1
$region0: #{a_call__.1}
  #allocation0 [shape = 'u32[]', space=smem, size = 0x4, offset = 0x4, fixed_abs, tag = 'smem constant byte address 0x4 - core index']
  #allocation1 [shape = 'u32[144,128]{1,0:T(1,128)}', space=vmem, size = 0x12000, scoped, tag = 'internal scratch']
  #allocation2 [shape = 'f32[16,128]{1,0:T(8,128)}', space=vmem, size = 0x2000, scoped, tag = 'scratch operand']
  %s0 = inlined_call_operand.vmem [shape: f32[2,16,128], index: 0, kind: input, shape index: {}]
  %s1 = inlined_call_operand.vmem [shape: s32[2,2,8], index: 1, kind: input, shape index: {}]
  %s2 = inlined_call_operand.vmem [shape: f32[2,1,128], index: 2, kind: input, shape index: {}]
  %s3 = inlined_call_operand.vmem [shape: f32[2,1,128], index: 3, kind: input, shape index: {}, may-alias: {3,17}]
  %s4 = inlined_call_operand.vmem [shape: bf16[2,2,4,128,384], index: 4, kind: input, shape index: {}]
  %s5 = inlined_call_operand.vmem [shape: f32[2,2,4,1,384], index: 5, kind: input, shape index: {}]
  %s6 = inlined_call_operand.vmem [shape: bf16[2,2,4,128,128], index: 6, kind: input, shape index: {}]
  %s7 = inlined_call_operand.vmem [shape: f32[2,2,1,128], index: 7, kind: input, shape index: {}, may-alias: {7,9,11,13,15}]
  %s8 = inlined_call_operand.vmem [shape: f32[2,2,1,128], index: 8, kind: input, shape index: {}, may-alias: {8,14}]
  %s9 = inlined_call_operand.vmem [shape: f32[2,2,1,128], index: 9, kind: input, shape index: {}, may-alias: {7,9,11,13,15}]
  %s10 = inlined_call_operand.vmem [shape: bf16[2,2,128,128], index: 10, kind: input, shape index: {}]
  %s11 = inlined_call_operand.vmem [shape: f32[2,2,1,128], index: 11, kind: input, shape index: {}, may-alias: {7,9,11,13,15}]
  %s12 = inlined_call_operand.vmem [shape: bf16[2,2,128,128], index: 12, kind: input, shape index: {}]
  %s13 = inlined_call_operand.vmem [shape: f32[2,2,1,128], index: 13, kind: input, shape index: {}, may-alias: {7,9,11,13,15}]
  %s14 = inlined_call_operand.vmem [shape: f32[2,2,1,128], index: 14, kind: input, shape index: {}, may-alias: {8,14}]
  %s15 = inlined_call_operand.vmem [shape: f32[2,2,1,128], index: 15, kind: input, shape index: {}, may-alias: {7,9,11,13,15}]
  %s16 = inlined_call_operand.vmem [shape: bf16[2,128,128], index: 16, kind: input, shape index: {}]
  %s17 = inlined_call_operand.vmem [shape: f32[2,1,128], index: 17, kind: input, shape index: {}, may-alias: {3,17}]
  %s18 = inlined_call_operand.vmem [shape: f32[2,2,128], index: 18, kind: output, shape index: {}]
  %s19 = sld [smem:[#allocation0]]
  $region113: #{a_call__.1} parent=0
    _
  %s21 = ssub.s32 1, %s19
  %s22 = scalar_select 0, %s21, %s19
  loop: start=0, step=1, limit=6
  $region2: #{a_call__.1} parent=0 // loop_pre_header
    _
  $region3: #{a_call__.1} parent=0 // loop_header
    %s24 = sphi 0, %s28
    %p25 = scmp.ge.s32.totalorder %s24, 6
    %s31 = sphi 0, %s43
    %s32 = sphi 0, %s39
    %s33 = sphi 0, %s31
    %s34 = sphi 0, %s32
    %s35 = sphi 0, %s33
    %s36 = sphi 0, %s34
    %s46 = sphi 0, %s48
    %s49 = sphi 0, %s46
    %s50 = sphi 0, %s49
    %s66 = sphi 0, %s50
    %s72 = sphi 0, %s74
    %s75 = sphi 0, %s72
    %s76 = sphi 0, %s75
    %s92 = sphi 0, %s76
    %s98 = sphi 0, %s100
    %s101 = sphi 0, %s98
    %s102 = sphi 0, %s101
    %s118 = sphi 0, %s102
    %s124 = sphi 0, %s126
    %s127 = sphi 0, %s124
    %s128 = sphi 0, %s127
    %s144 = sphi 0, %s128
    %s152 = sphi 0, %s154
    %s155 = sphi 0, %s152
    %s156 = sphi 0, %s155
    %s172 = sphi 0, %s156
    %s180 = sphi 0, %s182
    %s183 = sphi 0, %s180
    %s184 = sphi 0, %s183
    %s200 = sphi 0, %s184
    %s208 = sphi 0, %s210
    %s211 = sphi 0, %s208
    %s212 = sphi 0, %s211
    %s228 = sphi 0, %s212
    %s236 = sphi 0, %s238
    %s239 = sphi 0, %s236
    %s240 = sphi 0, %s239
    %s256 = sphi 0, %s240
    %s264 = sphi 0, %s266
    %s267 = sphi 0, %s264
    %s268 = sphi 0, %s267
    %s284 = sphi 0, %s268
    %s292 = sphi 0, %s294
    %s295 = sphi 0, %s292
    %s296 = sphi 0, %s295
    %s312 = sphi 0, %s296
    %s320 = sphi 0, %s322
    %s323 = sphi 0, %s320
    %s324 = sphi 0, %s323
    %s340 = sphi 0, %s324
    %s348 = sphi 0, %s350
    %s351 = sphi 0, %s348
    %s352 = sphi 0, %s351
    %s368 = sphi 0, %s352
    %s376 = sphi 0, %s378
    %s379 = sphi 0, %s376
    %s380 = sphi 0, %s379
    %s396 = sphi 0, %s380
    %s404 = sphi 0, %s406
    %s407 = sphi 0, %s404
    %s408 = sphi 0, %s407
    %s424 = sphi 0, %s408
    %s432 = sphi 0, %s434
    %s435 = sphi 0, %s432
    %s436 = sphi 0, %s435
    %s452 = sphi 0, %s436
    %s460 = sphi 0, %s462
    %s463 = sphi 0, %s460
    %s464 = sphi 0, %s463
    %s480 = sphi 0, %s464
    %s486 = sphi 0, %s488
    %s489 = sphi 0, %s486
    %s490 = sphi 0, %s489
    %s506 = sphi 0, %s490
    %s512 = sphi 0, %s514
    %s515 = sphi 0, %s512
    %s516 = sphi 0, %s515
    %s532 = sphi 0, %s516
    %s538 = sphi 0, %s540
    %s541 = sphi 0, %s538
    %s542 = sphi 0, %s541
    %s558 = sphi 0, %s542
  $region4: #{a_call__.1} parent=0 // loop_header_branch
    %27 = sbr.rel (%p25) target = $region8
  $region5: #{a_call__.1} parent=0 // loop_body
    %s29 = ssub.s32 %s24, 1
    %s30 = ssub.s32 %s24, 2
    %s37 = sadd.s32 1, %s32
    %p38 = scmp.ge.s32.totalorder %s37, 2
    %s39 = scalar_select %p38, 0, %s37
    %s40 = sadd.s32 1, %s31
    %s41 = scalar_select %p38, %s40, %s31
    %p42 = scmp.ge.s32.totalorder %s41, 2
    %s43 = scalar_select %p42, 0, %s41
    %s44 = ssub.s32 %s31, %s43
    %p45 = scmp.eq.s32.totalorder %s44, 0
    %s47 = sadd.s32 %s46, 1
    %s48 = scalar_select %p45, %s46, %s47
    %p51 = pneg %p45
    %p52 = scmp.eq.s32.totalorder %s24, 3
    %p53 = por %p51, %p52
    %p54 = scmp.ne.s32.totalorder %s46, %s49
    %p55 = scmp.eq.s32.totalorder %s24, 0
    %p56 = por %p54, %p55
    %p57 = scmp.ne.s32.totalorder %s46, %s49
    %p58 = scmp.eq.s32.totalorder %s29, 3
    %p59 = por %p57, %p58
    %p60 = scmp.ne.s32.totalorder %s49, %s50
    %p61 = scmp.eq.s32.totalorder %s29, 0
    %p62 = por %p60, %p61
    %p63 = scmp.ne.s32.totalorder %s49, %s50
    %p64 = scmp.eq.s32.totalorder %s30, 3
    %p65 = por %p63, %p64
    %p67 = scmp.ne.s32.totalorder %s50, %s66
    %p68 = scmp.eq.s32.totalorder %s30, 0
    %p69 = por %p67, %p68
    %s70 = ssub.s32 %s31, %s43
    %p71 = scmp.eq.s32.totalorder %s70, 0
    %s73 = sadd.s32 %s72, 1
    %s74 = scalar_select %p71, %s72, %s73
    %p77 = pneg %p71
    %p78 = scmp.eq.s32.totalorder %s24, 3
    %p79 = por %p77, %p78
    %p80 = scmp.ne.s32.totalorder %s72, %s75
    %p81 = scmp.eq.s32.totalorder %s24, 0
    %p82 = por %p80, %p81
    %p83 = scmp.ne.s32.totalorder %s72, %s75
    %p84 = scmp.eq.s32.totalorder %s29, 3
    %p85 = por %p83, %p84
    %p86 = scmp.ne.s32.totalorder %s75, %s76
    %p87 = scmp.eq.s32.totalorder %s29, 0
    %p88 = por %p86, %p87
    %p89 = scmp.ne.s32.totalorder %s75, %s76
    %p90 = scmp.eq.s32.totalorder %s30, 3
    %p91 = por %p89, %p90
    %p93 = scmp.ne.s32.totalorder %s76, %s92
    %p94 = scmp.eq.s32.totalorder %s30, 0
    %p95 = por %p93, %p94
    %s96 = ssub.s32 %s31, %s43
    %p97 = scmp.eq.s32.totalorder %s96, 0
    %s99 = sadd.s32 %s98, 1
    %s100 = scalar_select %p97, %s98, %s99
    %p103 = pneg %p97
    %p104 = scmp.eq.s32.totalorder %s24, 3
    %p105 = por %p103, %p104
    %p106 = scmp.ne.s32.totalorder %s98, %s101
    %p107 = scmp.eq.s32.totalorder %s24, 0
    %p108 = por %p106, %p107
    %p109 = scmp.ne.s32.totalorder %s98, %s101
    %p110 = scmp.eq.s32.totalorder %s29, 3
    %p111 = por %p109, %p110
    %p112 = scmp.ne.s32.totalorder %s101, %s102
    %p113 = scmp.eq.s32.totalorder %s29, 0
    %p114 = por %p112, %p113
    %p115 = scmp.ne.s32.totalorder %s101, %s102
    %p116 = scmp.eq.s32.totalorder %s30, 3
    %p117 = por %p115, %p116
    %p119 = scmp.ne.s32.totalorder %s102, %s118
    %p120 = scmp.eq.s32.totalorder %s30, 0
    %p121 = por %p119, %p120
    %s122 = ssub.s32 %s31, %s43
    %p123 = scmp.eq.s32.totalorder %s122, 0
    %s125 = sadd.s32 %s124, 1
    %s126 = scalar_select %p123, %s124, %s125
    %p129 = pneg %p123
    %p130 = scmp.eq.s32.totalorder %s24, 3
    %p131 = por %p129, %p130
    %p132 = scmp.ne.s32.totalorder %s124, %s127
    %p133 = scmp.eq.s32.totalorder %s24, 0
    %p134 = por %p132, %p133
    %p135 = scmp.ne.s32.totalorder %s124, %s127
    %p136 = scmp.eq.s32.totalorder %s29, 3
    %p137 = por %p135, %p136
    %p138 = scmp.ne.s32.totalorder %s127, %s128
    %p139 = scmp.eq.s32.totalorder %s29, 0
    %p140 = por %p138, %p139
    %p141 = scmp.ne.s32.totalorder %s127, %s128
    %p142 = scmp.eq.s32.totalorder %s30, 3
    %p143 = por %p141, %p142
    %p145 = scmp.ne.s32.totalorder %s128, %s144
    %p146 = scmp.eq.s32.totalorder %s30, 0
    %p147 = por %p145, %p146
    %s148 = ssub.s32 %s31, %s43
    %s149 = ssub.s32 %s32, %s39
    %s150 = sor.u32 %s148, %s149
    %p151 = scmp.eq.s32.totalorder %s150, 0
    %s153 = sadd.s32 %s152, 1
    %s154 = scalar_select %p151, %s152, %s153
    %p157 = pneg %p151
    %p158 = scmp.eq.s32.totalorder %s24, 3
    %p159 = por %p157, %p158
    %p160 = scmp.ne.s32.totalorder %s152, %s155
    %p161 = scmp.eq.s32.totalorder %s24, 0
    %p162 = por %p160, %p161
    %p163 = scmp.ne.s32.totalorder %s152, %s155
    %p164 = scmp.eq.s32.totalorder %s29, 3
    %p165 = por %p163, %p164
    %p166 = scmp.ne.s32.totalorder %s155, %s156
    %p167 = scmp.eq.s32.totalorder %s29, 0
    %p168 = por %p166, %p167
    %p169 = scmp.ne.s32.totalorder %s155, %s156
    %p170 = scmp.eq.s32.totalorder %s30, 3
    %p171 = por %p169, %p170
    %p173 = scmp.ne.s32.totalorder %s156, %s172
    %p174 = scmp.eq.s32.totalorder %s30, 0
    %p175 = por %p173, %p174
    %s176 = ssub.s32 %s31, %s43
    %s177 = ssub.s32 %s32, %s39
    %s178 = sor.u32 %s176, %s177
    %p179 = scmp.eq.s32.totalorder %s178, 0
    %s181 = sadd.s32 %s180, 1
    %s182 = scalar_select %p179, %s180, %s181
    %p185 = pneg %p179
    %p186 = scmp.eq.s32.totalorder %s24, 3
    %p187 = por %p185, %p186
    %p188 = scmp.ne.s32.totalorder %s180, %s183
    %p189 = scmp.eq.s32.totalorder %s24, 0
    %p190 = por %p188, %p189
    %p191 = scmp.ne.s32.totalorder %s180, %s183
    %p192 = scmp.eq.s32.totalorder %s29, 3
    %p193 = por %p191, %p192
    %p194 = scmp.ne.s32.totalorder %s183, %s184
    %p195 = scmp.eq.s32.totalorder %s29, 0
    %p196 = por %p194, %p195
    %p197 = scmp.ne.s32.totalorder %s183, %s184
    %p198 = scmp.eq.s32.totalorder %s30, 3
    %p199 = por %p197, %p198
    %p201 = scmp.ne.s32.totalorder %s184, %s200
    %p202 = scmp.eq.s32.totalorder %s30, 0
    %p203 = por %p201, %p202
    %s204 = ssub.s32 %s31, %s43
    %s205 = ssub.s32 %s32, %s39
    %s206 = sor.u32 %s204, %s205
    %p207 = scmp.eq.s32.totalorder %s206, 0
    %s209 = sadd.s32 %s208, 1
    %s210 = scalar_select %p207, %s208, %s209
    %p213 = pneg %p207
    %p214 = scmp.eq.s32.totalorder %s24, 3
    %p215 = por %p213, %p214
    %p216 = scmp.ne.s32.totalorder %s208, %s211
    %p217 = scmp.eq.s32.totalorder %s24, 0
    %p218 = por %p216, %p217
    %p219 = scmp.ne.s32.totalorder %s208, %s211
    %p220 = scmp.eq.s32.totalorder %s29, 3
    %p221 = por %p219, %p220
    %p222 = scmp.ne.s32.totalorder %s211, %s212
    %p223 = scmp.eq.s32.totalorder %s29, 0
    %p224 = por %p222, %p223
    %p225 = scmp.ne.s32.totalorder %s211, %s212
    %p226 = scmp.eq.s32.totalorder %s30, 3
    %p227 = por %p225, %p226
    %p229 = scmp.ne.s32.totalorder %s212, %s228
    %p230 = scmp.eq.s32.totalorder %s30, 0
    %p231 = por %p229, %p230
    %s232 = ssub.s32 %s31, %s43
    %s233 = ssub.s32 %s32, %s39
    %s234 = sor.u32 %s232, %s233
    %p235 = scmp.eq.s32.totalorder %s234, 0
    %s237 = sadd.s32 %s236, 1
    %s238 = scalar_select %p235, %s236, %s237
    %p241 = pneg %p235
    %p242 = scmp.eq.s32.totalorder %s24, 3
    %p243 = por %p241, %p242
    %p244 = scmp.ne.s32.totalorder %s236, %s239
    %p245 = scmp.eq.s32.totalorder %s24, 0
    %p246 = por %p244, %p245
    %p247 = scmp.ne.s32.totalorder %s236, %s239
    %p248 = scmp.eq.s32.totalorder %s29, 3
    %p249 = por %p247, %p248
    %p250 = scmp.ne.s32.totalorder %s239, %s240
    %p251 = scmp.eq.s32.totalorder %s29, 0
    %p252 = por %p250, %p251
    %p253 = scmp.ne.s32.totalorder %s239, %s240
    %p254 = scmp.eq.s32.totalorder %s30, 3
    %p255 = por %p253, %p254
    %p257 = scmp.ne.s32.totalorder %s240, %s256
    %p258 = scmp.eq.s32.totalorder %s30, 0
    %p259 = por %p257, %p258
    %s260 = ssub.s32 %s31, %s43
    %s261 = ssub.s32 %s32, %s39
    %s262 = sor.u32 %s260, %s261
    %p263 = scmp.eq.s32.totalorder %s262, 0
    %s265 = sadd.s32 %s264, 1
    %s266 = scalar_select %p263, %s264, %s265
    %p269 = pneg %p263
    %p270 = scmp.eq.s32.totalorder %s24, 3
    %p271 = por %p269, %p270
    %p272 = scmp.ne.s32.totalorder %s264, %s267
    %p273 = scmp.eq.s32.totalorder %s24, 0
    %p274 = por %p272, %p273
    %p275 = scmp.ne.s32.totalorder %s264, %s267
    %p276 = scmp.eq.s32.totalorder %s29, 3
    %p277 = por %p275, %p276
    %p278 = scmp.ne.s32.totalorder %s267, %s268
    %p279 = scmp.eq.s32.totalorder %s29, 0
    %p280 = por %p278, %p279
    %p281 = scmp.ne.s32.totalorder %s267, %s268
    %p282 = scmp.eq.s32.totalorder %s30, 3
    %p283 = por %p281, %p282
    %p285 = scmp.ne.s32.totalorder %s268, %s284
    %p286 = scmp.eq.s32.totalorder %s30, 0
    %p287 = por %p285, %p286
    %s288 = ssub.s32 %s31, %s43
    %s289 = ssub.s32 %s32, %s39
    %s290 = sor.u32 %s288, %s289
    %p291 = scmp.eq.s32.totalorder %s290, 0
    %s293 = sadd.s32 %s292, 1
    %s294 = scalar_select %p291, %s292, %s293
    %p297 = pneg %p291
    %p298 = scmp.eq.s32.totalorder %s24, 3
    %p299 = por %p297, %p298
    %p300 = scmp.ne.s32.totalorder %s292, %s295
    %p301 = scmp.eq.s32.totalorder %s24, 0
    %p302 = por %p300, %p301
    %p303 = scmp.ne.s32.totalorder %s292, %s295
    %p304 = scmp.eq.s32.totalorder %s29, 3
    %p305 = por %p303, %p304
    %p306 = scmp.ne.s32.totalorder %s295, %s296
    %p307 = scmp.eq.s32.totalorder %s29, 0
    %p308 = por %p306, %p307
    %p309 = scmp.ne.s32.totalorder %s295, %s296
    %p310 = scmp.eq.s32.totalorder %s30, 3
    %p311 = por %p309, %p310
    %p313 = scmp.ne.s32.totalorder %s296, %s312
    %p314 = scmp.eq.s32.totalorder %s30, 0
    %p315 = por %p313, %p314
    %s316 = ssub.s32 %s31, %s43
    %s317 = ssub.s32 %s32, %s39
    %s318 = sor.u32 %s316, %s317
    %p319 = scmp.eq.s32.totalorder %s318, 0
    %s321 = sadd.s32 %s320, 1
    %s322 = scalar_select %p319, %s320, %s321
    %p325 = pneg %p319
    %p326 = scmp.eq.s32.totalorder %s24, 3
    %p327 = por %p325, %p326
    %p328 = scmp.ne.s32.totalorder %s320, %s323
    %p329 = scmp.eq.s32.totalorder %s24, 0
    %p330 = por %p328, %p329
    %p331 = scmp.ne.s32.totalorder %s320, %s323
    %p332 = scmp.eq.s32.totalorder %s29, 3
    %p333 = por %p331, %p332
    %p334 = scmp.ne.s32.totalorder %s323, %s324
    %p335 = scmp.eq.s32.totalorder %s29, 0
    %p336 = por %p334, %p335
    %p337 = scmp.ne.s32.totalorder %s323, %s324
    %p338 = scmp.eq.s32.totalorder %s30, 3
    %p339 = por %p337, %p338
    %p341 = scmp.ne.s32.totalorder %s324, %s340
    %p342 = scmp.eq.s32.totalorder %s30, 0
    %p343 = por %p341, %p342
    %s344 = ssub.s32 %s31, %s43
    %s345 = ssub.s32 %s32, %s39
    %s346 = sor.u32 %s344, %s345
    %p347 = scmp.eq.s32.totalorder %s346, 0
    %s349 = sadd.s32 %s348, 1
    %s350 = scalar_select %p347, %s348, %s349
    %p353 = pneg %p347
    %p354 = scmp.eq.s32.totalorder %s24, 3
    %p355 = por %p353, %p354
    %p356 = scmp.ne.s32.totalorder %s348, %s351
    %p357 = scmp.eq.s32.totalorder %s24, 0
    %p358 = por %p356, %p357
    %p359 = scmp.ne.s32.totalorder %s348, %s351
    %p360 = scmp.eq.s32.totalorder %s29, 3
    %p361 = por %p359, %p360
    %p362 = scmp.ne.s32.totalorder %s351, %s352
    %p363 = scmp.eq.s32.totalorder %s29, 0
    %p364 = por %p362, %p363
    %p365 = scmp.ne.s32.totalorder %s351, %s352
    %p366 = scmp.eq.s32.totalorder %s30, 3
    %p367 = por %p365, %p366
    %p369 = scmp.ne.s32.totalorder %s352, %s368
    %p370 = scmp.eq.s32.totalorder %s30, 0
    %p371 = por %p369, %p370
    %s372 = ssub.s32 %s31, %s43
    %s373 = ssub.s32 %s32, %s39
    %s374 = sor.u32 %s372, %s373
    %p375 = scmp.eq.s32.totalorder %s374, 0
    %s377 = sadd.s32 %s376, 1
    %s378 = scalar_select %p375, %s376, %s377
    %p381 = pneg %p375
    %p382 = scmp.eq.s32.totalorder %s24, 3
    %p383 = por %p381, %p382
    %p384 = scmp.ne.s32.totalorder %s376, %s379
    %p385 = scmp.eq.s32.totalorder %s24, 0
    %p386 = por %p384, %p385
    %p387 = scmp.ne.s32.totalorder %s376, %s379
    %p388 = scmp.eq.s32.totalorder %s29, 3
    %p389 = por %p387, %p388
    %p390 = scmp.ne.s32.totalorder %s379, %s380
    %p391 = scmp.eq.s32.totalorder %s29, 0
    %p392 = por %p390, %p391
    %p393 = scmp.ne.s32.totalorder %s379, %s380
    %p394 = scmp.eq.s32.totalorder %s30, 3
    %p395 = por %p393, %p394
    %p397 = scmp.ne.s32.totalorder %s380, %s396
    %p398 = scmp.eq.s32.totalorder %s30, 0
    %p399 = por %p397, %p398
    %s400 = ssub.s32 %s31, %s43
    %s401 = ssub.s32 %s32, %s39
    %s402 = sor.u32 %s400, %s401
    %p403 = scmp.eq.s32.totalorder %s402, 0
    %s405 = sadd.s32 %s404, 1
    %s406 = scalar_select %p403, %s404, %s405
    %p409 = pneg %p403
    %p410 = scmp.eq.s32.totalorder %s24, 3
    %p411 = por %p409, %p410
    %p412 = scmp.ne.s32.totalorder %s404, %s407
    %p413 = scmp.eq.s32.totalorder %s24, 0
    %p414 = por %p412, %p413
    %p415 = scmp.ne.s32.totalorder %s404, %s407
    %p416 = scmp.eq.s32.totalorder %s29, 3
    %p417 = por %p415, %p416
    %p418 = scmp.ne.s32.totalorder %s407, %s408
    %p419 = scmp.eq.s32.totalorder %s29, 0
    %p420 = por %p418, %p419
    %p421 = scmp.ne.s32.totalorder %s407, %s408
    %p422 = scmp.eq.s32.totalorder %s30, 3
    %p423 = por %p421, %p422
    %p425 = scmp.ne.s32.totalorder %s408, %s424
    %p426 = scmp.eq.s32.totalorder %s30, 0
    %p427 = por %p425, %p426
    %s428 = ssub.s32 %s31, %s43
    %s429 = ssub.s32 %s32, %s39
    %s430 = sor.u32 %s428, %s429
    %p431 = scmp.eq.s32.totalorder %s430, 0
    %s433 = sadd.s32 %s432, 1
    %s434 = scalar_select %p431, %s432, %s433
    %p437 = pneg %p431
    %p438 = scmp.eq.s32.totalorder %s24, 3
    %p439 = por %p437, %p438
    %p440 = scmp.ne.s32.totalorder %s432, %s435
    %p441 = scmp.eq.s32.totalorder %s24, 0
    %p442 = por %p440, %p441
    %p443 = scmp.ne.s32.totalorder %s432, %s435
    %p444 = scmp.eq.s32.totalorder %s29, 3
    %p445 = por %p443, %p444
    %p446 = scmp.ne.s32.totalorder %s435, %s436
    %p447 = scmp.eq.s32.totalorder %s29, 0
    %p448 = por %p446, %p447
    %p449 = scmp.ne.s32.totalorder %s435, %s436
    %p450 = scmp.eq.s32.totalorder %s30, 3
    %p451 = por %p449, %p450
    %p453 = scmp.ne.s32.totalorder %s436, %s452
    %p454 = scmp.eq.s32.totalorder %s30, 0
    %p455 = por %p453, %p454
    %s456 = ssub.s32 %s31, %s43
    %s457 = ssub.s32 %s32, %s39
    %s458 = sor.u32 %s456, %s457
    %p459 = scmp.eq.s32.totalorder %s458, 0
    %s461 = sadd.s32 %s460, 1
    %s462 = scalar_select %p459, %s460, %s461
    %p465 = pneg %p459
    %p466 = scmp.eq.s32.totalorder %s24, 3
    %p467 = por %p465, %p466
    %p468 = scmp.ne.s32.totalorder %s460, %s463
    %p469 = scmp.eq.s32.totalorder %s24, 0
    %p470 = por %p468, %p469
    %p471 = scmp.ne.s32.totalorder %s460, %s463
    %p472 = scmp.eq.s32.totalorder %s29, 3
    %p473 = por %p471, %p472
    %p474 = scmp.ne.s32.totalorder %s463, %s464
    %p475 = scmp.eq.s32.totalorder %s29, 0
    %p476 = por %p474, %p475
    %p477 = scmp.ne.s32.totalorder %s463, %s464
    %p478 = scmp.eq.s32.totalorder %s30, 3
    %p479 = por %p477, %p478
    %p481 = scmp.ne.s32.totalorder %s464, %s480
    %p482 = scmp.eq.s32.totalorder %s30, 0
    %p483 = por %p481, %p482
    %s484 = ssub.s32 %s31, %s43
    %p485 = scmp.eq.s32.totalorder %s484, 0
    %s487 = sadd.s32 %s486, 1
    %s488 = scalar_select %p485, %s486, %s487
    %p491 = pneg %p485
    %p492 = scmp.eq.s32.totalorder %s24, 3
    %p493 = por %p491, %p492
    %p494 = scmp.ne.s32.totalorder %s486, %s489
    %p495 = scmp.eq.s32.totalorder %s24, 0
    %p496 = por %p494, %p495
    %p497 = scmp.ne.s32.totalorder %s486, %s489
    %p498 = scmp.eq.s32.totalorder %s29, 3
    %p499 = por %p497, %p498
    %p500 = scmp.ne.s32.totalorder %s489, %s490
    %p501 = scmp.eq.s32.totalorder %s29, 0
    %p502 = por %p500, %p501
    %p503 = scmp.ne.s32.totalorder %s489, %s490
    %p504 = scmp.eq.s32.totalorder %s30, 3
    %p505 = por %p503, %p504
    %p507 = scmp.ne.s32.totalorder %s490, %s506
    %p508 = scmp.eq.s32.totalorder %s30, 0
    %p509 = por %p507, %p508
    %s510 = ssub.s32 %s31, %s43
    %p511 = scmp.eq.s32.totalorder %s510, 0
    %s513 = sadd.s32 %s512, 1
    %s514 = scalar_select %p511, %s512, %s513
    %p517 = pneg %p511
    %p518 = scmp.eq.s32.totalorder %s24, 3
    %p519 = por %p517, %p518
    %p520 = scmp.ne.s32.totalorder %s512, %s515
    %p521 = scmp.eq.s32.totalorder %s24, 0
    %p522 = por %p520, %p521
    %p523 = scmp.ne.s32.totalorder %s512, %s515
    %p524 = scmp.eq.s32.totalorder %s29, 3
    %p525 = por %p523, %p524
    %p526 = scmp.ne.s32.totalorder %s515, %s516
    %p527 = scmp.eq.s32.totalorder %s29, 0
    %p528 = por %p526, %p527
    %p529 = scmp.ne.s32.totalorder %s515, %s516
    %p530 = scmp.eq.s32.totalorder %s30, 3
    %p531 = por %p529, %p530
    %p533 = scmp.ne.s32.totalorder %s516, %s532
    %p534 = scmp.eq.s32.totalorder %s30, 0
    %p535 = por %p533, %p534
    %s536 = ssub.s32 %s31, %s43
    %p537 = scmp.eq.s32.totalorder %s536, 0
    %s539 = sadd.s32 %s538, 1
    %s540 = scalar_select %p537, %s538, %s539
    %p543 = pneg %p537
    %p544 = scmp.eq.s32.totalorder %s24, 3
    %p545 = por %p543, %p544
    %p546 = scmp.ne.s32.totalorder %s538, %s541
    %p547 = scmp.eq.s32.totalorder %s24, 0
    %p548 = por %p546, %p547
    %p549 = scmp.ne.s32.totalorder %s538, %s541
    %p550 = scmp.eq.s32.totalorder %s29, 3
    %p551 = por %p549, %p550
    %p552 = scmp.ne.s32.totalorder %s541, %s542
    %p553 = scmp.eq.s32.totalorder %s29, 0
    %p554 = por %p552, %p553
    %p555 = scmp.ne.s32.totalorder %s541, %s542
    %p556 = scmp.eq.s32.totalorder %s30, 3
    %p557 = por %p555, %p556
    %p559 = scmp.ne.s32.totalorder %s542, %s558
    %p560 = scmp.eq.s32.totalorder %s30, 0
    %p561 = por %p559, %p560
    %p562 = scmp.le.s32.totalorder 1, %s24
    %p563 = scmp.lt.s32.totalorder %s24, 5
    %p564 = pnand %p562, %p563
    %p565 = pneg %p564
    // Predicated region
    $region9: #{a_call__.1} parent=5 // pred_check
      _
    $region10: #{a_call__.1} parent=5 // pred_check_branch
      %567 = sbr.rel (%p564) target = $region12
    $region11: #{a_call__.1} parent=5 // pred_region
      %s568 = ssub.s32 %s24, 1
    $region12: #{a_call__.1} parent=5 // pred_fallthru
      _
    %p569 = scmp.lt.s32.totalorder %s24, 4
    // Predicated region
    $region13: #{a_call__.1} parent=5 // pred_check
      %p570 = pneg %p569
    $region14: #{a_call__.1} parent=5 // pred_check_branch
      %572 = sbr.rel (%p570) target = $region16
    $region15: #{a_call__.1} parent=5 // pred_region
      // Predicated region
      $region17: #{a_call__.1} parent=15 // pred_check
        %p573 = pneg %p56
      $region18: #{a_call__.1} parent=15 // pred_check_branch
        %575 = sbr.rel (%p573) target = $region20
      $region19: #{a_call__.1} parent=15 // pred_region
        %p576 = scmp.lt.s32.totalorder %s31, 1
        %s577 = scalar_select %p576, %s31, 1
        %s578 = smul.addr %s577, 2
        %s579 = smul.addr %s578, 8
        %s580 = scalar_lea.vmem %s0, %s579
      $region20: #{a_call__.1} parent=15 // pred_fallthru
        _
      // Predicated region
      $region21: #{a_call__.1} parent=15 // pred_check
        %p581 = pneg %p82
      $region22: #{a_call__.1} parent=15 // pred_check_branch
        %583 = sbr.rel (%p581) target = $region24
      $region23: #{a_call__.1} parent=15 // pred_region
        %p584 = scmp.lt.s32.totalorder %s31, 1
        %s585 = scalar_select %p584, %s31, 1
        %s586 = smul.addr %s585, 2
        %s587 = scalar_lea.vmem %s1, %s586
      $region24: #{a_call__.1} parent=15 // pred_fallthru
        _
      // Predicated region
      $region25: #{a_call__.1} parent=15 // pred_check
        %p588 = pneg %p108
      $region26: #{a_call__.1} parent=15 // pred_check_branch
        %590 = sbr.rel (%p588) target = $region28
      $region27: #{a_call__.1} parent=15 // pred_region
        %p591 = scmp.lt.s32.totalorder %s31, 1
        %s592 = scalar_select %p591, %s31, 1
        %s593 = scalar_lea.vmem %s2, %s592
      $region28: #{a_call__.1} parent=15 // pred_fallthru
        _
      // Predicated region
      $region29: #{a_call__.1} parent=15 // pred_check
        %p594 = pneg %p134
      $region30: #{a_call__.1} parent=15 // pred_check_branch
        %596 = sbr.rel (%p594) target = $region32
      $region31: #{a_call__.1} parent=15 // pred_region
        %p597 = scmp.lt.s32.totalorder %s31, 1
        %s598 = scalar_select %p597, %s31, 1
        %s599 = scalar_lea.vmem %s3, %s598
      $region32: #{a_call__.1} parent=15 // pred_fallthru
        _
      // Predicated region
      $region33: #{a_call__.1} parent=15 // pred_check
        %p600 = pneg %p162
      $region34: #{a_call__.1} parent=15 // pred_check_branch
        %602 = sbr.rel (%p600) target = $region36
      $region35: #{a_call__.1} parent=15 // pred_region
        %p603 = scmp.lt.s32.totalorder %s31, 1
        %s604 = scalar_select %p603, %s31, 1
        %p605 = scmp.lt.s32.totalorder %s32, 1
        %s606 = scalar_select %p605, %s32, 1
        %s607 = smul.addr %s606, 192
        %s608 = smul.addr %s604, 384
        %s609 = sadd.s32 %s607, %s608
        %s610 = smul.addr %s609, 4
        %s611 = scalar_lea.vmem %s4, %s610
      $region36: #{a_call__.1} parent=15 // pred_fallthru
        _
      // Predicated region
      $region37: #{a_call__.1} parent=15 // pred_check
        %p612 = pneg %p190
      $region38: #{a_call__.1} parent=15 // pred_check_branch
        %614 = sbr.rel (%p612) target = $region40
      $region39: #{a_call__.1} parent=15 // pred_region
        %p615 = scmp.lt.s32.totalorder %s31, 1
        %s616 = scalar_select %p615, %s31, 1
        %p617 = scmp.lt.s32.totalorder %s32, 1
        %s618 = scalar_select %p617, %s32, 1
        %s619 = smul.addr %s618, 12
        %s620 = smul.addr %s616, 24
        %s621 = sadd.s32 %s619, %s620
        %s622 = scalar_lea.vmem %s5, %s621
      $region40: #{a_call__.1} parent=15 // pred_fallthru
        _
      // Predicated region
      $region41: #{a_call__.1} parent=15 // pred_check
        %p623 = pneg %p218
      $region42: #{a_call__.1} parent=15 // pred_check_branch
        %625 = sbr.rel (%p623) target = $region44
      $region43: #{a_call__.1} parent=15 // pred_region
        %p626 = scmp.lt.s32.totalorder %s31, 1
        %s627 = scalar_select %p626, %s31, 1
        %p628 = scmp.lt.s32.totalorder %s32, 1
        %s629 = scalar_select %p628, %s32, 1
        %s630 = smul.addr %s629, 64
        %s631 = smul.addr %s627, 128
        %s632 = sadd.s32 %s630, %s631
        %s633 = smul.addr %s632, 4
        %s634 = scalar_lea.vmem %s6, %s633
      $region44: #{a_call__.1} parent=15 // pred_fallthru
        _
      // Predicated region
      $region45: #{a_call__.1} parent=15 // pred_check
        %p635 = pneg %p246
      $region46: #{a_call__.1} parent=15 // pred_check_branch
        %637 = sbr.rel (%p635) target = $region48
      $region47: #{a_call__.1} parent=15 // pred_region
        %p638 = scmp.lt.s32.totalorder %s31, 1
        %s639 = scalar_select %p638, %s31, 1
        %p640 = scmp.lt.s32.totalorder %s32, 1
        %s641 = scalar_select %p640, %s32, 1
        %s642 = smul.addr %s639, 2
        %s643 = sadd.s32 %s641, %s642
        %s644 = scalar_lea.vmem %s7, %s643
      $region48: #{a_call__.1} parent=15 // pred_fallthru
        _
      // Predicated region
      $region49: #{a_call__.1} parent=15 // pred_check
        %p645 = pneg %p274
      $region50: #{a_call__.1} parent=15 // pred_check_branch
        %647 = sbr.rel (%p645) target = $region52
      $region51: #{a_call__.1} parent=15 // pred_region
        %p648 = scmp.lt.s32.totalorder %s31, 1
        %s649 = scalar_select %p648, %s31, 1
        %p650 = scmp.lt.s32.totalorder %s32, 1
        %s651 = scalar_select %p650, %s32, 1
        %s652 = smul.addr %s649, 2
        %s653 = sadd.s32 %s651, %s652
        %s654 = scalar_lea.vmem %s8, %s653
      $region52: #{a_call__.1} parent=15 // pred_fallthru
        _
      // Predicated region
      $region53: #{a_call__.1} parent=15 // pred_check
        %p655 = pneg %p302
      $region54: #{a_call__.1} parent=15 // pred_check_branch
        %657 = sbr.rel (%p655) target = $region56
      $region55: #{a_call__.1} parent=15 // pred_region
        %p658 = scmp.lt.s32.totalorder %s31, 1
        %s659 = scalar_select %p658, %s31, 1
        %p660 = scmp.lt.s32.totalorder %s32, 1
        %s661 = scalar_select %p660, %s32, 1
        %s662 = smul.addr %s659, 2
        %s663 = sadd.s32 %s661, %s662
        %s664 = scalar_lea.vmem %s9, %s663
      $region56: #{a_call__.1} parent=15 // pred_fallthru
        _
      // Predicated region
      $region57: #{a_call__.1} parent=15 // pred_check
        %p665 = pneg %p330
      $region58: #{a_call__.1} parent=15 // pred_check_branch
        %667 = sbr.rel (%p665) target = $region60
      $region59: #{a_call__.1} parent=15 // pred_region
        %p668 = scmp.lt.s32.totalorder %s31, 1
        %s669 = scalar_select %p668, %s31, 1
        %p670 = scmp.lt.s32.totalorder %s32, 1
        %s671 = scalar_select %p670, %s32, 1
        %s672 = smul.addr %s671, 16
        %s673 = smul.addr %s669, 32
        %s674 = sadd.s32 %s672, %s673
        %s675 = smul.addr %s674, 4
        %s676 = scalar_lea.vmem %s10, %s675
      $region60: #{a_call__.1} parent=15 // pred_fallthru
        _
      // Predicated region
      $region61: #{a_call__.1} parent=15 // pred_check
        %p677 = pneg %p358
      $region62: #{a_call__.1} parent=15 // pred_check_branch
        %679 = sbr.rel (%p677) target = $region64
      $region63: #{a_call__.1} parent=15 // pred_region
        %p680 = scmp.lt.s32.totalorder %s31, 1
        %s681 = scalar_select %p680, %s31, 1
        %p682 = scmp.lt.s32.totalorder %s32, 1
        %s683 = scalar_select %p682, %s32, 1
        %s684 = smul.addr %s681, 2
        %s685 = sadd.s32 %s683, %s684
        %s686 = scalar_lea.vmem %s11, %s685
      $region64: #{a_call__.1} parent=15 // pred_fallthru
        _
      // Predicated region
      $region65: #{a_call__.1} parent=15 // pred_check
        %p687 = pneg %p386
      $region66: #{a_call__.1} parent=15 // pred_check_branch
        %689 = sbr.rel (%p687) target = $region68
      $region67: #{a_call__.1} parent=15 // pred_region
        %p690 = scmp.lt.s32.totalorder %s31, 1
        %s691 = scalar_select %p690, %s31, 1
        %p692 = scmp.lt.s32.totalorder %s32, 1
        %s693 = scalar_select %p692, %s32, 1
        %s694 = smul.addr %s693, 16
        %s695 = smul.addr %s691, 32
        %s696 = sadd.s32 %s694, %s695
        %s697 = smul.addr %s696, 4
        %s698 = scalar_lea.vmem %s12, %s697
      $region68: #{a_call__.1} parent=15 // pred_fallthru
        _
      // Predicated region
      $region69: #{a_call__.1} parent=15 // pred_check
        %p699 = pneg %p414
      $region70: #{a_call__.1} parent=15 // pred_check_branch
        %701 = sbr.rel (%p699) target = $region72
      $region71: #{a_call__.1} parent=15 // pred_region
        %p702 = scmp.lt.s32.totalorder %s31, 1
        %s703 = scalar_select %p702, %s31, 1
        %p704 = scmp.lt.s32.totalorder %s32, 1
        %s705 = scalar_select %p704, %s32, 1
        %s706 = smul.addr %s703, 2
        %s707 = sadd.s32 %s705, %s706
        %s708 = scalar_lea.vmem %s13, %s707
      $region72: #{a_call__.1} parent=15 // pred_fallthru
        _
      // Predicated region
      $region73: #{a_call__.1} parent=15 // pred_check
        %p709 = pneg %p442
      $region74: #{a_call__.1} parent=15 // pred_check_branch
        %711 = sbr.rel (%p709) target = $region76
      $region75: #{a_call__.1} parent=15 // pred_region
        %p712 = scmp.lt.s32.totalorder %s31, 1
        %s713 = scalar_select %p712, %s31, 1
        %p714 = scmp.lt.s32.totalorder %s32, 1
        %s715 = scalar_select %p714, %s32, 1
        %s716 = smul.addr %s713, 2
        %s717 = sadd.s32 %s715, %s716
        %s718 = scalar_lea.vmem %s14, %s717
      $region76: #{a_call__.1} parent=15 // pred_fallthru
        _
      // Predicated region
      $region77: #{a_call__.1} parent=15 // pred_check
        %p719 = pneg %p470
      $region78: #{a_call__.1} parent=15 // pred_check_branch
        %721 = sbr.rel (%p719) target = $region80
      $region79: #{a_call__.1} parent=15 // pred_region
        %p722 = scmp.lt.s32.totalorder %s31, 1
        %s723 = scalar_select %p722, %s31, 1
        %p724 = scmp.lt.s32.totalorder %s32, 1
        %s725 = scalar_select %p724, %s32, 1
        %s726 = smul.addr %s723, 2
        %s727 = sadd.s32 %s725, %s726
        %s728 = scalar_lea.vmem %s15, %s727
      $region80: #{a_call__.1} parent=15 // pred_fallthru
        _
      // Predicated region
      $region81: #{a_call__.1} parent=15 // pred_check
        %p729 = pneg %p496
      $region82: #{a_call__.1} parent=15 // pred_check_branch
        %731 = sbr.rel (%p729) target = $region84
      $region83: #{a_call__.1} parent=15 // pred_region
        %p732 = scmp.lt.s32.totalorder %s31, 1
        %s733 = scalar_select %p732, %s31, 1
        %s734 = smul.addr %s733, 16
        %s735 = smul.addr %s734, 4
        %s736 = scalar_lea.vmem %s16, %s735
      $region84: #{a_call__.1} parent=15 // pred_fallthru
        _
      // Predicated region
      $region85: #{a_call__.1} parent=15 // pred_check
        %p737 = pneg %p522
      $region86: #{a_call__.1} parent=15 // pred_check_branch
        %739 = sbr.rel (%p737) target = $region88
      $region87: #{a_call__.1} parent=15 // pred_region
        %p740 = scmp.lt.s32.totalorder %s31, 1
        %s741 = scalar_select %p740, %s31, 1
        %s742 = scalar_lea.vmem %s17, %s741
      $region88: #{a_call__.1} parent=15 // pred_fallthru
        _
    $region16: #{a_call__.1} parent=5 // pred_fallthru
      _
    %p743 = scmp.le.s32.totalorder 1, %s24
    %p744 = scmp.lt.s32.totalorder %s24, 5
    %p745 = pnand %p743, %p744
    %p746 = pneg %p745
    // Predicated region
    $region89: #{a_call__.1} parent=5 // pred_check
      _
    $region90: #{a_call__.1} parent=5 // pred_check_branch
      %748 = sbr.rel (%p745) target = $region92
    $region91: #{a_call__.1} parent=5 // pred_region
      %s749 = ssub.s32 %s24, 1
      %p750 = scmp.lt.s32.totalorder %s33, 1
      %s751 = scalar_select %p750, %s33, 1
      %s752 = smul.addr %s751, 2
      %s753 = smul.addr %s752, 8
      %s754 = scalar_lea.vmem %s0, %s753
      %p755 = pneg %p62
      %p756 = pneg %p59
      %p757 = scmp.lt.s32.totalorder %s33, 1
      %s758 = scalar_select %p757, %s33, 1
      %s759 = smul.addr %s758, 2
      %s760 = scalar_lea.vmem %s1, %s759
      %p761 = pneg %p88
      %p762 = pneg %p85
      %p763 = scmp.lt.s32.totalorder %s33, 1
      %s764 = scalar_select %p763, %s33, 1
      %s765 = scalar_lea.vmem %s2, %s764
      %p766 = pneg %p114
      %p767 = pneg %p111
      %p768 = scmp.lt.s32.totalorder %s33, 1
      %s769 = scalar_select %p768, %s33, 1
      %s770 = scalar_lea.vmem %s3, %s769
      %p771 = pneg %p140
      %p772 = pneg %p137
      %p773 = scmp.lt.s32.totalorder %s33, 1
      %s774 = scalar_select %p773, %s33, 1
      %p775 = scmp.lt.s32.totalorder %s34, 1
      %s776 = scalar_select %p775, %s34, 1
      %s777 = smul.addr %s776, 192
      %s778 = smul.addr %s774, 384
      %s779 = sadd.s32 %s777, %s778
      %s780 = smul.addr %s779, 4
      %s781 = scalar_lea.vmem %s4, %s780
      %p782 = pneg %p168
      %p783 = pneg %p165
      %p784 = scmp.lt.s32.totalorder %s33, 1
      %s785 = scalar_select %p784, %s33, 1
      %p786 = scmp.lt.s32.totalorder %s34, 1
      %s787 = scalar_select %p786, %s34, 1
      %s788 = smul.addr %s787, 12
      %s789 = smul.addr %s785, 24
      %s790 = sadd.s32 %s788, %s789
      %s791 = scalar_lea.vmem %s5, %s790
      %p792 = pneg %p196
      %p793 = pneg %p193
      %p794 = scmp.lt.s32.totalorder %s33, 1
      %s795 = scalar_select %p794, %s33, 1
      %p796 = scmp.lt.s32.totalorder %s34, 1
      %s797 = scalar_select %p796, %s34, 1
      %s798 = smul.addr %s797, 64
      %s799 = smul.addr %s795, 128
      %s800 = sadd.s32 %s798, %s799
      %s801 = smul.addr %s800, 4
      %s802 = scalar_lea.vmem %s6, %s801
      %p803 = pneg %p224
      %p804 = pneg %p221
      %p805 = scmp.lt.s32.totalorder %s33, 1
      %s806 = scalar_select %p805, %s33, 1
      %p807 = scmp.lt.s32.totalorder %s34, 1
      %s808 = scalar_select %p807, %s34, 1
      %s809 = smul.addr %s806, 2
      %s810 = sadd.s32 %s808, %s809
      %s811 = scalar_lea.vmem %s7, %s810
      %p812 = pneg %p252
      %p813 = pneg %p249
      %p814 = scmp.lt.s32.totalorder %s33, 1
      %s815 = scalar_select %p814, %s33, 1
      %p816 = scmp.lt.s32.totalorder %s34, 1
      %s817 = scalar_select %p816, %s34, 1
      %s818 = smul.addr %s815, 2
      %s819 = sadd.s32 %s817, %s818
      %s820 = scalar_lea.vmem %s8, %s819
      %p821 = pneg %p280
      %p822 = pneg %p277
      %p823 = scmp.lt.s32.totalorder %s33, 1
      %s824 = scalar_select %p823, %s33, 1
      %p825 = scmp.lt.s32.totalorder %s34, 1
      %s826 = scalar_select %p825, %s34, 1
      %s827 = smul.addr %s824, 2
      %s828 = sadd.s32 %s826, %s827
      %s829 = scalar_lea.vmem %s9, %s828
      %p830 = pneg %p308
      %p831 = pneg %p305
      %p832 = scmp.lt.s32.totalorder %s33, 1
      %s833 = scalar_select %p832, %s33, 1
      %p834 = scmp.lt.s32.totalorder %s34, 1
      %s835 = scalar_select %p834, %s34, 1
      %s836 = smul.addr %s835, 16
      %s837 = smul.addr %s833, 32
      %s838 = sadd.s32 %s836, %s837
      %s839 = smul.addr %s838, 4
      %s840 = scalar_lea.vmem %s10, %s839
      %p841 = pneg %p336
      %p842 = pneg %p333
      %p843 = scmp.lt.s32.totalorder %s33, 1
      %s844 = scalar_select %p843, %s33, 1
      %p845 = scmp.lt.s32.totalorder %s34, 1
      %s846 = scalar_select %p845, %s34, 1
      %s847 = smul.addr %s844, 2
      %s848 = sadd.s32 %s846, %s847
      %s849 = scalar_lea.vmem %s11, %s848
      %p850 = pneg %p364
      %p851 = pneg %p361
      %p852 = scmp.lt.s32.totalorder %s33, 1
      %s853 = scalar_select %p852, %s33, 1
      %p854 = scmp.lt.s32.totalorder %s34, 1
      %s855 = scalar_select %p854, %s34, 1
      %s856 = smul.addr %s855, 16
      %s857 = smul.addr %s853, 32
      %s858 = sadd.s32 %s856, %s857
      %s859 = smul.addr %s858, 4
      %s860 = scalar_lea.vmem %s12, %s859
      %p861 = pneg %p392
      %p862 = pneg %p389
      %p863 = scmp.lt.s32.totalorder %s33, 1
      %s864 = scalar_select %p863, %s33, 1
      %p865 = scmp.lt.s32.totalorder %s34, 1
      %s866 = scalar_select %p865, %s34, 1
      %s867 = smul.addr %s864, 2
      %s868 = sadd.s32 %s866, %s867
      %s869 = scalar_lea.vmem %s13, %s868
      %p870 = pneg %p420
      %p871 = pneg %p417
      %p872 = scmp.lt.s32.totalorder %s33, 1
      %s873 = scalar_select %p872, %s33, 1
      %p874 = scmp.lt.s32.totalorder %s34, 1
      %s875 = scalar_select %p874, %s34, 1
      %s876 = smul.addr %s873, 2
      %s877 = sadd.s32 %s875, %s876
      %s878 = scalar_lea.vmem %s14, %s877
      %p879 = pneg %p448
      %p880 = pneg %p445
      %p881 = scmp.lt.s32.totalorder %s33, 1
      %s882 = scalar_select %p881, %s33, 1
      %p883 = scmp.lt.s32.totalorder %s34, 1
      %s884 = scalar_select %p883, %s34, 1
      %s885 = smul.addr %s882, 2
      %s886 = sadd.s32 %s884, %s885
      %s887 = scalar_lea.vmem %s15, %s886
      %p888 = pneg %p476
      %p889 = pneg %p473
      %p890 = scmp.lt.s32.totalorder %s33, 1
      %s891 = scalar_select %p890, %s33, 1
      %s892 = smul.addr %s891, 16
      %s893 = smul.addr %s892, 4
      %s894 = scalar_lea.vmem %s16, %s893
      %p895 = pneg %p502
      %p896 = pneg %p499
      %p897 = scmp.lt.s32.totalorder %s33, 1
      %s898 = scalar_select %p897, %s33, 1
      %s899 = scalar_lea.vmem %s17, %s898
      %p900 = pneg %p528
      %p901 = pneg %p525
      %p902 = pneg %p554
      %p903 = pneg %p551
      %p904 = scmp.lt.s32.totalorder %s33, 1
      %s905 = scalar_select %p904, %s33, 1
      %s906 = smul.addr %s905, 2
      %s907 = scalar_lea.vmem %s18, %s906
      %p908 = scmp.lt.s32.totalorder %s33, 1
      %s909 = scalar_select %p908, %s33, 1
      %s910 = smul.addr %s909, 2
      %s911 = smul.addr %s910, 8
      %s912 = scalar_lea.vmem %s0, %s911
      %p913 = scmp.lt.s32.totalorder %s33, 1
      %s914 = scalar_select %p913, %s33, 1
      %s915 = smul.addr %s914, 2
      %s916 = scalar_lea.vmem %s1, %s915
      %p917 = scmp.lt.s32.totalorder %s33, 1
      %s918 = scalar_select %p917, %s33, 1
      %s919 = scalar_lea.vmem %s2, %s918
      %p920 = scmp.lt.s32.totalorder %s33, 1
      %s921 = scalar_select %p920, %s33, 1
      %s922 = scalar_lea.vmem %s3, %s921
      %p923 = scmp.lt.s32.totalorder %s33, 1
      %s924 = scalar_select %p923, %s33, 1
      %p925 = scmp.lt.s32.totalorder %s34, 1
      %s926 = scalar_select %p925, %s34, 1
      %s927 = smul.addr %s926, 192
      %s928 = smul.addr %s924, 384
      %s929 = sadd.s32 %s927, %s928
      %s930 = smul.addr %s929, 4
      %s931 = scalar_lea.vmem %s4, %s930
      %p932 = scmp.lt.s32.totalorder %s33, 1
      %s933 = scalar_select %p932, %s33, 1
      %p934 = scmp.lt.s32.totalorder %s34, 1
      %s935 = scalar_select %p934, %s34, 1
      %s936 = smul.addr %s935, 12
      %s937 = smul.addr %s933, 24
      %s938 = sadd.s32 %s936, %s937
      %s939 = scalar_lea.vmem %s5, %s938
      %p940 = scmp.lt.s32.totalorder %s33, 1
      %s941 = scalar_select %p940, %s33, 1
      %p942 = scmp.lt.s32.totalorder %s34, 1
      %s943 = scalar_select %p942, %s34, 1
      %s944 = smul.addr %s943, 64
      %s945 = smul.addr %s941, 128
      %s946 = sadd.s32 %s944, %s945
      %s947 = smul.addr %s946, 4
      %s948 = scalar_lea.vmem %s6, %s947
      %p949 = scmp.lt.s32.totalorder %s33, 1
      %s950 = scalar_select %p949, %s33, 1
      %p951 = scmp.lt.s32.totalorder %s34, 1
      %s952 = scalar_select %p951, %s34, 1
      %s953 = smul.addr %s950, 2
      %s954 = sadd.s32 %s952, %s953
      %s955 = scalar_lea.vmem %s7, %s954
      %p956 = scmp.lt.s32.totalorder %s33, 1
      %s957 = scalar_select %p956, %s33, 1
      %p958 = scmp.lt.s32.totalorder %s34, 1
      %s959 = scalar_select %p958, %s34, 1
      %s960 = smul.addr %s957, 2
      %s961 = sadd.s32 %s959, %s960
      %s962 = scalar_lea.vmem %s8, %s961
      %p963 = scmp.lt.s32.totalorder %s33, 1
      %s964 = scalar_select %p963, %s33, 1
      %p965 = scmp.lt.s32.totalorder %s34, 1
      %s966 = scalar_select %p965, %s34, 1
      %s967 = smul.addr %s964, 2
      %s968 = sadd.s32 %s966, %s967
      %s969 = scalar_lea.vmem %s9, %s968
      %p970 = scmp.lt.s32.totalorder %s33, 1
      %s971 = scalar_select %p970, %s33, 1
      %p972 = scmp.lt.s32.totalorder %s34, 1
      %s973 = scalar_select %p972, %s34, 1
      %s974 = smul.addr %s973, 16
      %s975 = smul.addr %s971, 32
      %s976 = sadd.s32 %s974, %s975
      %s977 = smul.addr %s976, 4
      %s978 = scalar_lea.vmem %s10, %s977
      %p979 = scmp.lt.s32.totalorder %s33, 1
      %s980 = scalar_select %p979, %s33, 1
      %p981 = scmp.lt.s32.totalorder %s34, 1
      %s982 = scalar_select %p981, %s34, 1
      %s983 = smul.addr %s980, 2
      %s984 = sadd.s32 %s982, %s983
      %s985 = scalar_lea.vmem %s11, %s984
      %p986 = scmp.lt.s32.totalorder %s33, 1
      %s987 = scalar_select %p986, %s33, 1
      %p988 = scmp.lt.s32.totalorder %s34, 1
      %s989 = scalar_select %p988, %s34, 1
      %s990 = smul.addr %s989, 16
      %s991 = smul.addr %s987, 32
      %s992 = sadd.s32 %s990, %s991
      %s993 = smul.addr %s992, 4
      %s994 = scalar_lea.vmem %s12, %s993
      %p995 = scmp.lt.s32.totalorder %s33, 1
      %s996 = scalar_select %p995, %s33, 1
      %p997 = scmp.lt.s32.totalorder %s34, 1
      %s998 = scalar_select %p997, %s34, 1
      %s999 = smul.addr %s996, 2
      %s1000 = sadd.s32 %s998, %s999
      %s1001 = scalar_lea.vmem %s13, %s1000
      %p1002 = scmp.lt.s32.totalorder %s33, 1
      %s1003 = scalar_select %p1002, %s33, 1
      %p1004 = scmp.lt.s32.totalorder %s34, 1
      %s1005 = scalar_select %p1004, %s34, 1
      %s1006 = smul.addr %s1003, 2
      %s1007 = sadd.s32 %s1005, %s1006
      %s1008 = scalar_lea.vmem %s14, %s1007
      %p1009 = scmp.lt.s32.totalorder %s33, 1
      %s1010 = scalar_select %p1009, %s33, 1
      %p1011 = scmp.lt.s32.totalorder %s34, 1
      %s1012 = scalar_select %p1011, %s34, 1
      %s1013 = smul.addr %s1010, 2
      %s1014 = sadd.s32 %s1012, %s1013
      %s1015 = scalar_lea.vmem %s15, %s1014
      %p1016 = scmp.lt.s32.totalorder %s33, 1
      %s1017 = scalar_select %p1016, %s33, 1
      %s1018 = smul.addr %s1017, 16
      %s1019 = smul.addr %s1018, 4
      %s1020 = scalar_lea.vmem %s16, %s1019
      %p1021 = scmp.lt.s32.totalorder %s33, 1
      %s1022 = scalar_select %p1021, %s33, 1
      %s1023 = scalar_lea.vmem %s17, %s1022
      %p1024 = scmp.lt.s32.totalorder %s33, 1
      %s1025 = scalar_select %p1024, %s33, 1
      %s1026 = smul.addr %s1025, 2
      %s1027 = scalar_lea.vmem %s18, %s1026
      %v1029 = vlaneseq
      %v1030 = vand.u32 %v1029, 127
      %vm1031 = vcmp.lt.s32.totalorder %v1030, 32
      %v1032 = vsel %vm1031, 1, 0
      %v1033 = vcvt.s32.f32 %v1032
      %p1034 = scmp.eq.s32.totalorder %s34, 0
      // Predicated region
      $region93: #{a_call__.1} parent=91 // pred_check
        %p1035 = pneg %p1034
      $region94: #{a_call__.1} parent=91 // pred_check_branch
        %1037 = sbr.rel (%p1035) target = $region96
      $region95: #{a_call__.1} parent=91 // pred_region
        %v1038 = vld [vmem:[%s912] sm:$0xff]
        %v1039 = vld [vmem:[%s912 + $0x8] sm:$0xff]
        %v1040 = vld [vmem:[%s919] sm:$0x1]
        %v1041 = vld [vmem:[%s922] sm:$0x1]
        %1042 = vadd.xlane.f32.xlu0 %v1038
        %v1043 = vpop.xlane.xlu0 %1042
        %1044 = vadd.xlane.f32.xlu0 %v1039
        %v1045 = vpop.xlane.xlu0 %1044
        %v1046 = vmul.f32 %v1043, 0.03125
        %v1047 = vmul.f32 %v1045, 0.03125
        %v1048 = vsub.f32 %v1038, %v1046
        %v1049 = vsub.f32 %v1039, %v1047
        %v1050 = vmul.f32 %v1048, %v1033
        %v1051 = vmul.f32 %v1049, %v1033
        %v1052 = vmul.f32 %v1050, %v1050
        %v1053 = vmul.f32 %v1051, %v1051
        %1054 = vadd.xlane.f32.xlu0 %v1052
        %v1055 = vpop.xlane.xlu0 %1054
        %1056 = vadd.xlane.f32.xlu0 %v1053
        %v1057 = vpop.xlane.xlu0 %1056
        %v1058 = vmul.f32 %v1055, 0.03125
        %v1059 = vmul.f32 %v1057, 0.03125
        %v1060 = vadd.f32 %v1058, 1e-12
        %v1061 = vadd.f32 %v1059, 1e-12
        %v1062 = vrsqrt.pop %v1060
        %v1063 = vrsqrt.pop %v1061
        %v1064 = vmul.f32 %v1050, %v1062
        %v1065 = vmul.f32 %v1051, %v1063
        %v1067 = vlaneseq
        %v1068 = vshrl.u32 %v1067, 7
        %v1069 = vsub.s32 0, %v1068
        %v1070 = vrot.slane %v1040, %v1069
        %v1072 = vmul.f32 %v1064, %v1070
        %v1073 = vmul.f32 %v1065, %v1070
        %v1075 = vlaneseq
        %v1076 = vshrl.u32 %v1075, 7
        %v1077 = vsub.s32 0, %v1076
        %v1078 = vrot.slane %v1041, %v1077
        %v1080 = vadd.f32 %v1072, %v1078
        %v1081 = vadd.f32 %v1073, %v1078
        %1082 = vst [vmem:[#allocation2] sm:$0xff] %v1080
        %1083 = vst [vmem:[#allocation2 + $0x8] sm:$0xff] %v1081
      $region96: #{a_call__.1} parent=91 // pred_fallthru
        _
      %v1084 = vld [vmem:[#allocation2] sm:$0xff]
      %v1085 = vld [vmem:[#allocation2 + $0x8] sm:$0xff]
      %v1086 = vpack.c.bf16 %v1085, %v1084
      %v1087 = vld [vmem:[%s916] sm:$0x3]
      %vm1088 = vcmp.gt.s32.totalorder %v1087, 0
      %v1089 = vsel %vm1088, 0.0, -10000.0
      %v1092 = vunpack.c.l.s4 1966171168
      %v1093 = vunpack.c.0.s8 %v1092
      %v1094 = vlaneseq
      %v1095 = vshrl.u32 %v1094, 7
      %v1096 = vsub.s32 %v1093, %v1095
      %v1097 = vrot.slane %v1089, %v1096
      %v1098 = vcombine.high %v1097, %v1097
      %v1100 = vunpack.c.l.s4 1966171168
      %v1101 = vunpack.c.0.s8 %v1100
      %v1102 = vlaneseq
      %v1103 = vshrl.u32 %v1102, 7
      %v1104 = vsub.s32 %v1101, %v1103
      %v1105 = vrot.slane %v1097, %v1104
      %v1107 = vunpack.c.l.s4 1966171168
      %v1108 = vunpack.c.0.s8 %v1107
      %v1109 = vlaneseq
      %v1110 = vshrl.u32 %v1109, 7
      %v1111 = vsub.s32 %v1108, %v1110
      %v1112 = vrot.slane %v1098, %v1111
      %v1113 = vld [vmem:[%s955] sm:$0x1]
      %v1114 = vld [vmem:[%s931] sm:$0xff]
      %v1115 = vld [vmem:[%s931 + $0x8] sm:$0xf]
      %v1116 = vld [vmem:[%s931 + $0xc] sm:$0xff]
      %v1117 = vld [vmem:[%s931 + $0x14] sm:$0xf]
      %v1118 = vld [vmem:[%s931 + $0x18] sm:$0xff]
      %v1119 = vld [vmem:[%s931 + $0x20] sm:$0xf]
      %v1120 = vld [vmem:[%s931 + $0x24] sm:$0xff]
      %v1121 = vld [vmem:[%s931 + $0x2c] sm:$0xf]
      %v1122 = vld [vmem:[%s931 + $0x30] sm:$0xff]
      %v1123 = vld [vmem:[%s931 + $0x38] sm:$0xf]
      %v1124 = vld [vmem:[%s931 + $0x3c] sm:$0xff]
      %v1125 = vld [vmem:[%s931 + $0x44] sm:$0xf]
      %v1126 = vld [vmem:[%s931 + $0x48] sm:$0xff]
      %v1127 = vld [vmem:[%s931 + $0x50] sm:$0xf]
      %v1128 = vld [vmem:[%s931 + $0x54] sm:$0xff]
      %v1129 = vld [vmem:[%s931 + $0x5c] sm:$0xf]
      %v1130 = vld [vmem:[%s931 + $0x60] sm:$0xff]
      %v1131 = vld [vmem:[%s931 + $0x68] sm:$0xf]
      %v1132 = vld [vmem:[%s931 + $0x6c] sm:$0xff]
      %v1133 = vld [vmem:[%s931 + $0x74] sm:$0xf]
      %v1134 = vld [vmem:[%s931 + $0x78] sm:$0xff]
      %v1135 = vld [vmem:[%s931 + $0x80] sm:$0xf]
      %v1136 = vld [vmem:[%s931 + $0x84] sm:$0xff]
      %v1137 = vld [vmem:[%s931 + $0x8c] sm:$0xf]
      %v1138 = vld [vmem:[%s931 + $0x90] sm:$0xff]
      %v1139 = vld [vmem:[%s931 + $0x98] sm:$0xf]
      %v1140 = vld [vmem:[%s931 + $0x9c] sm:$0xff]
      %v1141 = vld [vmem:[%s931 + $0xa4] sm:$0xf]
      %v1142 = vld [vmem:[%s931 + $0xa8] sm:$0xff]
      %v1143 = vld [vmem:[%s931 + $0xb0] sm:$0xf]
      %v1144 = vld [vmem:[%s931 + $0xb4] sm:$0xff]
      %v1145 = vld [vmem:[%s931 + $0xbc] sm:$0xf]
      %v1146 = vld [vmem:[%s939] sm:$0x7]
      %v1148 = vlaneseq
      %v1149 = vshrl.u32 %v1148, 7
      %v1150 = vsub.s32 0, %v1149
      %v1151 = vrot.slane %v1146, %v1150
      %v1152 = vlaneseq
      %v1153 = vshrl.u32 %v1152, 7
      %v1154 = vsub.s32 1, %v1153
      %v1155 = vrot.slane %v1146, %v1154
      %v1156 = vlaneseq
      %v1157 = vshrl.u32 %v1156, 7
      %v1158 = vsub.s32 2, %v1157
      %v1159 = vrot.slane %v1146, %v1158
      %v1195 = vunpack.c.l.b16 %v1114
      %v1196 = vunpack.c.h.b16 %v1114
      %v1197 = vunpack.c.l.b16 %v1115
      %v1198 = vunpack.c.l.b16 %v1116
      %v1199 = vunpack.c.h.b16 %v1116
      %v1200 = vunpack.c.l.b16 %v1117
      %v1201 = vunpack.c.l.b16 %v1118
      %v1202 = vunpack.c.h.b16 %v1118
      %v1203 = vunpack.c.l.b16 %v1119
      %v1204 = vunpack.c.l.b16 %v1120
      %v1205 = vunpack.c.h.b16 %v1120
      %v1206 = vunpack.c.l.b16 %v1121
      %v1207 = vunpack.c.l.b16 %v1122
      %v1208 = vunpack.c.h.b16 %v1122
      %v1209 = vunpack.c.l.b16 %v1123
      %v1210 = vunpack.c.l.b16 %v1124
      %v1211 = vunpack.c.h.b16 %v1124
      %v1212 = vunpack.c.l.b16 %v1125
      %v1213 = vunpack.c.l.b16 %v1126
      %v1214 = vunpack.c.h.b16 %v1126
      %v1215 = vunpack.c.l.b16 %v1127
      %v1216 = vunpack.c.l.b16 %v1128
      %v1217 = vunpack.c.h.b16 %v1128
      %v1218 = vunpack.c.l.b16 %v1129
      %v1219 = vunpack.c.l.b16 %v1130
      %v1220 = vunpack.c.h.b16 %v1130
      %v1221 = vunpack.c.l.b16 %v1131
      %v1222 = vunpack.c.l.b16 %v1132
      %v1223 = vunpack.c.h.b16 %v1132
      %v1224 = vunpack.c.l.b16 %v1133
      %v1225 = vunpack.c.l.b16 %v1134
      %v1226 = vunpack.c.h.b16 %v1134
      %v1227 = vunpack.c.l.b16 %v1135
      %v1228 = vunpack.c.l.b16 %v1136
      %v1229 = vunpack.c.h.b16 %v1136
      %v1230 = vunpack.c.l.b16 %v1137
      %v1231 = vunpack.c.l.b16 %v1138
      %v1232 = vunpack.c.h.b16 %v1138
      %v1233 = vunpack.c.l.b16 %v1139
      %v1234 = vunpack.c.l.b16 %v1140
      %v1235 = vunpack.c.h.b16 %v1140
      %v1236 = vunpack.c.l.b16 %v1141
      %v1237 = vunpack.c.l.b16 %v1142
      %v1238 = vunpack.c.h.b16 %v1142
      %v1239 = vunpack.c.l.b16 %v1143
      %v1240 = vunpack.c.l.b16 %v1144
      %v1241 = vunpack.c.h.b16 %v1144
      %v1242 = vunpack.c.l.b16 %v1145
      %v1243 = vpack.c.b16 %v1198, %v1195
      %v1244 = vpack.c.b16 %v1199, %v1196
      %v1245 = vpack.c.b16 %v1200, %v1197
      %v1246 = vpack.c.b16 %v1204, %v1201
      %v1247 = vpack.c.b16 %v1205, %v1202
      %v1248 = vpack.c.b16 %v1206, %v1203
      %v1249 = vpack.c.b16 %v1210, %v1207
      %v1250 = vpack.c.b16 %v1211, %v1208
      %v1251 = vpack.c.b16 %v1212, %v1209
      %v1252 = vpack.c.b16 %v1216, %v1213
      %v1253 = vpack.c.b16 %v1217, %v1214
      %v1254 = vpack.c.b16 %v1218, %v1215
      %v1255 = vpack.c.b16 %v1222, %v1219
      %v1256 = vpack.c.b16 %v1223, %v1220
      %v1257 = vpack.c.b16 %v1224, %v1221
      %v1258 = vpack.c.b16 %v1228, %v1225
      %v1259 = vpack.c.b16 %v1229, %v1226
      %v1260 = vpack.c.b16 %v1230, %v1227
      %v1261 = vpack.c.b16 %v1234, %v1231
      %v1262 = vpack.c.b16 %v1235, %v1232
      %v1263 = vpack.c.b16 %v1236, %v1233
      %v1264 = vpack.c.b16 %v1240, %v1237
      %v1265 = vpack.c.b16 %v1241, %v1238
      %v1266 = vpack.c.b16 %v1242, %v1239
      %1291 = vmatprep.subr.bf16.mxu0 %v1244
      %1292 = vmatpush1.bf16.msra.mxu0 %v1243
      %1293 = vmatprep.subr.bf16.mxu0 %v1247
      %1294 = vmatpush1.bf16.msra.mxu0 %v1246
      %1295 = vmatprep.subr.bf16.mxu0 %v1250
      %1296 = vmatpush1.bf16.msra.mxu0 %v1249
      %1297 = vmatprep.subr.bf16.mxu0 %v1253
      %1298 = vmatpush1.bf16.msra.mxu0 %v1252
      %1299 = vmatprep.subr.bf16.mxu0 %v1256
      %1300 = vmatpush1.bf16.msra.mxu0 %v1255
      %1301 = vmatprep.subr.bf16.mxu0 %v1259
      %1302 = vmatpush1.bf16.msra.mxu0 %v1258
      %1303 = vmatprep.subr.bf16.mxu0 %v1262
      %1304 = vmatpush1.bf16.msra.mxu0 %v1261
      %1305 = vmatprep.subr.bf16.mxu0 %v1265
      %1306 = vmatpush1.bf16.msra.mxu0 %v1264
      %1307 = vmatprep.subr.bf16.mxu0 0
      %1308 = vmatpush1.bf16.msra.mxu0 0
      %1309 = vmatprep.subr.bf16.mxu0 0
      %1310 = vmatpush1.bf16.msra.mxu0 0
      %1311 = vmatprep.subr.bf16.mxu0 0
      %1312 = vmatpush1.bf16.msra.mxu0 0
      %1313 = vmatprep.subr.bf16.mxu0 0
      %1314 = vmatpush1.bf16.msra.mxu0 0
      %1315 = vmatprep.subr.bf16.mxu0 0
      %1316 = vmatpush1.bf16.msra.mxu0 0
      %1317 = vmatprep.subr.bf16.mxu0 0
      %1318 = vmatpush1.bf16.msra.mxu0 0
      %1319 = vmatprep.subr.bf16.mxu0 0
      %1320 = vmatpush1.bf16.msra.mxu0 0
      %1321 = vmatprep.subr.bf16.mxu0 0
      %1322 = vmatpush1.bf16.msra.mxu0 0
      %1323 = vmatprep.mubr.bf16.mxu0 0
      %1324 = vmatmul.mubr.bf16.gmra.mrb[0].mxu0 %v1086
      %v1325 = vpop.f32.mrb[0].mxu0
      %v1326 = vadd.f32 %v1151, %v1325
      %v1327 = vpop.f32.mrb[0].mxu0
      %v1328 = vadd.f32 %v1155, %v1327
      %v1329 = vpop.f32.mrb[0].mxu0
      %v1330 = vadd.f32 %v1151, %v1329
      %v1331 = vpop.f32.mrb[0].mxu0
      %v1332 = vadd.f32 %v1155, %v1331
      %1333 = vdwg.mxu0
      %1334 = vmatprep.subr.bf16.mxu0 0
      %1335 = vmatpush1.bf16.msra.mxu0 %v1245
      %1336 = vmatprep.subr.bf16.mxu0 0
      %1337 = vmatpush1.bf16.msra.mxu0 %v1248
      %1338 = vmatprep.subr.bf16.mxu0 0
      %1339 = vmatpush1.bf16.msra.mxu0 %v1251
      %1340 = vmatprep.subr.bf16.mxu0 0
      %1341 = vmatpush1.bf16.msra.mxu0 %v1254
      %1342 = vmatprep.subr.bf16.mxu0 0
      %1343 = vmatpush1.bf16.msra.mxu0 %v1257
      %1344 = vmatprep.subr.bf16.mxu0 0
      %1345 = vmatpush1.bf16.msra.mxu0 %v1260
      %1346 = vmatprep.subr.bf16.mxu0 0
      %1347 = vmatpush1.bf16.msra.mxu0 %v1263
      %1348 = vmatprep.subr.bf16.mxu0 0
      %1349 = vmatpush1.bf16.msra.mxu0 %v1266
      %1350 = vmatprep.subr.bf16.mxu0 0
      %1351 = vmatpush1.bf16.msra.mxu0 0
      %1352 = vmatprep.subr.bf16.mxu0 0
      %1353 = vmatpush1.bf16.msra.mxu0 0
      %1354 = vmatprep.subr.bf16.mxu0 0
      %1355 = vmatpush1.bf16.msra.mxu0 0
      %1356 = vmatprep.subr.bf16.mxu0 0
      %1357 = vmatpush1.bf16.msra.mxu0 0
      %1358 = vmatprep.subr.bf16.mxu0 0
      %1359 = vmatpush1.bf16.msra.mxu0 0
      %1360 = vmatprep.subr.bf16.mxu0 0
      %1361 = vmatpush1.bf16.msra.mxu0 0
      %1362 = vmatprep.subr.bf16.mxu0 0
      %1363 = vmatpush1.bf16.msra.mxu0 0
      %1364 = vmatprep.subr.bf16.mxu0 0
      %1365 = vmatpush1.bf16.msra.mxu0 0
      %1366 = vmatprep.mubr.bf16.mxu0 0
      %1367 = vmatmul.mubr.bf16.gmra.mrb[0].mxu0 %v1086
      %v1368 = vpop.f32.mrb[0].mxu0
      %v1369 = vadd.f32 %v1159, %v1368
      %v1370 = vpop.f32.mrb[0].mxu0
      %v1371 = vpop.f32.mrb[0].mxu0
      %v1372 = vadd.f32 %v1159, %v1371
      %v1373 = vpop.f32.mrb[0].mxu0
      %1374 = vdwg.mxu0
      %v1375 = vpack.c.bf16 %v1326, %v1326
      %v1376 = vpack.c.bf16 %v1330, %v1330
      %v1377 = vpack.c.bf16 %v1328, %v1328
      %v1378 = vpack.c.bf16 %v1332, %v1332
      %v1379 = vpack.c.bf16 %v1369, %v1369
      %v1380 = vpack.c.bf16 %v1372, %v1372
      %v1381 = vlaneseq
      %v1382 = vshrl.u32 %v1381, 7
      %v1383 = vsub.s32 0, %v1382
      %v1384 = vrot.slane %v1105, %v1383
      %v1385 = vlaneseq
      %v1386 = vshrl.u32 %v1385, 7
      %v1387 = vsub.s32 0, %v1386
      %v1388 = vrot.slane %v1112, %v1387
      %1391 = vmatprep.subr.bf16.mxu0 0
      %1392 = vmatpush1.bf16.xpose.msra.mxu0 %v1377
      %1393 = vmatprep.subr.bf16.mxu0 0
      %1394 = vmatpush1.bf16.xpose.msra.mxu0 0
      %1395 = vmatprep.subr.bf16.mxu0 0
      %1396 = vmatpush1.bf16.xpose.msra.mxu0 0
      %1397 = vmatprep.subr.bf16.mxu0 0
      %1398 = vmatpush1.bf16.xpose.msra.mxu0 0
      %1399 = vmatprep.subr.bf16.mxu0 0
      %1400 = vmatpush1.bf16.xpose.msra.mxu0 0
      %1401 = vmatprep.subr.bf16.mxu0 0
      %1402 = vmatpush1.bf16.xpose.msra.mxu0 0
      %1403 = vmatprep.subr.bf16.mxu0 0
      %1404 = vmatpush1.bf16.xpose.msra.mxu0 0
      %1405 = vmatprep.subr.bf16.mxu0 0
      %1406 = vmatpush1.bf16.xpose.msra.mxu0 0
      %1407 = vmatprep.subr.bf16.mxu0 0
      %1408 = vmatpush1.bf16.xpose.msra.mxu0 0
      %1409 = vmatprep.subr.bf16.mxu0 0
      %1410 = vmatpush1.bf16.xpose.msra.mxu0 0
      %1411 = vmatprep.subr.bf16.mxu0 0
      %1412 = vmatpush1.bf16.xpose.msra.mxu0 0
      %1413 = vmatprep.subr.bf16.mxu0 0
      %1414 = vmatpush1.bf16.xpose.msra.mxu0 0
      %1415 = vmatprep.subr.bf16.mxu0 0
      %1416 = vmatpush1.bf16.xpose.msra.mxu0 0
      %1417 = vmatprep.subr.bf16.mxu0 0
      %1418 = vmatpush1.bf16.xpose.msra.mxu0 0
      %1419 = vmatprep.subr.bf16.mxu0 0
      %1420 = vmatpush1.bf16.xpose.msra.mxu0 0
      %1421 = vmatprep.subr.bf16.mxu0 0
      %1422 = vmatpush1.bf16.xpose.msra.mxu0 0
      %1423 = vmatprep.mubr.bf16.mxu0 0
      %1424 = vmatmul.mubr.bf16.gmra.mrb[0].mxu0 %v1375
      %v1425 = vpop.f32.mrb[0].mxu0
      %v1426 = vadd.f32 %v1384, %v1425
      %v1427 = vpop.f32.mrb[0].mxu0
      %v1428 = vpop.f32.mrb[0].mxu0
      %v1429 = vpop.f32.mrb[0].mxu0
      %1430 = vdwg.mxu0
      %1431 = vmatprep.subr.bf16.mxu0 0
      %1432 = vmatpush1.bf16.xpose.msra.mxu0 %v1378
      %1433 = vmatprep.subr.bf16.mxu0 0
      %1434 = vmatpush1.bf16.xpose.msra.mxu0 0
      %1435 = vmatprep.subr.bf16.mxu0 0
      %1436 = vmatpush1.bf16.xpose.msra.mxu0 0
      %1437 = vmatprep.subr.bf16.mxu0 0
      %1438 = vmatpush1.bf16.xpose.msra.mxu0 0
      %1439 = vmatprep.subr.bf16.mxu0 0
      %1440 = vmatpush1.bf16.xpose.msra.mxu0 0
      %1441 = vmatprep.subr.bf16.mxu0 0
      %1442 = vmatpush1.bf16.xpose.msra.mxu0 0
      %1443 = vmatprep.subr.bf16.mxu0 0
      %1444 = vmatpush1.bf16.xpose.msra.mxu0 0
      %1445 = vmatprep.subr.bf16.mxu0 0
      %1446 = vmatpush1.bf16.xpose.msra.mxu0 0
      %1447 = vmatprep.subr.bf16.mxu0 0
      %1448 = vmatpush1.bf16.xpose.msra.mxu0 0
      %1449 = vmatprep.subr.bf16.mxu0 0
      %1450 = vmatpush1.bf16.xpose.msra.mxu0 0
      %1451 = vmatprep.subr.bf16.mxu0 0
      %1452 = vmatpush1.bf16.xpose.msra.mxu0 0
      %1453 = vmatprep.subr.bf16.mxu0 0
      %1454 = vmatpush1.bf16.xpose.msra.mxu0 0
      %1455 = vmatprep.subr.bf16.mxu0 0
      %1456 = vmatpush1.bf16.xpose.msra.mxu0 0
      %1457 = vmatprep.subr.bf16.mxu0 0
      %1458 = vmatpush1.bf16.xpose.msra.mxu0 0
      %1459 = vmatprep.subr.bf16.mxu0 0
      %1460 = vmatpush1.bf16.xpose.msra.mxu0 0
      %1461 = vmatprep.subr.bf16.mxu0 0
      %1462 = vmatpush1.bf16.xpose.msra.mxu0 0
      %1463 = vmatprep.mubr.bf16.mxu0 0
      %1464 = vmatmul.mubr.bf16.gmra.mrb[0].mxu0 %v1376
      %v1465 = vpop.f32.mrb[0].mxu0
      %v1466 = vadd.f32 %v1388, %v1465
      %v1467 = vpop.f32.mrb[0].mxu0
      %v1468 = vpop.f32.mrb[0].mxu0
      %v1469 = vpop.f32.mrb[0].mxu0
      %1470 = vdwg.mxu0
      %vm1471 = vcmask 64512
      %v1472 = vsel %vm1471, %v1426, -inf
      %1473 = vmax.xlane.f32.xlu0 %v1472
      %v1474 = vpop.xlane.xlu0 %1473
      %v1475 = vsel %vm1471, %v1466, -inf
      %1476 = vmax.xlane.f32.xlu0 %v1475
      %v1477 = vpop.xlane.xlu0 %1476
      %v1478 = vsub.f32 %v1426, %v1474
      %v1479 = vsub.f32 %v1466, %v1477
      %v1480 = vmul.f32 %v1478, 1.442695
      %v1481 = vpow.pop %v1480
      %v1482 = vmul.f32 %v1479, 1.442695
      %v1483 = vpow.pop %v1482
      %v1484 = vsel %vm1471, %v1481, 0.0
      %1485 = vadd.xlane.f32.xlu0 %v1484
      %v1486 = vpop.xlane.xlu0 %1485
      %v1487 = vsel %vm1471, %v1483, 0.0
      %1488 = vadd.xlane.f32.xlu0 %v1487
      %v1489 = vpop.xlane.xlu0 %1488
      %v1490 = vrcp.pop %v1486
      %v1491 = vmul.f32 %v1481, %v1490
      %v1492 = vrcp.pop %v1489
      %v1493 = vmul.f32 %v1483, %v1492
      %v1494 = vpack.c.bf16 %v1491, %v1491
      %v1495 = vpack.c.bf16 %v1493, %v1493
      %v1497 = vsel %vm1471, %v1494, 0
      %vm1499 = vcmask 1043456
      %v1501 = vsel %vm1499, %v1379, 0
      %1503 = vmatprep.subr.bf16.mxu0 0
      %1504 = vmatpush1.bf16.msra.mxu0 %v1501
      %1505 = vmatprep.subr.bf16.mxu0 0
      %1506 = vmatpush1.bf16.msra.mxu0 0
      %1507 = vmatprep.subr.bf16.mxu0 0
      %1508 = vmatpush1.bf16.msra.mxu0 0
      %1509 = vmatprep.subr.bf16.mxu0 0
      %1510 = vmatpush1.bf16.msra.mxu0 0
      %1511 = vmatprep.subr.bf16.mxu0 0
      %1512 = vmatpush1.bf16.msra.mxu0 0
      %1513 = vmatprep.subr.bf16.mxu0 0
      %1514 = vmatpush1.bf16.msra.mxu0 0
      %1515 = vmatprep.subr.bf16.mxu0 0
      %1516 = vmatpush1.bf16.msra.mxu0 0
      %1517 = vmatprep.subr.bf16.mxu0 0
      %1518 = vmatpush1.bf16.msra.mxu0 0
      %1519 = vmatprep.subr.bf16.mxu0 0
      %1520 = vmatpush1.bf16.msra.mxu0 0
      %1521 = vmatprep.subr.bf16.mxu0 0
      %1522 = vmatpush1.bf16.msra.mxu0 0
      %1523 = vmatprep.subr.bf16.mxu0 0
      %1524 = vmatpush1.bf16.msra.mxu0 0
      %1525 = vmatprep.subr.bf16.mxu0 0
      %1526 = vmatpush1.bf16.msra.mxu0 0
      %1527 = vmatprep.subr.bf16.mxu0 0
      %1528 = vmatpush1.bf16.msra.mxu0 0
      %1529 = vmatprep.subr.bf16.mxu0 0
      %1530 = vmatpush1.bf16.msra.mxu0 0
      %1531 = vmatprep.subr.bf16.mxu0 0
      %1532 = vmatpush1.bf16.msra.mxu0 0
      %1533 = vmatprep.subr.bf16.mxu0 0
      %1534 = vmatpush1.bf16.msra.mxu0 0
      %1535 = vmatprep.mubr.bf16.mxu0 0
      %1536 = vmatmul.mubr.bf16.gmra.mrb[0].mxu0 %v1497
      %v1537 = vpop.f32.mrb[0].mxu0
      %v1538 = vadd.f32 0.0, %v1537
      %v1539 = vpop.f32.mrb[0].mxu0
      %v1540 = vpop.f32.mrb[0].mxu0
      %v1541 = vpop.f32.mrb[0].mxu0
      %1542 = vdwg.mxu0
      %v1544 = vsel %vm1471, %v1495, 0
      %v1547 = vsel %vm1499, %v1380, 0
      %1549 = vmatprep.subr.bf16.mxu0 0
      %1550 = vmatpush1.bf16.msra.mxu0 %v1547
      %1551 = vmatprep.subr.bf16.mxu0 0
      %1552 = vmatpush1.bf16.msra.mxu0 0
      %1553 = vmatprep.subr.bf16.mxu0 0
      %1554 = vmatpush1.bf16.msra.mxu0 0
      %1555 = vmatprep.subr.bf16.mxu0 0
      %1556 = vmatpush1.bf16.msra.mxu0 0
      %1557 = vmatprep.subr.bf16.mxu0 0
      %1558 = vmatpush1.bf16.msra.mxu0 0
      %1559 = vmatprep.subr.bf16.mxu0 0
      %1560 = vmatpush1.bf16.msra.mxu0 0
      %1561 = vmatprep.subr.bf16.mxu0 0
      %1562 = vmatpush1.bf16.msra.mxu0 0
      %1563 = vmatprep.subr.bf16.mxu0 0
      %1564 = vmatpush1.bf16.msra.mxu0 0
      %1565 = vmatprep.subr.bf16.mxu0 0
      %1566 = vmatpush1.bf16.msra.mxu0 0
      %1567 = vmatprep.subr.bf16.mxu0 0
      %1568 = vmatpush1.bf16.msra.mxu0 0
      %1569 = vmatprep.subr.bf16.mxu0 0
      %1570 = vmatpush1.bf16.msra.mxu0 0
      %1571 = vmatprep.subr.bf16.mxu0 0
      %1572 = vmatpush1.bf16.msra.mxu0 0
      %1573 = vmatprep.subr.bf16.mxu0 0
      %1574 = vmatpush1.bf16.msra.mxu0 0
      %1575 = vmatprep.subr.bf16.mxu0 0
      %1576 = vmatpush1.bf16.msra.mxu0 0
      %1577 = vmatprep.subr.bf16.mxu0 0
      %1578 = vmatpush1.bf16.msra.mxu0 0
      %1579 = vmatprep.subr.bf16.mxu0 0
      %1580 = vmatpush1.bf16.msra.mxu0 0
      %1581 = vmatprep.mubr.bf16.mxu0 0
      %1582 = vmatmul.mubr.bf16.gmra.mrb[0].mxu0 %v1544
      %v1583 = vpop.f32.mrb[0].mxu0
      %v1584 = vadd.f32 0.0, %v1583
      %v1585 = vpop.f32.mrb[0].mxu0
      %v1586 = vpop.f32.mrb[0].mxu0
      %v1587 = vpop.f32.mrb[0].mxu0
      %1588 = vdwg.mxu0
      %v1589 = vpack.c.bf16 %v1584, %v1538
      %v1590 = vld [vmem:[%s948] sm:$0xf]
      %v1591 = vld [vmem:[%s948 + $0x4] sm:$0xf]
      %v1592 = vld [vmem:[%s948 + $0x8] sm:$0xf]
      %v1593 = vld [vmem:[%s948 + $0xc] sm:$0xf]
      %v1594 = vld [vmem:[%s948 + $0x10] sm:$0xf]
      %v1595 = vld [vmem:[%s948 + $0x14] sm:$0xf]
      %v1596 = vld [vmem:[%s948 + $0x18] sm:$0xf]
      %v1597 = vld [vmem:[%s948 + $0x1c] sm:$0xf]
      %v1598 = vld [vmem:[%s948 + $0x20] sm:$0xf]
      %v1599 = vld [vmem:[%s948 + $0x24] sm:$0xf]
      %v1600 = vld [vmem:[%s948 + $0x28] sm:$0xf]
      %v1601 = vld [vmem:[%s948 + $0x2c] sm:$0xf]
      %v1602 = vld [vmem:[%s948 + $0x30] sm:$0xf]
      %v1603 = vld [vmem:[%s948 + $0x34] sm:$0xf]
      %v1604 = vld [vmem:[%s948 + $0x38] sm:$0xf]
      %v1605 = vld [vmem:[%s948 + $0x3c] sm:$0xf]
      %v1622 = vunpack.c.l.b16 %v1590
      %v1623 = vunpack.c.l.b16 %v1591
      %v1624 = vunpack.c.l.b16 %v1592
      %v1625 = vunpack.c.l.b16 %v1593
      %v1626 = vunpack.c.l.b16 %v1594
      %v1627 = vunpack.c.l.b16 %v1595
      %v1628 = vunpack.c.l.b16 %v1596
      %v1629 = vunpack.c.l.b16 %v1597
      %v1630 = vunpack.c.l.b16 %v1598
      %v1631 = vunpack.c.l.b16 %v1599
      %v1632 = vunpack.c.l.b16 %v1600
      %v1633 = vunpack.c.l.b16 %v1601
      %v1634 = vunpack.c.l.b16 %v1602
      %v1635 = vunpack.c.l.b16 %v1603
      %v1636 = vunpack.c.l.b16 %v1604
      %v1637 = vunpack.c.l.b16 %v1605
      %v1638 = vpack.c.b16 %v1623, %v1622
      %v1639 = vpack.c.b16 %v1625, %v1624
      %v1640 = vpack.c.b16 %v1627, %v1626
      %v1641 = vpack.c.b16 %v1629, %v1628
      %v1642 = vpack.c.b16 %v1631, %v1630
      %v1643 = vpack.c.b16 %v1633, %v1632
      %v1644 = vpack.c.b16 %v1635, %v1634
      %v1645 = vpack.c.b16 %v1637, %v1636
      %1654 = vmatprep.subr.bf16.mxu0 0
      %1655 = vmatpush1.bf16.msra.mxu0 %v1638
      %1656 = vmatprep.subr.bf16.mxu0 0
      %1657 = vmatpush1.bf16.msra.mxu0 %v1639
      %1658 = vmatprep.subr.bf16.mxu0 0
      %1659 = vmatpush1.bf16.msra.mxu0 %v1640
      %1660 = vmatprep.subr.bf16.mxu0 0
      %1661 = vmatpush1.bf16.msra.mxu0 %v1641
      %1662 = vmatprep.subr.bf16.mxu0 0
      %1663 = vmatpush1.bf16.msra.mxu0 %v1642
      %1664 = vmatprep.subr.bf16.mxu0 0
      %1665 = vmatpush1.bf16.msra.mxu0 %v1643
      %1666 = vmatprep.subr.bf16.mxu0 0
      %1667 = vmatpush1.bf16.msra.mxu0 %v1644
      %1668 = vmatprep.subr.bf16.mxu0 0
      %1669 = vmatpush1.bf16.msra.mxu0 %v1645
      %1670 = vmatprep.subr.bf16.mxu0 0
      %1671 = vmatpush1.bf16.msra.mxu0 0
      %1672 = vmatprep.subr.bf16.mxu0 0
      %1673 = vmatpush1.bf16.msra.mxu0 0
      %1674 = vmatprep.subr.bf16.mxu0 0
      %1675 = vmatpush1.bf16.msra.mxu0 0
      %1676 = vmatprep.subr.bf16.mxu0 0
      %1677 = vmatpush1.bf16.msra.mxu0 0
      %1678 = vmatprep.subr.bf16.mxu0 0
      %1679 = vmatpush1.bf16.msra.mxu0 0
      %1680 = vmatprep.subr.bf16.mxu0 0
      %1681 = vmatpush1.bf16.msra.mxu0 0
      %1682 = vmatprep.subr.bf16.mxu0 0
      %1683 = vmatpush1.bf16.msra.mxu0 0
      %1684 = vmatprep.subr.bf16.mxu0 0
      %1685 = vmatpush1.bf16.msra.mxu0 0
      %1686 = vmatprep.mubr.bf16.mxu0 0
      %1687 = vmatmul.mubr.bf16.gmra.mrb[0].mxu0 %v1589
      %v1688 = vpop.f32.mrb[0].mxu0
      %v1689 = vadd.f32 0.0, %v1688
      %v1690 = vpop.f32.mrb[0].mxu0
      %v1691 = vpop.f32.mrb[0].mxu0
      %v1692 = vadd.f32 0.0, %v1691
      %v1693 = vpop.f32.mrb[0].mxu0
      %1694 = vdwg.mxu0
      %v1696 = vlaneseq
      %v1697 = vshrl.u32 %v1696, 7
      %v1698 = vsub.s32 0, %v1697
      %v1699 = vrot.slane %v1113, %v1698
      %v1701 = vadd.f32 %v1699, %v1689
      %v1702 = vadd.f32 %v1699, %v1692
      %s1703 = scalar_lea.vmem %s931, 192
      %v1704 = vld [vmem:[%s1703] sm:$0xff]
      %v1705 = vld [vmem:[%s1703 + $0x8] sm:$0xf]
      %v1706 = vld [vmem:[%s1703 + $0xc] sm:$0xff]
      %v1707 = vld [vmem:[%s1703 + $0x14] sm:$0xf]
      %v1708 = vld [vmem:[%s1703 + $0x18] sm:$0xff]
      %v1709 = vld [vmem:[%s1703 + $0x20] sm:$0xf]
      %v1710 = vld [vmem:[%s1703 + $0x24] sm:$0xff]
      %v1711 = vld [vmem:[%s1703 + $0x2c] sm:$0xf]
      %v1712 = vld [vmem:[%s1703 + $0x30] sm:$0xff]
      %v1713 = vld [vmem:[%s1703 + $0x38] sm:$0xf]
      %v1714 = vld [vmem:[%s1703 + $0x3c] sm:$0xff]
      %v1715 = vld [vmem:[%s1703 + $0x44] sm:$0xf]
      %v1716 = vld [vmem:[%s1703 + $0x48] sm:$0xff]
      %v1717 = vld [vmem:[%s1703 + $0x50] sm:$0xf]
      %v1718 = vld [vmem:[%s1703 + $0x54] sm:$0xff]
      %v1719 = vld [vmem:[%s1703 + $0x5c] sm:$0xf]
      %v1720 = vld [vmem:[%s1703 + $0x60] sm:$0xff]
      %v1721 = vld [vmem:[%s1703 + $0x68] sm:$0xf]
      %v1722 = vld [vmem:[%s1703 + $0x6c] sm:$0xff]
      %v1723 = vld [vmem:[%s1703 + $0x74] sm:$0xf]
      %v1724 = vld [vmem:[%s1703 + $0x78] sm:$0xff]
      %v1725 = vld [vmem:[%s1703 + $0x80] sm:$0xf]
      %v1726 = vld [vmem:[%s1703 + $0x84] sm:$0xff]
      %v1727 = vld [vmem:[%s1703 + $0x8c] sm:$0xf]
      %v1728 = vld [vmem:[%s1703 + $0x90] sm:$0xff]
      %v1729 = vld [vmem:[%s1703 + $0x98] sm:$0xf]
      %v1730 = vld [vmem:[%s1703 + $0x9c] sm:$0xff]
      %v1731 = vld [vmem:[%s1703 + $0xa4] sm:$0xf]
      %v1732 = vld [vmem:[%s1703 + $0xa8] sm:$0xff]
      %v1733 = vld [vmem:[%s1703 + $0xb0] sm:$0xf]
      %v1734 = vld [vmem:[%s1703 + $0xb4] sm:$0xff]
      %v1735 = vld [vmem:[%s1703 + $0xbc] sm:$0xf]
      %s1736 = scalar_lea.vmem %s939, 3
      %v1737 = vld [vmem:[%s1736] sm:$0x7]
      %v1739 = vlaneseq
      %v1740 = vshrl.u32 %v1739, 7
      %v1741 = vsub.s32 0, %v1740
      %v1742 = vrot.slane %v1737, %v1741
      %v1743 = vlaneseq
      %v1744 = vshrl.u32 %v1743, 7
      %v1745 = vsub.s32 1, %v1744
      %v1746 = vrot.slane %v1737, %v1745
      %v1747 = vlaneseq
      %v1748 = vshrl.u32 %v1747, 7
      %v1749 = vsub.s32 2, %v1748
      %v1750 = vrot.slane %v1737, %v1749
      %v1786 = vunpack.c.l.b16 %v1704
      %v1787 = vunpack.c.h.b16 %v1704
      %v1788 = vunpack.c.l.b16 %v1705
      %v1789 = vunpack.c.l.b16 %v1706
      %v1790 = vunpack.c.h.b16 %v1706
      %v1791 = vunpack.c.l.b16 %v1707
      %v1792 = vunpack.c.l.b16 %v1708
      %v1793 = vunpack.c.h.b16 %v1708
      %v1794 = vunpack.c.l.b16 %v1709
      %v1795 = vunpack.c.l.b16 %v1710
      %v1796 = vunpack.c.h.b16 %v1710
      %v1797 = vunpack.c.l.b16 %v1711
      %v1798 = vunpack.c.l.b16 %v1712
      %v1799 = vunpack.c.h.b16 %v1712
      %v1800 = vunpack.c.l.b16 %v1713
      %v1801 = vunpack.c.l.b16 %v1714
      %v1802 = vunpack.c.h.b16 %v1714
      %v1803 = vunpack.c.l.b16 %v1715
      %v1804 = vunpack.c.l.b16 %v1716
      %v1805 = vunpack.c.h.b16 %v1716
      %v1806 = vunpack.c.l.b16 %v1717
      %v1807 = vunpack.c.l.b16 %v1718
      %v1808 = vunpack.c.h.b16 %v1718
      %v1809 = vunpack.c.l.b16 %v1719
      %v1810 = vunpack.c.l.b16 %v1720
      %v1811 = vunpack.c.h.b16 %v1720
      %v1812 = vunpack.c.l.b16 %v1721
      %v1813 = vunpack.c.l.b16 %v1722
      %v1814 = vunpack.c.h.b16 %v1722
      %v1815 = vunpack.c.l.b16 %v1723
      %v1816 = vunpack.c.l.b16 %v1724
      %v1817 = vunpack.c.h.b16 %v1724
      %v1818 = vunpack.c.l.b16 %v1725
      %v1819 = vunpack.c.l.b16 %v1726
      %v1820 = vunpack.c.h.b16 %v1726
      %v1821 = vunpack.c.l.b16 %v1727
      %v1822 = vunpack.c.l.b16 %v1728
      %v1823 = vunpack.c.h.b16 %v1728
      %v1824 = vunpack.c.l.b16 %v1729
      %v1825 = vunpack.c.l.b16 %v1730
      %v1826 = vunpack.c.h.b16 %v1730
      %v1827 = vunpack.c.l.b16 %v1731
      %v1828 = vunpack.c.l.b16 %v1732
      %v1829 = vunpack.c.h.b16 %v1732
      %v1830 = vunpack.c.l.b16 %v1733
      %v1831 = vunpack.c.l.b16 %v1734
      %v1832 = vunpack.c.h.b16 %v1734
      %v1833 = vunpack.c.l.b16 %v1735
      %v1834 = vpack.c.b16 %v1789, %v1786
      %v1835 = vpack.c.b16 %v1790, %v1787
      %v1836 = vpack.c.b16 %v1791, %v1788
      %v1837 = vpack.c.b16 %v1795, %v1792
      %v1838 = vpack.c.b16 %v1796, %v1793
      %v1839 = vpack.c.b16 %v1797, %v1794
      %v1840 = vpack.c.b16 %v1801, %v1798
      %v1841 = vpack.c.b16 %v1802, %v1799
      %v1842 = vpack.c.b16 %v1803, %v1800
      %v1843 = vpack.c.b16 %v1807, %v1804
      %v1844 = vpack.c.b16 %v1808, %v1805
      %v1845 = vpack.c.b16 %v1809, %v1806
      %v1846 = vpack.c.b16 %v1813, %v1810
      %v1847 = vpack.c.b16 %v1814, %v1811
      %v1848 = vpack.c.b16 %v1815, %v1812
      %v1849 = vpack.c.b16 %v1819, %v1816
      %v1850 = vpack.c.b16 %v1820, %v1817
      %v1851 = vpack.c.b16 %v1821, %v1818
      %v1852 = vpack.c.b16 %v1825, %v1822
      %v1853 = vpack.c.b16 %v1826, %v1823
      %v1854 = vpack.c.b16 %v1827, %v1824
      %v1855 = vpack.c.b16 %v1831, %v1828
      %v1856 = vpack.c.b16 %v1832, %v1829
      %v1857 = vpack.c.b16 %v1833, %v1830
      %1882 = vmatprep.subr.bf16.mxu0 %v1835
      %1883 = vmatpush1.bf16.msra.mxu0 %v1834
      %1884 = vmatprep.subr.bf16.mxu0 %v1838
      %1885 = vmatpush1.bf16.msra.mxu0 %v1837
      %1886 = vmatprep.subr.bf16.mxu0 %v1841
      %1887 = vmatpush1.bf16.msra.mxu0 %v1840
      %1888 = vmatprep.subr.bf16.mxu0 %v1844
      %1889 = vmatpush1.bf16.msra.mxu0 %v1843
      %1890 = vmatprep.subr.bf16.mxu0 %v1847
      %1891 = vmatpush1.bf16.msra.mxu0 %v1846
      %1892 = vmatprep.subr.bf16.mxu0 %v1850
      %1893 = vmatpush1.bf16.msra.mxu0 %v1849
      %1894 = vmatprep.subr.bf16.mxu0 %v1853
      %1895 = vmatpush1.bf16.msra.mxu0 %v1852
      %1896 = vmatprep.subr.bf16.mxu0 %v1856
      %1897 = vmatpush1.bf16.msra.mxu0 %v1855
      %1898 = vmatprep.subr.bf16.mxu0 0
      %1899 = vmatpush1.bf16.msra.mxu0 0
      %1900 = vmatprep.subr.bf16.mxu0 0
      %1901 = vmatpush1.bf16.msra.mxu0 0
      %1902 = vmatprep.subr.bf16.mxu0 0
      %1903 = vmatpush1.bf16.msra.mxu0 0
      %1904 = vmatprep.subr.bf16.mxu0 0
      %1905 = vmatpush1.bf16.msra.mxu0 0
      %1906 = vmatprep.subr.bf16.mxu0 0
      %1907 = vmatpush1.bf16.msra.mxu0 0
      %1908 = vmatprep.subr.bf16.mxu0 0
      %1909 = vmatpush1.bf16.msra.mxu0 0
      %1910 = vmatprep.subr.bf16.mxu0 0
      %1911 = vmatpush1.bf16.msra.mxu0 0
      %1912 = vmatprep.subr.bf16.mxu0 0
      %1913 = vmatpush1.bf16.msra.mxu0 0
      %1914 = vmatprep.mubr.bf16.mxu0 0
      %1915 = vmatmul.mubr.bf16.gmra.mrb[0].mxu0 %v1086
      %v1916 = vpop.f32.mrb[0].mxu0
      %v1917 = vadd.f32 %v1742, %v1916
      %v1918 = vpop.f32.mrb[0].mxu0
      %v1919 = vadd.f32 %v1746, %v1918
      %v1920 = vpop.f32.mrb[0].mxu0
      %v1921 = vadd.f32 %v1742, %v1920
      %v1922 = vpop.f32.mrb[0].mxu0
      %v1923 = vadd.f32 %v1746, %v1922
      %1924 = vdwg.mxu0
      %1925 = vmatprep.subr.bf16.mxu0 0
      %1926 = vmatpush1.bf16.msra.mxu0 %v1836
      %1927 = vmatprep.subr.bf16.mxu0 0
      %1928 = vmatpush1.bf16.msra.mxu0 %v1839
      %1929 = vmatprep.subr.bf16.mxu0 0
      %1930 = vmatpush1.bf16.msra.mxu0 %v1842
      %1931 = vmatprep.subr.bf16.mxu0 0
      %1932 = vmatpush1.bf16.msra.mxu0 %v1845
      %1933 = vmatprep.subr.bf16.mxu0 0
      %1934 = vmatpush1.bf16.msra.mxu0 %v1848
      %1935 = vmatprep.subr.bf16.mxu0 0
      %1936 = vmatpush1.bf16.msra.mxu0 %v1851
      %1937 = vmatprep.subr.bf16.mxu0 0
      %1938 = vmatpush1.bf16.msra.mxu0 %v1854
      %1939 = vmatprep.subr.bf16.mxu0 0
      %1940 = vmatpush1.bf16.msra.mxu0 %v1857
      %1941 = vmatprep.subr.bf16.mxu0 0
      %1942 = vmatpush1.bf16.msra.mxu0 0
      %1943 = vmatprep.subr.bf16.mxu0 0
      %1944 = vmatpush1.bf16.msra.mxu0 0
      %1945 = vmatprep.subr.bf16.mxu0 0
      %1946 = vmatpush1.bf16.msra.mxu0 0
      %1947 = vmatprep.subr.bf16.mxu0 0
      %1948 = vmatpush1.bf16.msra.mxu0 0
      %1949 = vmatprep.subr.bf16.mxu0 0
      %1950 = vmatpush1.bf16.msra.mxu0 0
      %1951 = vmatprep.subr.bf16.mxu0 0
      %1952 = vmatpush1.bf16.msra.mxu0 0
      %1953 = vmatprep.subr.bf16.mxu0 0
      %1954 = vmatpush1.bf16.msra.mxu0 0
      %1955 = vmatprep.subr.bf16.mxu0 0
      %1956 = vmatpush1.bf16.msra.mxu0 0
      %1957 = vmatprep.mubr.bf16.mxu0 0
      %1958 = vmatmul.mubr.bf16.gmra.mrb[0].mxu0 %v1086
      %v1959 = vpop.f32.mrb[0].mxu0
      %v1960 = vadd.f32 %v1750, %v1959
      %v1961 = vpop.f32.mrb[0].mxu0
      %v1962 = vpop.f32.mrb[0].mxu0
      %v1963 = vadd.f32 %v1750, %v1962
      %v1964 = vpop.f32.mrb[0].mxu0
      %1965 = vdwg.mxu0
      %v1966 = vpack.c.bf16 %v1917, %v1917
      %v1967 = vpack.c.bf16 %v1921, %v1921
      %v1968 = vpack.c.bf16 %v1919, %v1919
      %v1969 = vpack.c.bf16 %v1923, %v1923
      %v1970 = vpack.c.bf16 %v1960, %v1960
      %v1971 = vpack.c.bf16 %v1963, %v1963
      %1972 = vmatprep.subr.bf16.mxu0 0
      %1973 = vmatpush1.bf16.xpose.msra.mxu0 %v1968
      %1974 = vmatprep.subr.bf16.mxu0 0
      %1975 = vmatpush1.bf16.xpose.msra.mxu0 0
      %1976 = vmatprep.subr.bf16.mxu0 0
      %1977 = vmatpush1.bf16.xpose.msra.mxu0 0
      %1978 = vmatprep.subr.bf16.mxu0 0
      %1979 = vmatpush1.bf16.xpose.msra.mxu0 0
      %1980 = vmatprep.subr.bf16.mxu0 0
      %1981 = vmatpush1.bf16.xpose.msra.mxu0 0
      %1982 = vmatprep.subr.bf16.mxu0 0
      %1983 = vmatpush1.bf16.xpose.msra.mxu0 0
      %1984 = vmatprep.subr.bf16.mxu0 0
      %1985 = vmatpush1.bf16.xpose.msra.mxu0 0
      %1986 = vmatprep.subr.bf16.mxu0 0
      %1987 = vmatpush1.bf16.xpose.msra.mxu0 0
      %1988 = vmatprep.subr.bf16.mxu0 0
      %1989 = vmatpush1.bf16.xpose.msra.mxu0 0
      %1990 = vmatprep.subr.bf16.mxu0 0
      %1991 = vmatpush1.bf16.xpose.msra.mxu0 0
      %1992 = vmatprep.subr.bf16.mxu0 0
      %1993 = vmatpush1.bf16.xpose.msra.mxu0 0
      %1994 = vmatprep.subr.bf16.mxu0 0
      %1995 = vmatpush1.bf16.xpose.msra.mxu0 0
      %1996 = vmatprep.subr.bf16.mxu0 0
      %1997 = vmatpush1.bf16.xpose.msra.mxu0 0
      %1998 = vmatprep.subr.bf16.mxu0 0
      %1999 = vmatpush1.bf16.xpose.msra.mxu0 0
      %2000 = vmatprep.subr.bf16.mxu0 0
      %2001 = vmatpush1.bf16.xpose.msra.mxu0 0
      %2002 = vmatprep.subr.bf16.mxu0 0
      %2003 = vmatpush1.bf16.xpose.msra.mxu0 0
      %2004 = vmatprep.mubr.bf16.mxu0 0
      %2005 = vmatmul.mubr.bf16.gmra.mrb[0].mxu0 %v1966
      %v2006 = vpop.f32.mrb[0].mxu0
      %v2007 = vadd.f32 %v1384, %v2006
      %v2008 = vpop.f32.mrb[0].mxu0
      %v2009 = vpop.f32.mrb[0].mxu0
      %v2010 = vpop.f32.mrb[0].mxu0
      %2011 = vdwg.mxu0
      %2012 = vmatprep.subr.bf16.mxu0 0
      %2013 = vmatpush1.bf16.xpose.msra.mxu0 %v1969
      %2014 = vmatprep.subr.bf16.mxu0 0
      %2015 = vmatpush1.bf16.xpose.msra.mxu0 0
      %2016 = vmatprep.subr.bf16.mxu0 0
      %2017 = vmatpush1.bf16.xpose.msra.mxu0 0
      %2018 = vmatprep.subr.bf16.mxu0 0
      %2019 = vmatpush1.bf16.xpose.msra.mxu0 0
      %2020 = vmatprep.subr.bf16.mxu0 0
      %2021 = vmatpush1.bf16.xpose.msra.mxu0 0
      %2022 = vmatprep.subr.bf16.mxu0 0
      %2023 = vmatpush1.bf16.xpose.msra.mxu0 0
      %2024 = vmatprep.subr.bf16.mxu0 0
      %2025 = vmatpush1.bf16.xpose.msra.mxu0 0
      %2026 = vmatprep.subr.bf16.mxu0 0
      %2027 = vmatpush1.bf16.xpose.msra.mxu0 0
      %2028 = vmatprep.subr.bf16.mxu0 0
      %2029 = vmatpush1.bf16.xpose.msra.mxu0 0
      %2030 = vmatprep.subr.bf16.mxu0 0
      %2031 = vmatpush1.bf16.xpose.msra.mxu0 0
      %2032 = vmatprep.subr.bf16.mxu0 0
      %2033 = vmatpush1.bf16.xpose.msra.mxu0 0
      %2034 = vmatprep.subr.bf16.mxu0 0
      %2035 = vmatpush1.bf16.xpose.msra.mxu0 0
      %2036 = vmatprep.subr.bf16.mxu0 0
      %2037 = vmatpush1.bf16.xpose.msra.mxu0 0
      %2038 = vmatprep.subr.bf16.mxu0 0
      %2039 = vmatpush1.bf16.xpose.msra.mxu0 0
      %2040 = vmatprep.subr.bf16.mxu0 0
      %2041 = vmatpush1.bf16.xpose.msra.mxu0 0
      %2042 = vmatprep.subr.bf16.mxu0 0
      %2043 = vmatpush1.bf16.xpose.msra.mxu0 0
      %2044 = vmatprep.mubr.bf16.mxu0 0
      %2045 = vmatmul.mubr.bf16.gmra.mrb[0].mxu0 %v1967
      %v2046 = vpop.f32.mrb[0].mxu0
      %v2047 = vadd.f32 %v1388, %v2046
      %v2048 = vpop.f32.mrb[0].mxu0
      %v2049 = vpop.f32.mrb[0].mxu0
      %v2050 = vpop.f32.mrb[0].mxu0
      %2051 = vdwg.mxu0
      %v2052 = vsel %vm1471, %v2007, -inf
      %2053 = vmax.xlane.f32.xlu0 %v2052
      %v2054 = vpop.xlane.xlu0 %2053
      %v2055 = vsel %vm1471, %v2047, -inf
      %2056 = vmax.xlane.f32.xlu0 %v2055
      %v2057 = vpop.xlane.xlu0 %2056
      %v2058 = vsub.f32 %v2007, %v2054
      %v2059 = vsub.f32 %v2047, %v2057
      %v2060 = vmul.f32 %v2058, 1.442695
      %v2061 = vpow.pop %v2060
      %v2062 = vmul.f32 %v2059, 1.442695
      %v2063 = vpow.pop %v2062
      %v2064 = vsel %vm1471, %v2061, 0.0
      %2065 = vadd.xlane.f32.xlu0 %v2064
      %v2066 = vpop.xlane.xlu0 %2065
      %v2067 = vsel %vm1471, %v2063, 0.0
      %2068 = vadd.xlane.f32.xlu0 %v2067
      %v2069 = vpop.xlane.xlu0 %2068
      %v2070 = vrcp.pop %v2066
      %v2071 = vmul.f32 %v2061, %v2070
      %v2072 = vrcp.pop %v2069
      %v2073 = vmul.f32 %v2063, %v2072
      %v2074 = vpack.c.bf16 %v2071, %v2071
      %v2075 = vpack.c.bf16 %v2073, %v2073
      %v2077 = vsel %vm1471, %v2074, 0
      %v2080 = vsel %vm1499, %v1970, 0
      %2082 = vmatprep.subr.bf16.mxu0 0
      %2083 = vmatpush1.bf16.msra.mxu0 %v2080
      %2084 = vmatprep.subr.bf16.mxu0 0
      %2085 = vmatpush1.bf16.msra.mxu0 0
      %2086 = vmatprep.subr.bf16.mxu0 0
      %2087 = vmatpush1.bf16.msra.mxu0 0
      %2088 = vmatprep.subr.bf16.mxu0 0
      %2089 = vmatpush1.bf16.msra.mxu0 0
      %2090 = vmatprep.subr.bf16.mxu0 0
      %2091 = vmatpush1.bf16.msra.mxu0 0
      %2092 = vmatprep.subr.bf16.mxu0 0
      %2093 = vmatpush1.bf16.msra.mxu0 0
      %2094 = vmatprep.subr.bf16.mxu0 0
      %2095 = vmatpush1.bf16.msra.mxu0 0
      %2096 = vmatprep.subr.bf16.mxu0 0
      %2097 = vmatpush1.bf16.msra.mxu0 0
      %2098 = vmatprep.subr.bf16.mxu0 0
      %2099 = vmatpush1.bf16.msra.mxu0 0
      %2100 = vmatprep.subr.bf16.mxu0 0
      %2101 = vmatpush1.bf16.msra.mxu0 0
      %2102 = vmatprep.subr.bf16.mxu0 0
      %2103 = vmatpush1.bf16.msra.mxu0 0
      %2104 = vmatprep.subr.bf16.mxu0 0
      %2105 = vmatpush1.bf16.msra.mxu0 0
      %2106 = vmatprep.subr.bf16.mxu0 0
      %2107 = vmatpush1.bf16.msra.mxu0 0
      %2108 = vmatprep.subr.bf16.mxu0 0
      %2109 = vmatpush1.bf16.msra.mxu0 0
      %2110 = vmatprep.subr.bf16.mxu0 0
      %2111 = vmatpush1.bf16.msra.mxu0 0
      %2112 = vmatprep.subr.bf16.mxu0 0
      %2113 = vmatpush1.bf16.msra.mxu0 0
      %2114 = vmatprep.mubr.bf16.mxu0 0
      %2115 = vmatmul.mubr.bf16.gmra.mrb[0].mxu0 %v2077
      %v2116 = vpop.f32.mrb[0].mxu0
      %v2117 = vadd.f32 0.0, %v2116
      %v2118 = vpop.f32.mrb[0].mxu0
      %v2119 = vpop.f32.mrb[0].mxu0
      %v2120 = vpop.f32.mrb[0].mxu0
      %2121 = vdwg.mxu0
      %v2123 = vsel %vm1471, %v2075, 0
      %v2126 = vsel %vm1499, %v1971, 0
      %2128 = vmatprep.subr.bf16.mxu0 0
      %2129 = vmatpush1.bf16.msra.mxu0 %v2126
      %2130 = vmatprep.subr.bf16.mxu0 0
      %2131 = vmatpush1.bf16.msra.mxu0 0
      %2132 = vmatprep.subr.bf16.mxu0 0
      %2133 = vmatpush1.bf16.msra.mxu0 0
      %2134 = vmatprep.subr.bf16.mxu0 0
      %2135 = vmatpush1.bf16.msra.mxu0 0
      %2136 = vmatprep.subr.bf16.mxu0 0
      %2137 = vmatpush1.bf16.msra.mxu0 0
      %2138 = vmatprep.subr.bf16.mxu0 0
      %2139 = vmatpush1.bf16.msra.mxu0 0
      %2140 = vmatprep.subr.bf16.mxu0 0
      %2141 = vmatpush1.bf16.msra.mxu0 0
      %2142 = vmatprep.subr.bf16.mxu0 0
      %2143 = vmatpush1.bf16.msra.mxu0 0
      %2144 = vmatprep.subr.bf16.mxu0 0
      %2145 = vmatpush1.bf16.msra.mxu0 0
      %2146 = vmatprep.subr.bf16.mxu0 0
      %2147 = vmatpush1.bf16.msra.mxu0 0
      %2148 = vmatprep.subr.bf16.mxu0 0
      %2149 = vmatpush1.bf16.msra.mxu0 0
      %2150 = vmatprep.subr.bf16.mxu0 0
      %2151 = vmatpush1.bf16.msra.mxu0 0
      %2152 = vmatprep.subr.bf16.mxu0 0
      %2153 = vmatpush1.bf16.msra.mxu0 0
      %2154 = vmatprep.subr.bf16.mxu0 0
      %2155 = vmatpush1.bf16.msra.mxu0 0
      %2156 = vmatprep.subr.bf16.mxu0 0
      %2157 = vmatpush1.bf16.msra.mxu0 0
      %2158 = vmatprep.subr.bf16.mxu0 0
      %2159 = vmatpush1.bf16.msra.mxu0 0
      %2160 = vmatprep.mubr.bf16.mxu0 0
      %2161 = vmatmul.mubr.bf16.gmra.mrb[0].mxu0 %v2123
      %v2162 = vpop.f32.mrb[0].mxu0
      %v2163 = vadd.f32 0.0, %v2162
      %v2164 = vpop.f32.mrb[0].mxu0
      %v2165 = vpop.f32.mrb[0].mxu0
      %v2166 = vpop.f32.mrb[0].mxu0
      %2167 = vdwg.mxu0
      %v2168 = vpack.c.bf16 %v2163, %v2117
      %s2169 = scalar_lea.vmem %s948, 64
      %v2170 = vld [vmem:[%s2169] sm:$0xf]
      %v2171 = vld [vmem:[%s2169 + $0x4] sm:$0xf]
      %v2172 = vld [vmem:[%s2169 + $0x8] sm:$0xf]
      %v2173 = vld [vmem:[%s2169 + $0xc] sm:$0xf]
      %v2174 = vld [vmem:[%s2169 + $0x10] sm:$0xf]
      %v2175 = vld [vmem:[%s2169 + $0x14] sm:$0xf]
      %v2176 = vld [vmem:[%s2169 + $0x18] sm:$0xf]
      %v2177 = vld [vmem:[%s2169 + $0x1c] sm:$0xf]
      %v2178 = vld [vmem:[%s2169 + $0x20] sm:$0xf]
      %v2179 = vld [vmem:[%s2169 + $0x24] sm:$0xf]
      %v2180 = vld [vmem:[%s2169 + $0x28] sm:$0xf]
      %v2181 = vld [vmem:[%s2169 + $0x2c] sm:$0xf]
      %v2182 = vld [vmem:[%s2169 + $0x30] sm:$0xf]
      %v2183 = vld [vmem:[%s2169 + $0x34] sm:$0xf]
      %v2184 = vld [vmem:[%s2169 + $0x38] sm:$0xf]
      %v2185 = vld [vmem:[%s2169 + $0x3c] sm:$0xf]
      %v2202 = vunpack.c.l.b16 %v2170
      %v2203 = vunpack.c.l.b16 %v2171
      %v2204 = vunpack.c.l.b16 %v2172
      %v2205 = vunpack.c.l.b16 %v2173
      %v2206 = vunpack.c.l.b16 %v2174
      %v2207 = vunpack.c.l.b16 %v2175
      %v2208 = vunpack.c.l.b16 %v2176
      %v2209 = vunpack.c.l.b16 %v2177
      %v2210 = vunpack.c.l.b16 %v2178
      %v2211 = vunpack.c.l.b16 %v2179
      %v2212 = vunpack.c.l.b16 %v2180
      %v2213 = vunpack.c.l.b16 %v2181
      %v2214 = vunpack.c.l.b16 %v2182
      %v2215 = vunpack.c.l.b16 %v2183
      %v2216 = vunpack.c.l.b16 %v2184
      %v2217 = vunpack.c.l.b16 %v2185
      %v2218 = vpack.c.b16 %v2203, %v2202
      %v2219 = vpack.c.b16 %v2205, %v2204
      %v2220 = vpack.c.b16 %v2207, %v2206
      %v2221 = vpack.c.b16 %v2209, %v2208
      %v2222 = vpack.c.b16 %v2211, %v2210
      %v2223 = vpack.c.b16 %v2213, %v2212
      %v2224 = vpack.c.b16 %v2215, %v2214
      %v2225 = vpack.c.b16 %v2217, %v2216
      %2234 = vmatprep.subr.bf16.mxu0 0
      %2235 = vmatpush1.bf16.msra.mxu0 %v2218
      %2236 = vmatprep.subr.bf16.mxu0 0
      %2237 = vmatpush1.bf16.msra.mxu0 %v2219
      %2238 = vmatprep.subr.bf16.mxu0 0
      %2239 = vmatpush1.bf16.msra.mxu0 %v2220
      %2240 = vmatprep.subr.bf16.mxu0 0
      %2241 = vmatpush1.bf16.msra.mxu0 %v2221
      %2242 = vmatprep.subr.bf16.mxu0 0
      %2243 = vmatpush1.bf16.msra.mxu0 %v2222
      %2244 = vmatprep.subr.bf16.mxu0 0
      %2245 = vmatpush1.bf16.msra.mxu0 %v2223
      %2246 = vmatprep.subr.bf16.mxu0 0
      %2247 = vmatpush1.bf16.msra.mxu0 %v2224
      %2248 = vmatprep.subr.bf16.mxu0 0
      %2249 = vmatpush1.bf16.msra.mxu0 %v2225
      %2250 = vmatprep.subr.bf16.mxu0 0
      %2251 = vmatpush1.bf16.msra.mxu0 0
      %2252 = vmatprep.subr.bf16.mxu0 0
      %2253 = vmatpush1.bf16.msra.mxu0 0
      %2254 = vmatprep.subr.bf16.mxu0 0
      %2255 = vmatpush1.bf16.msra.mxu0 0
      %2256 = vmatprep.subr.bf16.mxu0 0
      %2257 = vmatpush1.bf16.msra.mxu0 0
      %2258 = vmatprep.subr.bf16.mxu0 0
      %2259 = vmatpush1.bf16.msra.mxu0 0
      %2260 = vmatprep.subr.bf16.mxu0 0
      %2261 = vmatpush1.bf16.msra.mxu0 0
      %2262 = vmatprep.subr.bf16.mxu0 0
      %2263 = vmatpush1.bf16.msra.mxu0 0
      %2264 = vmatprep.subr.bf16.mxu0 0
      %2265 = vmatpush1.bf16.msra.mxu0 0
      %2266 = vmatprep.mubr.bf16.mxu0 0
      %2267 = vmatmul.mubr.bf16.gmra.mrb[0].mxu0 %v2168
      %v2268 = vpop.f32.mrb[0].mxu0
      %v2269 = vadd.f32 0.0, %v2268
      %v2270 = vpop.f32.mrb[0].mxu0
      %v2271 = vpop.f32.mrb[0].mxu0
      %v2272 = vadd.f32 0.0, %v2271
      %v2273 = vpop.f32.mrb[0].mxu0
      %2274 = vdwg.mxu0
      %v2275 = vadd.f32 %v1701, %v2269
      %v2276 = vadd.f32 %v1702, %v2272
      %s2277 = scalar_lea.vmem %s931, 384
      %v2278 = vld [vmem:[%s2277] sm:$0xff]
      %v2279 = vld [vmem:[%s2277 + $0x8] sm:$0xf]
      %v2280 = vld [vmem:[%s2277 + $0xc] sm:$0xff]
      %v2281 = vld [vmem:[%s2277 + $0x14] sm:$0xf]
      %v2282 = vld [vmem:[%s2277 + $0x18] sm:$0xff]
      %v2283 = vld [vmem:[%s2277 + $0x20] sm:$0xf]
      %v2284 = vld [vmem:[%s2277 + $0x24] sm:$0xff]
      %v2285 = vld [vmem:[%s2277 + $0x2c] sm:$0xf]
      %v2286 = vld [vmem:[%s2277 + $0x30] sm:$0xff]
      %v2287 = vld [vmem:[%s2277 + $0x38] sm:$0xf]
      %v2288 = vld [vmem:[%s2277 + $0x3c] sm:$0xff]
      %v2289 = vld [vmem:[%s2277 + $0x44] sm:$0xf]
      %v2290 = vld [vmem:[%s2277 + $0x48] sm:$0xff]
      %v2291 = vld [vmem:[%s2277 + $0x50] sm:$0xf]
      %v2292 = vld [vmem:[%s2277 + $0x54] sm:$0xff]
      %v2293 = vld [vmem:[%s2277 + $0x5c] sm:$0xf]
      %v2294 = vld [vmem:[%s2277 + $0x60] sm:$0xff]
      %v2295 = vld [vmem:[%s2277 + $0x68] sm:$0xf]
      %v2296 = vld [vmem:[%s2277 + $0x6c] sm:$0xff]
      %v2297 = vld [vmem:[%s2277 + $0x74] sm:$0xf]
      %v2298 = vld [vmem:[%s2277 + $0x78] sm:$0xff]
      %v2299 = vld [vmem:[%s2277 + $0x80] sm:$0xf]
      %v2300 = vld [vmem:[%s2277 + $0x84] sm:$0xff]
      %v2301 = vld [vmem:[%s2277 + $0x8c] sm:$0xf]
      %v2302 = vld [vmem:[%s2277 + $0x90] sm:$0xff]
      %v2303 = vld [vmem:[%s2277 + $0x98] sm:$0xf]
      %v2304 = vld [vmem:[%s2277 + $0x9c] sm:$0xff]
      %v2305 = vld [vmem:[%s2277 + $0xa4] sm:$0xf]
      %v2306 = vld [vmem:[%s2277 + $0xa8] sm:$0xff]
      %v2307 = vld [vmem:[%s2277 + $0xb0] sm:$0xf]
      %v2308 = vld [vmem:[%s2277 + $0xb4] sm:$0xff]
      %v2309 = vld [vmem:[%s2277 + $0xbc] sm:$0xf]
      %s2310 = scalar_lea.vmem %s939, 6
      %v2311 = vld [vmem:[%s2310] sm:$0x7]
      %v2313 = vlaneseq
      %v2314 = vshrl.u32 %v2313, 7
      %v2315 = vsub.s32 0, %v2314
      %v2316 = vrot.slane %v2311, %v2315
      %v2317 = vlaneseq
      %v2318 = vshrl.u32 %v2317, 7
      %v2319 = vsub.s32 1, %v2318
      %v2320 = vrot.slane %v2311, %v2319
      %v2321 = vlaneseq
      %v2322 = vshrl.u32 %v2321, 7
      %v2323 = vsub.s32 2, %v2322
      %v2324 = vrot.slane %v2311, %v2323
      %v2360 = vunpack.c.l.b16 %v2278
      %v2361 = vunpack.c.h.b16 %v2278
      %v2362 = vunpack.c.l.b16 %v2279
      %v2363 = vunpack.c.l.b16 %v2280
      %v2364 = vunpack.c.h.b16 %v2280
      %v2365 = vunpack.c.l.b16 %v2281
      %v2366 = vunpack.c.l.b16 %v2282
      %v2367 = vunpack.c.h.b16 %v2282
      %v2368 = vunpack.c.l.b16 %v2283
      %v2369 = vunpack.c.l.b16 %v2284
      %v2370 = vunpack.c.h.b16 %v2284
      %v2371 = vunpack.c.l.b16 %v2285
      %v2372 = vunpack.c.l.b16 %v2286
      %v2373 = vunpack.c.h.b16 %v2286
      %v2374 = vunpack.c.l.b16 %v2287
      %v2375 = vunpack.c.l.b16 %v2288
      %v2376 = vunpack.c.h.b16 %v2288
      %v2377 = vunpack.c.l.b16 %v2289
      %v2378 = vunpack.c.l.b16 %v2290
      %v2379 = vunpack.c.h.b16 %v2290
      %v2380 = vunpack.c.l.b16 %v2291
      %v2381 = vunpack.c.l.b16 %v2292
      %v2382 = vunpack.c.h.b16 %v2292
      %v2383 = vunpack.c.l.b16 %v2293
      %v2384 = vunpack.c.l.b16 %v2294
      %v2385 = vunpack.c.h.b16 %v2294
      %v2386 = vunpack.c.l.b16 %v2295
      %v2387 = vunpack.c.l.b16 %v2296
      %v2388 = vunpack.c.h.b16 %v2296
      %v2389 = vunpack.c.l.b16 %v2297
      %v2390 = vunpack.c.l.b16 %v2298
      %v2391 = vunpack.c.h.b16 %v2298
      %v2392 = vunpack.c.l.b16 %v2299
      %v2393 = vunpack.c.l.b16 %v2300
      %v2394 = vunpack.c.h.b16 %v2300
      %v2395 = vunpack.c.l.b16 %v2301
      %v2396 = vunpack.c.l.b16 %v2302
      %v2397 = vunpack.c.h.b16 %v2302
      %v2398 = vunpack.c.l.b16 %v2303
      %v2399 = vunpack.c.l.b16 %v2304
      %v2400 = vunpack.c.h.b16 %v2304
      %v2401 = vunpack.c.l.b16 %v2305
      %v2402 = vunpack.c.l.b16 %v2306
      %v2403 = vunpack.c.h.b16 %v2306
      %v2404 = vunpack.c.l.b16 %v2307
      %v2405 = vunpack.c.l.b16 %v2308
      %v2406 = vunpack.c.h.b16 %v2308
      %v2407 = vunpack.c.l.b16 %v2309
      %v2408 = vpack.c.b16 %v2363, %v2360
      %v2409 = vpack.c.b16 %v2364, %v2361
      %v2410 = vpack.c.b16 %v2365, %v2362
      %v2411 = vpack.c.b16 %v2369, %v2366
      %v2412 = vpack.c.b16 %v2370, %v2367
      %v2413 = vpack.c.b16 %v2371, %v2368
      %v2414 = vpack.c.b16 %v2375, %v2372
      %v2415 = vpack.c.b16 %v2376, %v2373
      %v2416 = vpack.c.b16 %v2377, %v2374
      %v2417 = vpack.c.b16 %v2381, %v2378
      %v2418 = vpack.c.b16 %v2382, %v2379
      %v2419 = vpack.c.b16 %v2383, %v2380
      %v2420 = vpack.c.b16 %v2387, %v2384
      %v2421 = vpack.c.b16 %v2388, %v2385
      %v2422 = vpack.c.b16 %v2389, %v2386
      %v2423 = vpack.c.b16 %v2393, %v2390
      %v2424 = vpack.c.b16 %v2394, %v2391
      %v2425 = vpack.c.b16 %v2395, %v2392
      %v2426 = vpack.c.b16 %v2399, %v2396
      %v2427 = vpack.c.b16 %v2400, %v2397
      %v2428 = vpack.c.b16 %v2401, %v2398
      %v2429 = vpack.c.b16 %v2405, %v2402
      %v2430 = vpack.c.b16 %v2406, %v2403
      %v2431 = vpack.c.b16 %v2407, %v2404
      %2456 = vmatprep.subr.bf16.mxu0 %v2409
      %2457 = vmatpush1.bf16.msra.mxu0 %v2408
      %2458 = vmatprep.subr.bf16.mxu0 %v2412
      %2459 = vmatpush1.bf16.msra.mxu0 %v2411
      %2460 = vmatprep.subr.bf16.mxu0 %v2415
      %2461 = vmatpush1.bf16.msra.mxu0 %v2414
      %2462 = vmatprep.subr.bf16.mxu0 %v2418
      %2463 = vmatpush1.bf16.msra.mxu0 %v2417
      %2464 = vmatprep.subr.bf16.mxu0 %v2421
      %2465 = vmatpush1.bf16.msra.mxu0 %v2420
      %2466 = vmatprep.subr.bf16.mxu0 %v2424
      %2467 = vmatpush1.bf16.msra.mxu0 %v2423
      %2468 = vmatprep.subr.bf16.mxu0 %v2427
      %2469 = vmatpush1.bf16.msra.mxu0 %v2426
      %2470 = vmatprep.subr.bf16.mxu0 %v2430
      %2471 = vmatpush1.bf16.msra.mxu0 %v2429
      %2472 = vmatprep.subr.bf16.mxu0 0
      %2473 = vmatpush1.bf16.msra.mxu0 0
      %2474 = vmatprep.subr.bf16.mxu0 0
      %2475 = vmatpush1.bf16.msra.mxu0 0
      %2476 = vmatprep.subr.bf16.mxu0 0
      %2477 = vmatpush1.bf16.msra.mxu0 0
      %2478 = vmatprep.subr.bf16.mxu0 0
      %2479 = vmatpush1.bf16.msra.mxu0 0
      %2480 = vmatprep.subr.bf16.mxu0 0
      %2481 = vmatpush1.bf16.msra.mxu0 0
      %2482 = vmatprep.subr.bf16.mxu0 0
      %2483 = vmatpush1.bf16.msra.mxu0 0
      %2484 = vmatprep.subr.bf16.mxu0 0
      %2485 = vmatpush1.bf16.msra.mxu0 0
      %2486 = vmatprep.subr.bf16.mxu0 0
      %2487 = vmatpush1.bf16.msra.mxu0 0
      %2488 = vmatprep.mubr.bf16.mxu0 0
      %2489 = vmatmul.mubr.bf16.gmra.mrb[0].mxu0 %v1086
      %v2490 = vpop.f32.mrb[0].mxu0
      %v2491 = vadd.f32 %v2316, %v2490
      %v2492 = vpop.f32.mrb[0].mxu0
      %v2493 = vadd.f32 %v2320, %v2492
      %v2494 = vpop.f32.mrb[0].mxu0
      %v2495 = vadd.f32 %v2316, %v2494
      %v2496 = vpop.f32.mrb[0].mxu0
      %v2497 = vadd.f32 %v2320, %v2496
      %2498 = vdwg.mxu0
      %2499 = vmatprep.subr.bf16.mxu0 0
      %2500 = vmatpush1.bf16.msra.mxu0 %v2410
      %2501 = vmatprep.subr.bf16.mxu0 0
      %2502 = vmatpush1.bf16.msra.mxu0 %v2413
      %2503 = vmatprep.subr.bf16.mxu0 0
      %2504 = vmatpush1.bf16.msra.mxu0 %v2416
      %2505 = vmatprep.subr.bf16.mxu0 0
      %2506 = vmatpush1.bf16.msra.mxu0 %v2419
      %2507 = vmatprep.subr.bf16.mxu0 0
      %2508 = vmatpush1.bf16.msra.mxu0 %v2422
      %2509 = vmatprep.subr.bf16.mxu0 0
      %2510 = vmatpush1.bf16.msra.mxu0 %v2425
      %2511 = vmatprep.subr.bf16.mxu0 0
      %2512 = vmatpush1.bf16.msra.mxu0 %v2428
      %2513 = vmatprep.subr.bf16.mxu0 0
      %2514 = vmatpush1.bf16.msra.mxu0 %v2431
      %2515 = vmatprep.subr.bf16.mxu0 0
      %2516 = vmatpush1.bf16.msra.mxu0 0
      %2517 = vmatprep.subr.bf16.mxu0 0
      %2518 = vmatpush1.bf16.msra.mxu0 0
      %2519 = vmatprep.subr.bf16.mxu0 0
      %2520 = vmatpush1.bf16.msra.mxu0 0
      %2521 = vmatprep.subr.bf16.mxu0 0
      %2522 = vmatpush1.bf16.msra.mxu0 0
      %2523 = vmatprep.subr.bf16.mxu0 0
      %2524 = vmatpush1.bf16.msra.mxu0 0
      %2525 = vmatprep.subr.bf16.mxu0 0
      %2526 = vmatpush1.bf16.msra.mxu0 0
      %2527 = vmatprep.subr.bf16.mxu0 0
      %2528 = vmatpush1.bf16.msra.mxu0 0
      %2529 = vmatprep.subr.bf16.mxu0 0
      %2530 = vmatpush1.bf16.msra.mxu0 0
      %2531 = vmatprep.mubr.bf16.mxu0 0
      %2532 = vmatmul.mubr.bf16.gmra.mrb[0].mxu0 %v1086
      %v2533 = vpop.f32.mrb[0].mxu0
      %v2534 = vadd.f32 %v2324, %v2533
      %v2535 = vpop.f32.mrb[0].mxu0
      %v2536 = vpop.f32.mrb[0].mxu0
      %v2537 = vadd.f32 %v2324, %v2536
      %v2538 = vpop.f32.mrb[0].mxu0
      %2539 = vdwg.mxu0
      %v2540 = vpack.c.bf16 %v2491, %v2491
      %v2541 = vpack.c.bf16 %v2495, %v2495
      %v2542 = vpack.c.bf16 %v2493, %v2493
      %v2543 = vpack.c.bf16 %v2497, %v2497
      %v2544 = vpack.c.bf16 %v2534, %v2534
      %v2545 = vpack.c.bf16 %v2537, %v2537
      %2546 = vmatprep.subr.bf16.mxu0 0
      %2547 = vmatpush1.bf16.xpose.msra.mxu0 %v2542
      %2548 = vmatprep.subr.bf16.mxu0 0
      %2549 = vmatpush1.bf16.xpose.msra.mxu0 0
      %2550 = vmatprep.subr.bf16.mxu0 0
      %2551 = vmatpush1.bf16.xpose.msra.mxu0 0
      %2552 = vmatprep.subr.bf16.mxu0 0
      %2553 = vmatpush1.bf16.xpose.msra.mxu0 0
      %2554 = vmatprep.subr.bf16.mxu0 0
      %2555 = vmatpush1.bf16.xpose.msra.mxu0 0
      %2556 = vmatprep.subr.bf16.mxu0 0
      %2557 = vmatpush1.bf16.xpose.msra.mxu0 0
      %2558 = vmatprep.subr.bf16.mxu0 0
      %2559 = vmatpush1.bf16.xpose.msra.mxu0 0
      %2560 = vmatprep.subr.bf16.mxu0 0
      %2561 = vmatpush1.bf16.xpose.msra.mxu0 0
      %2562 = vmatprep.subr.bf16.mxu0 0
      %2563 = vmatpush1.bf16.xpose.msra.mxu0 0
      %2564 = vmatprep.subr.bf16.mxu0 0
      %2565 = vmatpush1.bf16.xpose.msra.mxu0 0
      %2566 = vmatprep.subr.bf16.mxu0 0
      %2567 = vmatpush1.bf16.xpose.msra.mxu0 0
      %2568 = vmatprep.subr.bf16.mxu0 0
      %2569 = vmatpush1.bf16.xpose.msra.mxu0 0
      %2570 = vmatprep.subr.bf16.mxu0 0
      %2571 = vmatpush1.bf16.xpose.msra.mxu0 0
      %2572 = vmatprep.subr.bf16.mxu0 0
      %2573 = vmatpush1.bf16.xpose.msra.mxu0 0
      %2574 = vmatprep.subr.bf16.mxu0 0
      %2575 = vmatpush1.bf16.xpose.msra.mxu0 0
      %2576 = vmatprep.subr.bf16.mxu0 0
      %2577 = vmatpush1.bf16.xpose.msra.mxu0 0
      %2578 = vmatprep.mubr.bf16.mxu0 0
      %2579 = vmatmul.mubr.bf16.gmra.mrb[0].mxu0 %v2540
      %v2580 = vpop.f32.mrb[0].mxu0
      %v2581 = vadd.f32 %v1384, %v2580
      %v2582 = vpop.f32.mrb[0].mxu0
      %v2583 = vpop.f32.mrb[0].mxu0
      %v2584 = vpop.f32.mrb[0].mxu0
      %2585 = vdwg.mxu0
      %2586 = vmatprep.subr.bf16.mxu0 0
      %2587 = vmatpush1.bf16.xpose.msra.mxu0 %v2543
      %2588 = vmatprep.subr.bf16.mxu0 0
      %2589 = vmatpush1.bf16.xpose.msra.mxu0 0
      %2590 = vmatprep.subr.bf16.mxu0 0
      %2591 = vmatpush1.bf16.xpose.msra.mxu0 0
      %2592 = vmatprep.subr.bf16.mxu0 0
      %2593 = vmatpush1.bf16.xpose.msra.mxu0 0
      %2594 = vmatprep.subr.bf16.mxu0 0
      %2595 = vmatpush1.bf16.xpose.msra.mxu0 0
      %2596 = vmatprep.subr.bf16.mxu0 0
      %2597 = vmatpush1.bf16.xpose.msra.mxu0 0
      %2598 = vmatprep.subr.bf16.mxu0 0
      %2599 = vmatpush1.bf16.xpose.msra.mxu0 0
      %2600 = vmatprep.subr.bf16.mxu0 0
      %2601 = vmatpush1.bf16.xpose.msra.mxu0 0
      %2602 = vmatprep.subr.bf16.mxu0 0
      %2603 = vmatpush1.bf16.xpose.msra.mxu0 0
      %2604 = vmatprep.subr.bf16.mxu0 0
      %2605 = vmatpush1.bf16.xpose.msra.mxu0 0
      %2606 = vmatprep.subr.bf16.mxu0 0
      %2607 = vmatpush1.bf16.xpose.msra.mxu0 0
      %2608 = vmatprep.subr.bf16.mxu0 0
      %2609 = vmatpush1.bf16.xpose.msra.mxu0 0
      %2610 = vmatprep.subr.bf16.mxu0 0
      %2611 = vmatpush1.bf16.xpose.msra.mxu0 0
      %2612 = vmatprep.subr.bf16.mxu0 0
      %2613 = vmatpush1.bf16.xpose.msra.mxu0 0
      %2614 = vmatprep.subr.bf16.mxu0 0
      %2615 = vmatpush1.bf16.xpose.msra.mxu0 0
      %2616 = vmatprep.subr.bf16.mxu0 0
      %2617 = vmatpush1.bf16.xpose.msra.mxu0 0
      %2618 = vmatprep.mubr.bf16.mxu0 0
      %2619 = vmatmul.mubr.bf16.gmra.mrb[0].mxu0 %v2541
      %v2620 = vpop.f32.mrb[0].mxu0
      %v2621 = vadd.f32 %v1388, %v2620
      %v2622 = vpop.f32.mrb[0].mxu0
      %v2623 = vpop.f32.mrb[0].mxu0
      %v2624 = vpop.f32.mrb[0].mxu0
      %2625 = vdwg.mxu0
      %v2626 = vsel %vm1471, %v2581, -inf
      %2627 = vmax.xlane.f32.xlu0 %v2626
      %v2628 = vpop.xlane.xlu0 %2627
      %v2629 = vsel %vm1471, %v2621, -inf
      %2630 = vmax.xlane.f32.xlu0 %v2629
      %v2631 = vpop.xlane.xlu0 %2630
      %v2632 = vsub.f32 %v2581, %v2628
      %v2633 = vsub.f32 %v2621, %v2631
      %v2634 = vmul.f32 %v2632, 1.442695
      %v2635 = vpow.pop %v2634
      %v2636 = vmul.f32 %v2633, 1.442695
      %v2637 = vpow.pop %v2636
      %v2638 = vsel %vm1471, %v2635, 0.0
      %2639 = vadd.xlane.f32.xlu0 %v2638
      %v2640 = vpop.xlane.xlu0 %2639
      %v2641 = vsel %vm1471, %v2637, 0.0
      %2642 = vadd.xlane.f32.xlu0 %v2641
      %v2643 = vpop.xlane.xlu0 %2642
      %v2644 = vrcp.pop %v2640
      %v2645 = vmul.f32 %v2635, %v2644
      %v2646 = vrcp.pop %v2643
      %v2647 = vmul.f32 %v2637, %v2646
      %v2648 = vpack.c.bf16 %v2645, %v2645
      %v2649 = vpack.c.bf16 %v2647, %v2647
      %v2651 = vsel %vm1471, %v2648, 0
      %v2654 = vsel %vm1499, %v2544, 0
      %2656 = vmatprep.subr.bf16.mxu0 0
      %2657 = vmatpush1.bf16.msra.mxu0 %v2654
      %2658 = vmatprep.subr.bf16.mxu0 0
      %2659 = vmatpush1.bf16.msra.mxu0 0
      %2660 = vmatprep.subr.bf16.mxu0 0
      %2661 = vmatpush1.bf16.msra.mxu0 0
      %2662 = vmatprep.subr.bf16.mxu0 0
      %2663 = vmatpush1.bf16.msra.mxu0 0
      %2664 = vmatprep.subr.bf16.mxu0 0
      %2665 = vmatpush1.bf16.msra.mxu0 0
      %2666 = vmatprep.subr.bf16.mxu0 0
      %2667 = vmatpush1.bf16.msra.mxu0 0
      %2668 = vmatprep.subr.bf16.mxu0 0
      %2669 = vmatpush1.bf16.msra.mxu0 0
      %2670 = vmatprep.subr.bf16.mxu0 0
      %2671 = vmatpush1.bf16.msra.mxu0 0
      %2672 = vmatprep.subr.bf16.mxu0 0
      %2673 = vmatpush1.bf16.msra.mxu0 0
      %2674 = vmatprep.subr.bf16.mxu0 0
      %2675 = vmatpush1.bf16.msra.mxu0 0
      %2676 = vmatprep.subr.bf16.mxu0 0
      %2677 = vmatpush1.bf16.msra.mxu0 0
      %2678 = vmatprep.subr.bf16.mxu0 0
      %2679 = vmatpush1.bf16.msra.mxu0 0
      %2680 = vmatprep.subr.bf16.mxu0 0
      %2681 = vmatpush1.bf16.msra.mxu0 0
      %2682 = vmatprep.subr.bf16.mxu0 0
      %2683 = vmatpush1.bf16.msra.mxu0 0
      %2684 = vmatprep.subr.bf16.mxu0 0
      %2685 = vmatpush1.bf16.msra.mxu0 0
      %2686 = vmatprep.subr.bf16.mxu0 0
      %2687 = vmatpush1.bf16.msra.mxu0 0
      %2688 = vmatprep.mubr.bf16.mxu0 0
      %2689 = vmatmul.mubr.bf16.gmra.mrb[0].mxu0 %v2651
      %v2690 = vpop.f32.mrb[0].mxu0
      %v2691 = vadd.f32 0.0, %v2690
      %v2692 = vpop.f32.mrb[0].mxu0
      %v2693 = vpop.f32.mrb[0].mxu0
      %v2694 = vpop.f32.mrb[0].mxu0
      %2695 = vdwg.mxu0
      %v2697 = vsel %vm1471, %v2649, 0
      %v2700 = vsel %vm1499, %v2545, 0
      %2702 = vmatprep.subr.bf16.mxu0 0
      %2703 = vmatpush1.bf16.msra.mxu0 %v2700
      %2704 = vmatprep.subr.bf16.mxu0 0
      %2705 = vmatpush1.bf16.msra.mxu0 0
      %2706 = vmatprep.subr.bf16.mxu0 0
      %2707 = vmatpush1.bf16.msra.mxu0 0
      %2708 = vmatprep.subr.bf16.mxu0 0
      %2709 = vmatpush1.bf16.msra.mxu0 0
      %2710 = vmatprep.subr.bf16.mxu0 0
      %2711 = vmatpush1.bf16.msra.mxu0 0
      %2712 = vmatprep.subr.bf16.mxu0 0
      %2713 = vmatpush1.bf16.msra.mxu0 0
      %2714 = vmatprep.subr.bf16.mxu0 0
      %2715 = vmatpush1.bf16.msra.mxu0 0
      %2716 = vmatprep.subr.bf16.mxu0 0
      %2717 = vmatpush1.bf16.msra.mxu0 0
      %2718 = vmatprep.subr.bf16.mxu0 0
      %2719 = vmatpush1.bf16.msra.mxu0 0
      %2720 = vmatprep.subr.bf16.mxu0 0
      %2721 = vmatpush1.bf16.msra.mxu0 0
      %2722 = vmatprep.subr.bf16.mxu0 0
      %2723 = vmatpush1.bf16.msra.mxu0 0
      %2724 = vmatprep.subr.bf16.mxu0 0
      %2725 = vmatpush1.bf16.msra.mxu0 0
      %2726 = vmatprep.subr.bf16.mxu0 0
      %2727 = vmatpush1.bf16.msra.mxu0 0
      %2728 = vmatprep.subr.bf16.mxu0 0
      %2729 = vmatpush1.bf16.msra.mxu0 0
      %2730 = vmatprep.subr.bf16.mxu0 0
      %2731 = vmatpush1.bf16.msra.mxu0 0
      %2732 = vmatprep.subr.bf16.mxu0 0
      %2733 = vmatpush1.bf16.msra.mxu0 0
      %2734 = vmatprep.mubr.bf16.mxu0 0
      %2735 = vmatmul.mubr.bf16.gmra.mrb[0].mxu0 %v2697
      %v2736 = vpop.f32.mrb[0].mxu0
      %v2737 = vadd.f32 0.0, %v2736
      %v2738 = vpop.f32.mrb[0].mxu0
      %v2739 = vpop.f32.mrb[0].mxu0
      %v2740 = vpop.f32.mrb[0].mxu0
      %2741 = vdwg.mxu0
      %v2742 = vpack.c.bf16 %v2737, %v2691
      %s2743 = scalar_lea.vmem %s948, 128
      %v2744 = vld [vmem:[%s2743] sm:$0xf]
      %v2745 = vld [vmem:[%s2743 + $0x4] sm:$0xf]
      %v2746 = vld [vmem:[%s2743 + $0x8] sm:$0xf]
      %v2747 = vld [vmem:[%s2743 + $0xc] sm:$0xf]
      %v2748 = vld [vmem:[%s2743 + $0x10] sm:$0xf]
      %v2749 = vld [vmem:[%s2743 + $0x14] sm:$0xf]
      %v2750 = vld [vmem:[%s2743 + $0x18] sm:$0xf]
      %v2751 = vld [vmem:[%s2743 + $0x1c] sm:$0xf]
      %v2752 = vld [vmem:[%s2743 + $0x20] sm:$0xf]
      %v2753 = vld [vmem:[%s2743 + $0x24] sm:$0xf]
      %v2754 = vld [vmem:[%s2743 + $0x28] sm:$0xf]
      %v2755 = vld [vmem:[%s2743 + $0x2c] sm:$0xf]
      %v2756 = vld [vmem:[%s2743 + $0x30] sm:$0xf]
      %v2757 = vld [vmem:[%s2743 + $0x34] sm:$0xf]
      %v2758 = vld [vmem:[%s2743 + $0x38] sm:$0xf]
      %v2759 = vld [vmem:[%s2743 + $0x3c] sm:$0xf]
      %v2776 = vunpack.c.l.b16 %v2744
      %v2777 = vunpack.c.l.b16 %v2745
      %v2778 = vunpack.c.l.b16 %v2746
      %v2779 = vunpack.c.l.b16 %v2747
      %v2780 = vunpack.c.l.b16 %v2748
      %v2781 = vunpack.c.l.b16 %v2749
      %v2782 = vunpack.c.l.b16 %v2750
      %v2783 = vunpack.c.l.b16 %v2751
      %v2784 = vunpack.c.l.b16 %v2752
      %v2785 = vunpack.c.l.b16 %v2753
      %v2786 = vunpack.c.l.b16 %v2754
      %v2787 = vunpack.c.l.b16 %v2755
      %v2788 = vunpack.c.l.b16 %v2756
      %v2789 = vunpack.c.l.b16 %v2757
      %v2790 = vunpack.c.l.b16 %v2758
      %v2791 = vunpack.c.l.b16 %v2759
      %v2792 = vpack.c.b16 %v2777, %v2776
      %v2793 = vpack.c.b16 %v2779, %v2778
      %v2794 = vpack.c.b16 %v2781, %v2780
      %v2795 = vpack.c.b16 %v2783, %v2782
      %v2796 = vpack.c.b16 %v2785, %v2784
      %v2797 = vpack.c.b16 %v2787, %v2786
      %v2798 = vpack.c.b16 %v2789, %v2788
      %v2799 = vpack.c.b16 %v2791, %v2790
      %2808 = vmatprep.subr.bf16.mxu0 0
      %2809 = vmatpush1.bf16.msra.mxu0 %v2792
      %2810 = vmatprep.subr.bf16.mxu0 0
      %2811 = vmatpush1.bf16.msra.mxu0 %v2793
      %2812 = vmatprep.subr.bf16.mxu0 0
      %2813 = vmatpush1.bf16.msra.mxu0 %v2794
      %2814 = vmatprep.subr.bf16.mxu0 0
      %2815 = vmatpush1.bf16.msra.mxu0 %v2795
      %2816 = vmatprep.subr.bf16.mxu0 0
      %2817 = vmatpush1.bf16.msra.mxu0 %v2796
      %2818 = vmatprep.subr.bf16.mxu0 0
      %2819 = vmatpush1.bf16.msra.mxu0 %v2797
      %2820 = vmatprep.subr.bf16.mxu0 0
      %2821 = vmatpush1.bf16.msra.mxu0 %v2798
      %2822 = vmatprep.subr.bf16.mxu0 0
      %2823 = vmatpush1.bf16.msra.mxu0 %v2799
      %2824 = vmatprep.subr.bf16.mxu0 0
      %2825 = vmatpush1.bf16.msra.mxu0 0
      %2826 = vmatprep.subr.bf16.mxu0 0
      %2827 = vmatpush1.bf16.msra.mxu0 0
      %2828 = vmatprep.subr.bf16.mxu0 0
      %2829 = vmatpush1.bf16.msra.mxu0 0
      %2830 = vmatprep.subr.bf16.mxu0 0
      %2831 = vmatpush1.bf16.msra.mxu0 0
      %2832 = vmatprep.subr.bf16.mxu0 0
      %2833 = vmatpush1.bf16.msra.mxu0 0
      %2834 = vmatprep.subr.bf16.mxu0 0
      %2835 = vmatpush1.bf16.msra.mxu0 0
      %2836 = vmatprep.subr.bf16.mxu0 0
      %2837 = vmatpush1.bf16.msra.mxu0 0
      %2838 = vmatprep.subr.bf16.mxu0 0
      %2839 = vmatpush1.bf16.msra.mxu0 0
      %2840 = vmatprep.mubr.bf16.mxu0 0
      %2841 = vmatmul.mubr.bf16.gmra.mrb[0].mxu0 %v2742
      %v2842 = vpop.f32.mrb[0].mxu0
      %v2843 = vadd.f32 0.0, %v2842
      %v2844 = vpop.f32.mrb[0].mxu0
      %v2845 = vpop.f32.mrb[0].mxu0
      %v2846 = vadd.f32 0.0, %v2845
      %v2847 = vpop.f32.mrb[0].mxu0
      %2848 = vdwg.mxu0
      %v2849 = vadd.f32 %v2275, %v2843
      %v2850 = vadd.f32 %v2276, %v2846
      %s2851 = scalar_lea.vmem %s931, 576
      %v2852 = vld [vmem:[%s2851] sm:$0xff]
      %v2853 = vld [vmem:[%s2851 + $0x8] sm:$0xf]
      %v2854 = vld [vmem:[%s2851 + $0xc] sm:$0xff]
      %v2855 = vld [vmem:[%s2851 + $0x14] sm:$0xf]
      %v2856 = vld [vmem:[%s2851 + $0x18] sm:$0xff]
      %v2857 = vld [vmem:[%s2851 + $0x20] sm:$0xf]
      %v2858 = vld [vmem:[%s2851 + $0x24] sm:$0xff]
      %v2859 = vld [vmem:[%s2851 + $0x2c] sm:$0xf]
      %v2860 = vld [vmem:[%s2851 + $0x30] sm:$0xff]
      %v2861 = vld [vmem:[%s2851 + $0x38] sm:$0xf]
      %v2862 = vld [vmem:[%s2851 + $0x3c] sm:$0xff]
      %v2863 = vld [vmem:[%s2851 + $0x44] sm:$0xf]
      %v2864 = vld [vmem:[%s2851 + $0x48] sm:$0xff]
      %v2865 = vld [vmem:[%s2851 + $0x50] sm:$0xf]
      %v2866 = vld [vmem:[%s2851 + $0x54] sm:$0xff]
      %v2867 = vld [vmem:[%s2851 + $0x5c] sm:$0xf]
      %v2868 = vld [vmem:[%s2851 + $0x60] sm:$0xff]
      %v2869 = vld [vmem:[%s2851 + $0x68] sm:$0xf]
      %v2870 = vld [vmem:[%s2851 + $0x6c] sm:$0xff]
      %v2871 = vld [vmem:[%s2851 + $0x74] sm:$0xf]
      %v2872 = vld [vmem:[%s2851 + $0x78] sm:$0xff]
      %v2873 = vld [vmem:[%s2851 + $0x80] sm:$0xf]
      %v2874 = vld [vmem:[%s2851 + $0x84] sm:$0xff]
      %v2875 = vld [vmem:[%s2851 + $0x8c] sm:$0xf]
      %v2876 = vld [vmem:[%s2851 + $0x90] sm:$0xff]
      %v2877 = vld [vmem:[%s2851 + $0x98] sm:$0xf]
      %v2878 = vld [vmem:[%s2851 + $0x9c] sm:$0xff]
      %v2879 = vld [vmem:[%s2851 + $0xa4] sm:$0xf]
      %v2880 = vld [vmem:[%s2851 + $0xa8] sm:$0xff]
      %v2881 = vld [vmem:[%s2851 + $0xb0] sm:$0xf]
      %v2882 = vld [vmem:[%s2851 + $0xb4] sm:$0xff]
      %v2883 = vld [vmem:[%s2851 + $0xbc] sm:$0xf]
      %s2884 = scalar_lea.vmem %s939, 9
      %v2885 = vld [vmem:[%s2884] sm:$0x7]
      %v2887 = vlaneseq
      %v2888 = vshrl.u32 %v2887, 7
      %v2889 = vsub.s32 0, %v2888
      %v2890 = vrot.slane %v2885, %v2889
      %v2891 = vlaneseq
      %v2892 = vshrl.u32 %v2891, 7
      %v2893 = vsub.s32 1, %v2892
      %v2894 = vrot.slane %v2885, %v2893
      %v2895 = vlaneseq
      %v2896 = vshrl.u32 %v2895, 7
      %v2897 = vsub.s32 2, %v2896
      %v2898 = vrot.slane %v2885, %v2897
      %v2934 = vunpack.c.l.b16 %v2852
      %v2935 = vunpack.c.h.b16 %v2852
      %v2936 = vunpack.c.l.b16 %v2853
      %v2937 = vunpack.c.l.b16 %v2854
      %v2938 = vunpack.c.h.b16 %v2854
      %v2939 = vunpack.c.l.b16 %v2855
      %v2940 = vunpack.c.l.b16 %v2856
      %v2941 = vunpack.c.h.b16 %v2856
      %v2942 = vunpack.c.l.b16 %v2857
      %v2943 = vunpack.c.l.b16 %v2858
      %v2944 = vunpack.c.h.b16 %v2858
      %v2945 = vunpack.c.l.b16 %v2859
      %v2946 = vunpack.c.l.b16 %v2860
      %v2947 = vunpack.c.h.b16 %v2860
      %v2948 = vunpack.c.l.b16 %v2861
      %v2949 = vunpack.c.l.b16 %v2862
      %v2950 = vunpack.c.h.b16 %v2862
      %v2951 = vunpack.c.l.b16 %v2863
      %v2952 = vunpack.c.l.b16 %v2864
      %v2953 = vunpack.c.h.b16 %v2864
      %v2954 = vunpack.c.l.b16 %v2865
      %v2955 = vunpack.c.l.b16 %v2866
      %v2956 = vunpack.c.h.b16 %v2866
      %v2957 = vunpack.c.l.b16 %v2867
      %v2958 = vunpack.c.l.b16 %v2868
      %v2959 = vunpack.c.h.b16 %v2868
      %v2960 = vunpack.c.l.b16 %v2869
      %v2961 = vunpack.c.l.b16 %v2870
      %v2962 = vunpack.c.h.b16 %v2870
      %v2963 = vunpack.c.l.b16 %v2871
      %v2964 = vunpack.c.l.b16 %v2872
      %v2965 = vunpack.c.h.b16 %v2872
      %v2966 = vunpack.c.l.b16 %v2873
      %v2967 = vunpack.c.l.b16 %v2874
      %v2968 = vunpack.c.h.b16 %v2874
      %v2969 = vunpack.c.l.b16 %v2875
      %v2970 = vunpack.c.l.b16 %v2876
      %v2971 = vunpack.c.h.b16 %v2876
      %v2972 = vunpack.c.l.b16 %v2877
      %v2973 = vunpack.c.l.b16 %v2878
      %v2974 = vunpack.c.h.b16 %v2878
      %v2975 = vunpack.c.l.b16 %v2879
      %v2976 = vunpack.c.l.b16 %v2880
      %v2977 = vunpack.c.h.b16 %v2880
      %v2978 = vunpack.c.l.b16 %v2881
      %v2979 = vunpack.c.l.b16 %v2882
      %v2980 = vunpack.c.h.b16 %v2882
      %v2981 = vunpack.c.l.b16 %v2883
      %v2982 = vpack.c.b16 %v2937, %v2934
      %v2983 = vpack.c.b16 %v2938, %v2935
      %v2984 = vpack.c.b16 %v2939, %v2936
      %v2985 = vpack.c.b16 %v2943, %v2940
      %v2986 = vpack.c.b16 %v2944, %v2941
      %v2987 = vpack.c.b16 %v2945, %v2942
      %v2988 = vpack.c.b16 %v2949, %v2946
      %v2989 = vpack.c.b16 %v2950, %v2947
      %v2990 = vpack.c.b16 %v2951, %v2948
      %v2991 = vpack.c.b16 %v2955, %v2952
      %v2992 = vpack.c.b16 %v2956, %v2953
      %v2993 = vpack.c.b16 %v2957, %v2954
      %v2994 = vpack.c.b16 %v2961, %v2958
      %v2995 = vpack.c.b16 %v2962, %v2959
      %v2996 = vpack.c.b16 %v2963, %v2960
      %v2997 = vpack.c.b16 %v2967, %v2964
      %v2998 = vpack.c.b16 %v2968, %v2965
      %v2999 = vpack.c.b16 %v2969, %v2966
      %v3000 = vpack.c.b16 %v2973, %v2970
      %v3001 = vpack.c.b16 %v2974, %v2971
      %v3002 = vpack.c.b16 %v2975, %v2972
      %v3003 = vpack.c.b16 %v2979, %v2976
      %v3004 = vpack.c.b16 %v2980, %v2977
      %v3005 = vpack.c.b16 %v2981, %v2978
      %3030 = vmatprep.subr.bf16.mxu0 %v2983
      %3031 = vmatpush1.bf16.msra.mxu0 %v2982
      %3032 = vmatprep.subr.bf16.mxu0 %v2986
      %3033 = vmatpush1.bf16.msra.mxu0 %v2985
      %3034 = vmatprep.subr.bf16.mxu0 %v2989
      %3035 = vmatpush1.bf16.msra.mxu0 %v2988
      %3036 = vmatprep.subr.bf16.mxu0 %v2992
      %3037 = vmatpush1.bf16.msra.mxu0 %v2991
      %3038 = vmatprep.subr.bf16.mxu0 %v2995
      %3039 = vmatpush1.bf16.msra.mxu0 %v2994
      %3040 = vmatprep.subr.bf16.mxu0 %v2998
      %3041 = vmatpush1.bf16.msra.mxu0 %v2997
      %3042 = vmatprep.subr.bf16.mxu0 %v3001
      %3043 = vmatpush1.bf16.msra.mxu0 %v3000
      %3044 = vmatprep.subr.bf16.mxu0 %v3004
      %3045 = vmatpush1.bf16.msra.mxu0 %v3003
      %3046 = vmatprep.subr.bf16.mxu0 0
      %3047 = vmatpush1.bf16.msra.mxu0 0
      %3048 = vmatprep.subr.bf16.mxu0 0
      %3049 = vmatpush1.bf16.msra.mxu0 0
      %3050 = vmatprep.subr.bf16.mxu0 0
      %3051 = vmatpush1.bf16.msra.mxu0 0
      %3052 = vmatprep.subr.bf16.mxu0 0
      %3053 = vmatpush1.bf16.msra.mxu0 0
      %3054 = vmatprep.subr.bf16.mxu0 0
      %3055 = vmatpush1.bf16.msra.mxu0 0
      %3056 = vmatprep.subr.bf16.mxu0 0
      %3057 = vmatpush1.bf16.msra.mxu0 0
      %3058 = vmatprep.subr.bf16.mxu0 0
      %3059 = vmatpush1.bf16.msra.mxu0 0
      %3060 = vmatprep.subr.bf16.mxu0 0
      %3061 = vmatpush1.bf16.msra.mxu0 0
      %3062 = vmatprep.mubr.bf16.mxu0 0
      %3063 = vmatmul.mubr.bf16.gmra.mrb[0].mxu0 %v1086
      %v3064 = vpop.f32.mrb[0].mxu0
      %v3065 = vadd.f32 %v2890, %v3064
      %v3066 = vpop.f32.mrb[0].mxu0
      %v3067 = vadd.f32 %v2894, %v3066
      %v3068 = vpop.f32.mrb[0].mxu0
      %v3069 = vadd.f32 %v2890, %v3068
      %v3070 = vpop.f32.mrb[0].mxu0
      %v3071 = vadd.f32 %v2894, %v3070
      %3072 = vdwg.mxu0
      %3073 = vmatprep.subr.bf16.mxu0 0
      %3074 = vmatpush1.bf16.msra.mxu0 %v2984
      %3075 = vmatprep.subr.bf16.mxu0 0
      %3076 = vmatpush1.bf16.msra.mxu0 %v2987
      %3077 = vmatprep.subr.bf16.mxu0 0
      %3078 = vmatpush1.bf16.msra.mxu0 %v2990
      %3079 = vmatprep.subr.bf16.mxu0 0
      %3080 = vmatpush1.bf16.msra.mxu0 %v2993
      %3081 = vmatprep.subr.bf16.mxu0 0
      %3082 = vmatpush1.bf16.msra.mxu0 %v2996
      %3083 = vmatprep.subr.bf16.mxu0 0
      %3084 = vmatpush1.bf16.msra.mxu0 %v2999
      %3085 = vmatprep.subr.bf16.mxu0 0
      %3086 = vmatpush1.bf16.msra.mxu0 %v3002
      %3087 = vmatprep.subr.bf16.mxu0 0
      %3088 = vmatpush1.bf16.msra.mxu0 %v3005
      %3089 = vmatprep.subr.bf16.mxu0 0
      %3090 = vmatpush1.bf16.msra.mxu0 0
      %3091 = vmatprep.subr.bf16.mxu0 0
      %3092 = vmatpush1.bf16.msra.mxu0 0
      %3093 = vmatprep.subr.bf16.mxu0 0
      %3094 = vmatpush1.bf16.msra.mxu0 0
      %3095 = vmatprep.subr.bf16.mxu0 0
      %3096 = vmatpush1.bf16.msra.mxu0 0
      %3097 = vmatprep.subr.bf16.mxu0 0
      %3098 = vmatpush1.bf16.msra.mxu0 0
      %3099 = vmatprep.subr.bf16.mxu0 0
      %3100 = vmatpush1.bf16.msra.mxu0 0
      %3101 = vmatprep.subr.bf16.mxu0 0
      %3102 = vmatpush1.bf16.msra.mxu0 0
      %3103 = vmatprep.subr.bf16.mxu0 0
      %3104 = vmatpush1.bf16.msra.mxu0 0
      %3105 = vmatprep.mubr.bf16.mxu0 0
      %3106 = vmatmul.mubr.bf16.gmra.mrb[0].mxu0 %v1086
      %v3107 = vpop.f32.mrb[0].mxu0
      %v3108 = vadd.f32 %v2898, %v3107
      %v3109 = vpop.f32.mrb[0].mxu0
      %v3110 = vpop.f32.mrb[0].mxu0
      %v3111 = vadd.f32 %v2898, %v3110
      %v3112 = vpop.f32.mrb[0].mxu0
      %3113 = vdwg.mxu0
      %v3114 = vpack.c.bf16 %v3065, %v3065
      %v3115 = vpack.c.bf16 %v3069, %v3069
      %v3116 = vpack.c.bf16 %v3067, %v3067
      %v3117 = vpack.c.bf16 %v3071, %v3071
      %v3118 = vpack.c.bf16 %v3108, %v3108
      %v3119 = vpack.c.bf16 %v3111, %v3111
      %3120 = vmatprep.subr.bf16.mxu0 0
      %3121 = vmatpush1.bf16.xpose.msra.mxu0 %v3116
      %3122 = vmatprep.subr.bf16.mxu0 0
      %3123 = vmatpush1.bf16.xpose.msra.mxu0 0
      %3124 = vmatprep.subr.bf16.mxu0 0
      %3125 = vmatpush1.bf16.xpose.msra.mxu0 0
      %3126 = vmatprep.subr.bf16.mxu0 0
      %3127 = vmatpush1.bf16.xpose.msra.mxu0 0
      %3128 = vmatprep.subr.bf16.mxu0 0
      %3129 = vmatpush1.bf16.xpose.msra.mxu0 0
      %3130 = vmatprep.subr.bf16.mxu0 0
      %3131 = vmatpush1.bf16.xpose.msra.mxu0 0
      %3132 = vmatprep.subr.bf16.mxu0 0
      %3133 = vmatpush1.bf16.xpose.msra.mxu0 0
      %3134 = vmatprep.subr.bf16.mxu0 0
      %3135 = vmatpush1.bf16.xpose.msra.mxu0 0
      %3136 = vmatprep.subr.bf16.mxu0 0
      %3137 = vmatpush1.bf16.xpose.msra.mxu0 0
      %3138 = vmatprep.subr.bf16.mxu0 0
      %3139 = vmatpush1.bf16.xpose.msra.mxu0 0
      %3140 = vmatprep.subr.bf16.mxu0 0
      %3141 = vmatpush1.bf16.xpose.msra.mxu0 0
      %3142 = vmatprep.subr.bf16.mxu0 0
      %3143 = vmatpush1.bf16.xpose.msra.mxu0 0
      %3144 = vmatprep.subr.bf16.mxu0 0
      %3145 = vmatpush1.bf16.xpose.msra.mxu0 0
      %3146 = vmatprep.subr.bf16.mxu0 0
      %3147 = vmatpush1.bf16.xpose.msra.mxu0 0
      %3148 = vmatprep.subr.bf16.mxu0 0
      %3149 = vmatpush1.bf16.xpose.msra.mxu0 0
      %3150 = vmatprep.subr.bf16.mxu0 0
      %3151 = vmatpush1.bf16.xpose.msra.mxu0 0
      %3152 = vmatprep.mubr.bf16.mxu0 0
      %3153 = vmatmul.mubr.bf16.gmra.mrb[0].mxu0 %v3114
      %v3154 = vpop.f32.mrb[0].mxu0
      %v3155 = vadd.f32 %v1384, %v3154
      %v3156 = vpop.f32.mrb[0].mxu0
      %v3157 = vpop.f32.mrb[0].mxu0
      %v3158 = vpop.f32.mrb[0].mxu0
      %3159 = vdwg.mxu0
      %3160 = vmatprep.subr.bf16.mxu0 0
      %3161 = vmatpush1.bf16.xpose.msra.mxu0 %v3117
      %3162 = vmatprep.subr.bf16.mxu0 0
      %3163 = vmatpush1.bf16.xpose.msra.mxu0 0
      %3164 = vmatprep.subr.bf16.mxu0 0
      %3165 = vmatpush1.bf16.xpose.msra.mxu0 0
      %3166 = vmatprep.subr.bf16.mxu0 0
      %3167 = vmatpush1.bf16.xpose.msra.mxu0 0
      %3168 = vmatprep.subr.bf16.mxu0 0
      %3169 = vmatpush1.bf16.xpose.msra.mxu0 0
      %3170 = vmatprep.subr.bf16.mxu0 0
      %3171 = vmatpush1.bf16.xpose.msra.mxu0 0
      %3172 = vmatprep.subr.bf16.mxu0 0
      %3173 = vmatpush1.bf16.xpose.msra.mxu0 0
      %3174 = vmatprep.subr.bf16.mxu0 0
      %3175 = vmatpush1.bf16.xpose.msra.mxu0 0
      %3176 = vmatprep.subr.bf16.mxu0 0
      %3177 = vmatpush1.bf16.xpose.msra.mxu0 0
      %3178 = vmatprep.subr.bf16.mxu0 0
      %3179 = vmatpush1.bf16.xpose.msra.mxu0 0
      %3180 = vmatprep.subr.bf16.mxu0 0
      %3181 = vmatpush1.bf16.xpose.msra.mxu0 0
      %3182 = vmatprep.subr.bf16.mxu0 0
      %3183 = vmatpush1.bf16.xpose.msra.mxu0 0
      %3184 = vmatprep.subr.bf16.mxu0 0
      %3185 = vmatpush1.bf16.xpose.msra.mxu0 0
      %3186 = vmatprep.subr.bf16.mxu0 0
      %3187 = vmatpush1.bf16.xpose.msra.mxu0 0
      %3188 = vmatprep.subr.bf16.mxu0 0
      %3189 = vmatpush1.bf16.xpose.msra.mxu0 0
      %3190 = vmatprep.subr.bf16.mxu0 0
      %3191 = vmatpush1.bf16.xpose.msra.mxu0 0
      %3192 = vmatprep.mubr.bf16.mxu0 0
      %3193 = vmatmul.mubr.bf16.gmra.mrb[0].mxu0 %v3115
      %v3194 = vpop.f32.mrb[0].mxu0
      %v3195 = vadd.f32 %v1388, %v3194
      %v3196 = vpop.f32.mrb[0].mxu0
      %v3197 = vpop.f32.mrb[0].mxu0
      %v3198 = vpop.f32.mrb[0].mxu0
      %3199 = vdwg.mxu0
      %v3200 = vsel %vm1471, %v3155, -inf
      %3201 = vmax.xlane.f32.xlu0 %v3200
      %v3202 = vpop.xlane.xlu0 %3201
      %v3203 = vsel %vm1471, %v3195, -inf
      %3204 = vmax.xlane.f32.xlu0 %v3203
      %v3205 = vpop.xlane.xlu0 %3204
      %v3206 = vsub.f32 %v3155, %v3202
      %v3207 = vsub.f32 %v3195, %v3205
      %v3208 = vmul.f32 %v3206, 1.442695
      %v3209 = vpow.pop %v3208
      %v3210 = vmul.f32 %v3207, 1.442695
      %v3211 = vpow.pop %v3210
      %v3212 = vsel %vm1471, %v3209, 0.0
      %3213 = vadd.xlane.f32.xlu0 %v3212
      %v3214 = vpop.xlane.xlu0 %3213
      %v3215 = vsel %vm1471, %v3211, 0.0
      %3216 = vadd.xlane.f32.xlu0 %v3215
      %v3217 = vpop.xlane.xlu0 %3216
      %v3218 = vrcp.pop %v3214
      %v3219 = vmul.f32 %v3209, %v3218
      %v3220 = vrcp.pop %v3217
      %v3221 = vmul.f32 %v3211, %v3220
      %v3222 = vpack.c.bf16 %v3219, %v3219
      %v3223 = vpack.c.bf16 %v3221, %v3221
      %v3225 = vsel %vm1471, %v3222, 0
      %v3228 = vsel %vm1499, %v3118, 0
      %3230 = vmatprep.subr.bf16.mxu0 0
      %3231 = vmatpush1.bf16.msra.mxu0 %v3228
      %3232 = vmatprep.subr.bf16.mxu0 0
      %3233 = vmatpush1.bf16.msra.mxu0 0
      %3234 = vmatprep.subr.bf16.mxu0 0
      %3235 = vmatpush1.bf16.msra.mxu0 0
      %3236 = vmatprep.subr.bf16.mxu0 0
      %3237 = vmatpush1.bf16.msra.mxu0 0
      %3238 = vmatprep.subr.bf16.mxu0 0
      %3239 = vmatpush1.bf16.msra.mxu0 0
      %3240 = vmatprep.subr.bf16.mxu0 0
      %3241 = vmatpush1.bf16.msra.mxu0 0
      %3242 = vmatprep.subr.bf16.mxu0 0
      %3243 = vmatpush1.bf16.msra.mxu0 0
      %3244 = vmatprep.subr.bf16.mxu0 0
      %3245 = vmatpush1.bf16.msra.mxu0 0
      %3246 = vmatprep.subr.bf16.mxu0 0
      %3247 = vmatpush1.bf16.msra.mxu0 0
      %3248 = vmatprep.subr.bf16.mxu0 0
      %3249 = vmatpush1.bf16.msra.mxu0 0
      %3250 = vmatprep.subr.bf16.mxu0 0
      %3251 = vmatpush1.bf16.msra.mxu0 0
      %3252 = vmatprep.subr.bf16.mxu0 0
      %3253 = vmatpush1.bf16.msra.mxu0 0
      %3254 = vmatprep.subr.bf16.mxu0 0
      %3255 = vmatpush1.bf16.msra.mxu0 0
      %3256 = vmatprep.subr.bf16.mxu0 0
      %3257 = vmatpush1.bf16.msra.mxu0 0
      %3258 = vmatprep.subr.bf16.mxu0 0
      %3259 = vmatpush1.bf16.msra.mxu0 0
      %3260 = vmatprep.subr.bf16.mxu0 0
      %3261 = vmatpush1.bf16.msra.mxu0 0
      %3262 = vmatprep.mubr.bf16.mxu0 0
      %3263 = vmatmul.mubr.bf16.gmra.mrb[0].mxu0 %v3225
      %v3264 = vpop.f32.mrb[0].mxu0
      %v3265 = vadd.f32 0.0, %v3264
      %v3266 = vpop.f32.mrb[0].mxu0
      %v3267 = vpop.f32.mrb[0].mxu0
      %v3268 = vpop.f32.mrb[0].mxu0
      %3269 = vdwg.mxu0
      %v3271 = vsel %vm1471, %v3223, 0
      %v3274 = vsel %vm1499, %v3119, 0
      %3276 = vmatprep.subr.bf16.mxu0 0
      %3277 = vmatpush1.bf16.msra.mxu0 %v3274
      %3278 = vmatprep.subr.bf16.mxu0 0
      %3279 = vmatpush1.bf16.msra.mxu0 0
      %3280 = vmatprep.subr.bf16.mxu0 0
      %3281 = vmatpush1.bf16.msra.mxu0 0
      %3282 = vmatprep.subr.bf16.mxu0 0
      %3283 = vmatpush1.bf16.msra.mxu0 0
      %3284 = vmatprep.subr.bf16.mxu0 0
      %3285 = vmatpush1.bf16.msra.mxu0 0
      %3286 = vmatprep.subr.bf16.mxu0 0
      %3287 = vmatpush1.bf16.msra.mxu0 0
      %3288 = vmatprep.subr.bf16.mxu0 0
      %3289 = vmatpush1.bf16.msra.mxu0 0
      %3290 = vmatprep.subr.bf16.mxu0 0
      %3291 = vmatpush1.bf16.msra.mxu0 0
      %3292 = vmatprep.subr.bf16.mxu0 0
      %3293 = vmatpush1.bf16.msra.mxu0 0
      %3294 = vmatprep.subr.bf16.mxu0 0
      %3295 = vmatpush1.bf16.msra.mxu0 0
      %3296 = vmatprep.subr.bf16.mxu0 0
      %3297 = vmatpush1.bf16.msra.mxu0 0
      %3298 = vmatprep.subr.bf16.mxu0 0
      %3299 = vmatpush1.bf16.msra.mxu0 0
      %3300 = vmatprep.subr.bf16.mxu0 0
      %3301 = vmatpush1.bf16.msra.mxu0 0
      %3302 = vmatprep.subr.bf16.mxu0 0
      %3303 = vmatpush1.bf16.msra.mxu0 0
      %3304 = vmatprep.subr.bf16.mxu0 0
      %3305 = vmatpush1.bf16.msra.mxu0 0
      %3306 = vmatprep.subr.bf16.mxu0 0
      %3307 = vmatpush1.bf16.msra.mxu0 0
      %3308 = vmatprep.mubr.bf16.mxu0 0
      %3309 = vmatmul.mubr.bf16.gmra.mrb[0].mxu0 %v3271
      %v3310 = vpop.f32.mrb[0].mxu0
      %v3311 = vadd.f32 0.0, %v3310
      %v3312 = vpop.f32.mrb[0].mxu0
      %v3313 = vpop.f32.mrb[0].mxu0
      %v3314 = vpop.f32.mrb[0].mxu0
      %3315 = vdwg.mxu0
      %v3316 = vpack.c.bf16 %v3311, %v3265
      %s3317 = scalar_lea.vmem %s948, 192
      %v3318 = vld [vmem:[%s3317] sm:$0xf]
      %v3319 = vld [vmem:[%s3317 + $0x4] sm:$0xf]
      %v3320 = vld [vmem:[%s3317 + $0x8] sm:$0xf]
      %v3321 = vld [vmem:[%s3317 + $0xc] sm:$0xf]
      %v3322 = vld [vmem:[%s3317 + $0x10] sm:$0xf]
      %v3323 = vld [vmem:[%s3317 + $0x14] sm:$0xf]
      %v3324 = vld [vmem:[%s3317 + $0x18] sm:$0xf]
      %v3325 = vld [vmem:[%s3317 + $0x1c] sm:$0xf]
      %v3326 = vld [vmem:[%s3317 + $0x20] sm:$0xf]
      %v3327 = vld [vmem:[%s3317 + $0x24] sm:$0xf]
      %v3328 = vld [vmem:[%s3317 + $0x28] sm:$0xf]
      %v3329 = vld [vmem:[%s3317 + $0x2c] sm:$0xf]
      %v3330 = vld [vmem:[%s3317 + $0x30] sm:$0xf]
      %v3331 = vld [vmem:[%s3317 + $0x34] sm:$0xf]
      %v3332 = vld [vmem:[%s3317 + $0x38] sm:$0xf]
      %v3333 = vld [vmem:[%s3317 + $0x3c] sm:$0xf]
      %v3350 = vunpack.c.l.b16 %v3318
      %v3351 = vunpack.c.l.b16 %v3319
      %v3352 = vunpack.c.l.b16 %v3320
      %v3353 = vunpack.c.l.b16 %v3321
      %v3354 = vunpack.c.l.b16 %v3322
      %v3355 = vunpack.c.l.b16 %v3323
      %v3356 = vunpack.c.l.b16 %v3324
      %v3357 = vunpack.c.l.b16 %v3325
      %v3358 = vunpack.c.l.b16 %v3326
      %v3359 = vunpack.c.l.b16 %v3327
      %v3360 = vunpack.c.l.b16 %v3328
      %v3361 = vunpack.c.l.b16 %v3329
      %v3362 = vunpack.c.l.b16 %v3330
      %v3363 = vunpack.c.l.b16 %v3331
      %v3364 = vunpack.c.l.b16 %v3332
      %v3365 = vunpack.c.l.b16 %v3333
      %v3366 = vpack.c.b16 %v3351, %v3350
      %v3367 = vpack.c.b16 %v3353, %v3352
      %v3368 = vpack.c.b16 %v3355, %v3354
      %v3369 = vpack.c.b16 %v3357, %v3356
      %v3370 = vpack.c.b16 %v3359, %v3358
      %v3371 = vpack.c.b16 %v3361, %v3360
      %v3372 = vpack.c.b16 %v3363, %v3362
      %v3373 = vpack.c.b16 %v3365, %v3364
      %3382 = vmatprep.subr.bf16.mxu0 0
      %3383 = vmatpush1.bf16.msra.mxu0 %v3366
      %3384 = vmatprep.subr.bf16.mxu0 0
      %3385 = vmatpush1.bf16.msra.mxu0 %v3367
      %3386 = vmatprep.subr.bf16.mxu0 0
      %3387 = vmatpush1.bf16.msra.mxu0 %v3368
      %3388 = vmatprep.subr.bf16.mxu0 0
      %3389 = vmatpush1.bf16.msra.mxu0 %v3369
      %3390 = vmatprep.subr.bf16.mxu0 0
      %3391 = vmatpush1.bf16.msra.mxu0 %v3370
      %3392 = vmatprep.subr.bf16.mxu0 0
      %3393 = vmatpush1.bf16.msra.mxu0 %v3371
      %3394 = vmatprep.subr.bf16.mxu0 0
      %3395 = vmatpush1.bf16.msra.mxu0 %v3372
      %3396 = vmatprep.subr.bf16.mxu0 0
      %3397 = vmatpush1.bf16.msra.mxu0 %v3373
      %3398 = vmatprep.subr.bf16.mxu0 0
      %3399 = vmatpush1.bf16.msra.mxu0 0
      %3400 = vmatprep.subr.bf16.mxu0 0
      %3401 = vmatpush1.bf16.msra.mxu0 0
      %3402 = vmatprep.subr.bf16.mxu0 0
      %3403 = vmatpush1.bf16.msra.mxu0 0
      %3404 = vmatprep.subr.bf16.mxu0 0
      %3405 = vmatpush1.bf16.msra.mxu0 0
      %3406 = vmatprep.subr.bf16.mxu0 0
      %3407 = vmatpush1.bf16.msra.mxu0 0
      %3408 = vmatprep.subr.bf16.mxu0 0
      %3409 = vmatpush1.bf16.msra.mxu0 0
      %3410 = vmatprep.subr.bf16.mxu0 0
      %3411 = vmatpush1.bf16.msra.mxu0 0
      %3412 = vmatprep.subr.bf16.mxu0 0
      %3413 = vmatpush1.bf16.msra.mxu0 0
      %3414 = vmatprep.mubr.bf16.mxu0 0
      %3415 = vmatmul.mubr.bf16.gmra.mrb[0].mxu0 %v3316
      %v3416 = vpop.f32.mrb[0].mxu0
      %v3417 = vadd.f32 0.0, %v3416
      %v3418 = vpop.f32.mrb[0].mxu0
      %v3419 = vpop.f32.mrb[0].mxu0
      %v3420 = vadd.f32 0.0, %v3419
      %v3421 = vpop.f32.mrb[0].mxu0
      %3422 = vdwg.mxu0
      %v3423 = vadd.f32 %v2849, %v3417
      %v3424 = vadd.f32 %v2850, %v3420
      %v3425 = vadd.f32 %v3423, %v1084
      %v3426 = vadd.f32 %v3424, %v1085
      %v3427 = vld [vmem:[%s962] sm:$0x1]
      %v3428 = vld [vmem:[%s969] sm:$0x1]
      %3429 = vadd.xlane.f32.xlu0 %v3425
      %v3430 = vpop.xlane.xlu0 %3429
      %3431 = vadd.xlane.f32.xlu0 %v3426
      %v3432 = vpop.xlane.xlu0 %3431
      %v3433 = vmul.f32 %v3430, 0.03125
      %v3434 = vmul.f32 %v3432, 0.03125
      %v3435 = vsub.f32 %v3425, %v3433
      %v3436 = vsub.f32 %v3426, %v3434
      %v3437 = vmul.f32 %v3435, %v1033
      %v3438 = vmul.f32 %v3436, %v1033
      %v3439 = vmul.f32 %v3437, %v3437
      %v3440 = vmul.f32 %v3438, %v3438
      %3441 = vadd.xlane.f32.xlu0 %v3439
      %v3442 = vpop.xlane.xlu0 %3441
      %3443 = vadd.xlane.f32.xlu0 %v3440
      %v3444 = vpop.xlane.xlu0 %3443
      %v3445 = vmul.f32 %v3442, 0.03125
      %v3446 = vmul.f32 %v3444, 0.03125
      %v3447 = vadd.f32 %v3445, 1e-12
      %v3448 = vadd.f32 %v3446, 1e-12
      %v3449 = vrsqrt.pop %v3447
      %v3450 = vrsqrt.pop %v3448
      %v3451 = vmul.f32 %v3437, %v3449
      %v3452 = vmul.f32 %v3438, %v3450
      %v3454 = vlaneseq
      %v3455 = vshrl.u32 %v3454, 7
      %v3456 = vsub.s32 0, %v3455
      %v3457 = vrot.slane %v3427, %v3456
      %v3459 = vmul.f32 %v3451, %v3457
      %v3460 = vmul.f32 %v3452, %v3457
      %v3462 = vlaneseq
      %v3463 = vshrl.u32 %v3462, 7
      %v3464 = vsub.s32 0, %v3463
      %v3465 = vrot.slane %v3428, %v3464
      %v3467 = vadd.f32 %v3459, %v3465
      %v3468 = vadd.f32 %v3460, %v3465
      %v3469 = vpack.c.bf16 %v3468, %v3467
      %v3470 = vld [vmem:[%s978] sm:$0xf]
      %v3471 = vld [vmem:[%s978 + $0x4] sm:$0xf]
      %v3472 = vld [vmem:[%s978 + $0x8] sm:$0xf]
      %v3473 = vld [vmem:[%s978 + $0xc] sm:$0xf]
      %v3474 = vld [vmem:[%s978 + $0x10] sm:$0xf]
      %v3475 = vld [vmem:[%s978 + $0x14] sm:$0xf]
      %v3476 = vld [vmem:[%s978 + $0x18] sm:$0xf]
      %v3477 = vld [vmem:[%s978 + $0x1c] sm:$0xf]
      %v3478 = vld [vmem:[%s978 + $0x20] sm:$0xf]
      %v3479 = vld [vmem:[%s978 + $0x24] sm:$0xf]
      %v3480 = vld [vmem:[%s978 + $0x28] sm:$0xf]
      %v3481 = vld [vmem:[%s978 + $0x2c] sm:$0xf]
      %v3482 = vld [vmem:[%s978 + $0x30] sm:$0xf]
      %v3483 = vld [vmem:[%s978 + $0x34] sm:$0xf]
      %v3484 = vld [vmem:[%s978 + $0x38] sm:$0xf]
      %v3485 = vld [vmem:[%s978 + $0x3c] sm:$0xf]
      %v3486 = vld [vmem:[%s985] sm:$0x1]
      %v3488 = vlaneseq
      %v3489 = vshrl.u32 %v3488, 7
      %v3490 = vsub.s32 0, %v3489
      %v3491 = vrot.slane %v3486, %v3490
      %v3509 = vunpack.c.l.b16 %v3470
      %v3510 = vunpack.c.l.b16 %v3471
      %v3511 = vunpack.c.l.b16 %v3472
      %v3512 = vunpack.c.l.b16 %v3473
      %v3513 = vunpack.c.l.b16 %v3474
      %v3514 = vunpack.c.l.b16 %v3475
      %v3515 = vunpack.c.l.b16 %v3476
      %v3516 = vunpack.c.l.b16 %v3477
      %v3517 = vunpack.c.l.b16 %v3478
      %v3518 = vunpack.c.l.b16 %v3479
      %v3519 = vunpack.c.l.b16 %v3480
      %v3520 = vunpack.c.l.b16 %v3481
      %v3521 = vunpack.c.l.b16 %v3482
      %v3522 = vunpack.c.l.b16 %v3483
      %v3523 = vunpack.c.l.b16 %v3484
      %v3524 = vunpack.c.l.b16 %v3485
      %v3525 = vpack.c.b16 %v3510, %v3509
      %v3526 = vpack.c.b16 %v3512, %v3511
      %v3527 = vpack.c.b16 %v3514, %v3513
      %v3528 = vpack.c.b16 %v3516, %v3515
      %v3529 = vpack.c.b16 %v3518, %v3517
      %v3530 = vpack.c.b16 %v3520, %v3519
      %v3531 = vpack.c.b16 %v3522, %v3521
      %v3532 = vpack.c.b16 %v3524, %v3523
      %3541 = vmatprep.subr.bf16.mxu0 0
      %3542 = vmatpush1.bf16.msra.mxu0 %v3525
      %3543 = vmatprep.subr.bf16.mxu0 0
      %3544 = vmatpush1.bf16.msra.mxu0 %v3526
      %3545 = vmatprep.subr.bf16.mxu0 0
      %3546 = vmatpush1.bf16.msra.mxu0 %v3527
      %3547 = vmatprep.subr.bf16.mxu0 0
      %3548 = vmatpush1.bf16.msra.mxu0 %v3528
      %3549 = vmatprep.subr.bf16.mxu0 0
      %3550 = vmatpush1.bf16.msra.mxu0 %v3529
      %3551 = vmatprep.subr.bf16.mxu0 0
      %3552 = vmatpush1.bf16.msra.mxu0 %v3530
      %3553 = vmatprep.subr.bf16.mxu0 0
      %3554 = vmatpush1.bf16.msra.mxu0 %v3531
      %3555 = vmatprep.subr.bf16.mxu0 0
      %3556 = vmatpush1.bf16.msra.mxu0 %v3532
      %3557 = vmatprep.subr.bf16.mxu0 0
      %3558 = vmatpush1.bf16.msra.mxu0 0
      %3559 = vmatprep.subr.bf16.mxu0 0
      %3560 = vmatpush1.bf16.msra.mxu0 0
      %3561 = vmatprep.subr.bf16.mxu0 0
      %3562 = vmatpush1.bf16.msra.mxu0 0
      %3563 = vmatprep.subr.bf16.mxu0 0
      %3564 = vmatpush1.bf16.msra.mxu0 0
      %3565 = vmatprep.subr.bf16.mxu0 0
      %3566 = vmatpush1.bf16.msra.mxu0 0
      %3567 = vmatprep.subr.bf16.mxu0 0
      %3568 = vmatpush1.bf16.msra.mxu0 0
      %3569 = vmatprep.subr.bf16.mxu0 0
      %3570 = vmatpush1.bf16.msra.mxu0 0
      %3571 = vmatprep.subr.bf16.mxu0 0
      %3572 = vmatpush1.bf16.msra.mxu0 0
      %3573 = vmatprep.mubr.bf16.mxu0 0
      %3574 = vmatmul.mubr.bf16.gmra.mrb[0].mxu0 %v3469
      %v3575 = vpop.f32.mrb[0].mxu0
      %v3576 = vadd.f32 %v3491, %v3575
      %v3577 = vpop.f32.mrb[0].mxu0
      %v3578 = vpop.f32.mrb[0].mxu0
      %v3579 = vadd.f32 %v3491, %v3578
      %v3580 = vpop.f32.mrb[0].mxu0
      %3581 = vdwg.mxu0
      %v3582 = vmul.f32 %v3576, %v3576
      %v3583 = vmul.f32 %v3579, %v3579
      %v3584 = vmul.f32 %v3576, %v3582
      %v3585 = vmul.f32 %v3579, %v3583
      %v3586 = vmul.f32 %v3584, 0.044715
      %v3587 = vmul.f32 %v3585, 0.044715
      %v3588 = vadd.f32 %v3576, %v3586
      %v3589 = vadd.f32 %v3579, %v3587
      %v3590 = vmul.f32 %v3588, 0.7978846
      %v3591 = vmul.f32 %v3589, 0.7978846
      %v3592 = vtanh.pop %v3590
      %v3593 = vtanh.pop %v3591
      %v3594 = vadd.f32 %v3592, 1.0
      %v3595 = vadd.f32 %v3593, 1.0
      %v3596 = vmul.f32 %v3594, 0.5
      %v3597 = vmul.f32 %v3595, 0.5
      %v3598 = vmul.f32 %v3576, %v3596
      %v3599 = vmul.f32 %v3579, %v3597
      %v3600 = vpack.c.bf16 %v3599, %v3598
      %v3601 = vld [vmem:[%s994] sm:$0xf]
      %v3602 = vld [vmem:[%s994 + $0x4] sm:$0xf]
      %v3603 = vld [vmem:[%s994 + $0x8] sm:$0xf]
      %v3604 = vld [vmem:[%s994 + $0xc] sm:$0xf]
      %v3605 = vld [vmem:[%s994 + $0x10] sm:$0xf]
      %v3606 = vld [vmem:[%s994 + $0x14] sm:$0xf]
      %v3607 = vld [vmem:[%s994 + $0x18] sm:$0xf]
      %v3608 = vld [vmem:[%s994 + $0x1c] sm:$0xf]
      %v3609 = vld [vmem:[%s994 + $0x20] sm:$0xf]
      %v3610 = vld [vmem:[%s994 + $0x24] sm:$0xf]
      %v3611 = vld [vmem:[%s994 + $0x28] sm:$0xf]
      %v3612 = vld [vmem:[%s994 + $0x2c] sm:$0xf]
      %v3613 = vld [vmem:[%s994 + $0x30] sm:$0xf]
      %v3614 = vld [vmem:[%s994 + $0x34] sm:$0xf]
      %v3615 = vld [vmem:[%s994 + $0x38] sm:$0xf]
      %v3616 = vld [vmem:[%s994 + $0x3c] sm:$0xf]
      %v3617 = vld [vmem:[%s1001] sm:$0x1]
      %v3619 = vlaneseq
      %v3620 = vshrl.u32 %v3619, 7
      %v3621 = vsub.s32 0, %v3620
      %v3622 = vrot.slane %v3617, %v3621
      %v3640 = vunpack.c.l.b16 %v3601
      %v3641 = vunpack.c.l.b16 %v3602
      %v3642 = vunpack.c.l.b16 %v3603
      %v3643 = vunpack.c.l.b16 %v3604
      %v3644 = vunpack.c.l.b16 %v3605
      %v3645 = vunpack.c.l.b16 %v3606
      %v3646 = vunpack.c.l.b16 %v3607
      %v3647 = vunpack.c.l.b16 %v3608
      %v3648 = vunpack.c.l.b16 %v3609
      %v3649 = vunpack.c.l.b16 %v3610
      %v3650 = vunpack.c.l.b16 %v3611
      %v3651 = vunpack.c.l.b16 %v3612
      %v3652 = vunpack.c.l.b16 %v3613
      %v3653 = vunpack.c.l.b16 %v3614
      %v3654 = vunpack.c.l.b16 %v3615
      %v3655 = vunpack.c.l.b16 %v3616
      %v3656 = vpack.c.b16 %v3641, %v3640
      %v3657 = vpack.c.b16 %v3643, %v3642
      %v3658 = vpack.c.b16 %v3645, %v3644
      %v3659 = vpack.c.b16 %v3647, %v3646
      %v3660 = vpack.c.b16 %v3649, %v3648
      %v3661 = vpack.c.b16 %v3651, %v3650
      %v3662 = vpack.c.b16 %v3653, %v3652
      %v3663 = vpack.c.b16 %v3655, %v3654
      %3672 = vmatprep.subr.bf16.mxu0 0
      %3673 = vmatpush1.bf16.msra.mxu0 %v3656
      %3674 = vmatprep.subr.bf16.mxu0 0
      %3675 = vmatpush1.bf16.msra.mxu0 %v3657
      %3676 = vmatprep.subr.bf16.mxu0 0
      %3677 = vmatpush1.bf16.msra.mxu0 %v3658
      %3678 = vmatprep.subr.bf16.mxu0 0
      %3679 = vmatpush1.bf16.msra.mxu0 %v3659
      %3680 = vmatprep.subr.bf16.mxu0 0
      %3681 = vmatpush1.bf16.msra.mxu0 %v3660
      %3682 = vmatprep.subr.bf16.mxu0 0
      %3683 = vmatpush1.bf16.msra.mxu0 %v3661
      %3684 = vmatprep.subr.bf16.mxu0 0
      %3685 = vmatpush1.bf16.msra.mxu0 %v3662
      %3686 = vmatprep.subr.bf16.mxu0 0
      %3687 = vmatpush1.bf16.msra.mxu0 %v3663
      %3688 = vmatprep.subr.bf16.mxu0 0
      %3689 = vmatpush1.bf16.msra.mxu0 0
      %3690 = vmatprep.subr.bf16.mxu0 0
      %3691 = vmatpush1.bf16.msra.mxu0 0
      %3692 = vmatprep.subr.bf16.mxu0 0
      %3693 = vmatpush1.bf16.msra.mxu0 0
      %3694 = vmatprep.subr.bf16.mxu0 0
      %3695 = vmatpush1.bf16.msra.mxu0 0
      %3696 = vmatprep.subr.bf16.mxu0 0
      %3697 = vmatpush1.bf16.msra.mxu0 0
      %3698 = vmatprep.subr.bf16.mxu0 0
      %3699 = vmatpush1.bf16.msra.mxu0 0
      %3700 = vmatprep.subr.bf16.mxu0 0
      %3701 = vmatpush1.bf16.msra.mxu0 0
      %3702 = vmatprep.subr.bf16.mxu0 0
      %3703 = vmatpush1.bf16.msra.mxu0 0
      %3704 = vmatprep.mubr.bf16.mxu0 0
      %3705 = vmatmul.mubr.bf16.gmra.mrb[0].mxu0 %v3600
      %v3706 = vpop.f32.mrb[0].mxu0
      %v3707 = vadd.f32 %v3622, %v3706
      %v3708 = vpop.f32.mrb[0].mxu0
      %v3709 = vpop.f32.mrb[0].mxu0
      %v3710 = vadd.f32 %v3622, %v3709
      %v3711 = vpop.f32.mrb[0].mxu0
      %3712 = vdwg.mxu0
      %v3713 = vadd.f32 %v3707, %v3467
      %v3714 = vadd.f32 %v3710, %v3468
      %v3715 = vld [vmem:[%s1008] sm:$0x1]
      %v3716 = vld [vmem:[%s1015] sm:$0x1]
      %3717 = vadd.xlane.f32.xlu0 %v3713
      %v3718 = vpop.xlane.xlu0 %3717
      %3719 = vadd.xlane.f32.xlu0 %v3714
      %v3720 = vpop.xlane.xlu0 %3719
      %v3721 = vmul.f32 %v3718, 0.03125
      %v3722 = vmul.f32 %v3720, 0.03125
      %v3723 = vsub.f32 %v3713, %v3721
      %v3724 = vsub.f32 %v3714, %v3722
      %v3725 = vmul.f32 %v3723, %v1033
      %v3726 = vmul.f32 %v3724, %v1033
      %v3727 = vmul.f32 %v3725, %v3725
      %v3728 = vmul.f32 %v3726, %v3726
      %3729 = vadd.xlane.f32.xlu0 %v3727
      %v3730 = vpop.xlane.xlu0 %3729
      %3731 = vadd.xlane.f32.xlu0 %v3728
      %v3732 = vpop.xlane.xlu0 %3731
      %v3733 = vmul.f32 %v3730, 0.03125
      %v3734 = vmul.f32 %v3732, 0.03125
      %v3735 = vadd.f32 %v3733, 1e-12
      %v3736 = vadd.f32 %v3734, 1e-12
      %v3737 = vrsqrt.pop %v3735
      %v3738 = vrsqrt.pop %v3736
      %v3739 = vmul.f32 %v3725, %v3737
      %v3740 = vmul.f32 %v3726, %v3738
      %v3742 = vlaneseq
      %v3743 = vshrl.u32 %v3742, 7
      %v3744 = vsub.s32 0, %v3743
      %v3745 = vrot.slane %v3715, %v3744
      %v3747 = vmul.f32 %v3739, %v3745
      %v3748 = vmul.f32 %v3740, %v3745
      %v3750 = vlaneseq
      %v3751 = vshrl.u32 %v3750, 7
      %v3752 = vsub.s32 0, %v3751
      %v3753 = vrot.slane %v3716, %v3752
      %v3755 = vadd.f32 %v3747, %v3753
      %v3756 = vadd.f32 %v3748, %v3753
      %3757 = vst [vmem:[#allocation2] sm:$0xff] %v3755
      %3758 = vst [vmem:[#allocation2 + $0x8] sm:$0xff] %v3756
      %p3759 = scmp.eq.s32.totalorder %s34, 1
      // Predicated region
      $region97: #{a_call__.1} parent=91 // pred_check
        %p3760 = pneg %p3759
      $region98: #{a_call__.1} parent=91 // pred_check_branch
        %3762 = sbr.rel (%p3760) target = $region100
      $region99: #{a_call__.1} parent=91 // pred_region
        %v3763 = vld [vmem:[#allocation2] ss:$8 sm:$0x3]
        %v3764 = vpack.c.bf16 %v3763, %v3763
        %v3765 = vld [vmem:[%s1020] sm:$0xf]
        %v3766 = vld [vmem:[%s1020 + $0x4] sm:$0xf]
        %v3767 = vld [vmem:[%s1020 + $0x8] sm:$0xf]
        %v3768 = vld [vmem:[%s1020 + $0xc] sm:$0xf]
        %v3769 = vld [vmem:[%s1020 + $0x10] sm:$0xf]
        %v3770 = vld [vmem:[%s1020 + $0x14] sm:$0xf]
        %v3771 = vld [vmem:[%s1020 + $0x18] sm:$0xf]
        %v3772 = vld [vmem:[%s1020 + $0x1c] sm:$0xf]
        %v3773 = vld [vmem:[%s1020 + $0x20] sm:$0xf]
        %v3774 = vld [vmem:[%s1020 + $0x24] sm:$0xf]
        %v3775 = vld [vmem:[%s1020 + $0x28] sm:$0xf]
        %v3776 = vld [vmem:[%s1020 + $0x2c] sm:$0xf]
        %v3777 = vld [vmem:[%s1020 + $0x30] sm:$0xf]
        %v3778 = vld [vmem:[%s1020 + $0x34] sm:$0xf]
        %v3779 = vld [vmem:[%s1020 + $0x38] sm:$0xf]
        %v3780 = vld [vmem:[%s1020 + $0x3c] sm:$0xf]
        %v3781 = vld [vmem:[%s1023] sm:$0x1]
        %v3783 = vlaneseq
        %v3784 = vshrl.u32 %v3783, 7
        %v3785 = vsub.s32 0, %v3784
        %v3786 = vrot.slane %v3781, %v3785
        %v3804 = vunpack.c.l.b16 %v3765
        %v3805 = vunpack.c.l.b16 %v3766
        %v3806 = vunpack.c.l.b16 %v3767
        %v3807 = vunpack.c.l.b16 %v3768
        %v3808 = vunpack.c.l.b16 %v3769
        %v3809 = vunpack.c.l.b16 %v3770
        %v3810 = vunpack.c.l.b16 %v3771
        %v3811 = vunpack.c.l.b16 %v3772
        %v3812 = vunpack.c.l.b16 %v3773
        %v3813 = vunpack.c.l.b16 %v3774
        %v3814 = vunpack.c.l.b16 %v3775
        %v3815 = vunpack.c.l.b16 %v3776
        %v3816 = vunpack.c.l.b16 %v3777
        %v3817 = vunpack.c.l.b16 %v3778
        %v3818 = vunpack.c.l.b16 %v3779
        %v3819 = vunpack.c.l.b16 %v3780
        %v3820 = vpack.c.b16 %v3805, %v3804
        %v3821 = vpack.c.b16 %v3807, %v3806
        %v3822 = vpack.c.b16 %v3809, %v3808
        %v3823 = vpack.c.b16 %v3811, %v3810
        %v3824 = vpack.c.b16 %v3813, %v3812
        %v3825 = vpack.c.b16 %v3815, %v3814
        %v3826 = vpack.c.b16 %v3817, %v3816
        %v3827 = vpack.c.b16 %v3819, %v3818
        %3836 = vmatprep.subr.bf16.mxu0 0
        %3837 = vmatpush1.bf16.msra.mxu0 %v3820
        %3838 = vmatprep.subr.bf16.mxu0 0
        %3839 = vmatpush1.bf16.msra.mxu0 %v3821
        %3840 = vmatprep.subr.bf16.mxu0 0
        %3841 = vmatpush1.bf16.msra.mxu0 %v3822
        %3842 = vmatprep.subr.bf16.mxu0 0
        %3843 = vmatpush1.bf16.msra.mxu0 %v3823
        %3844 = vmatprep.subr.bf16.mxu0 0
        %3845 = vmatpush1.bf16.msra.mxu0 %v3824
        %3846 = vmatprep.subr.bf16.mxu0 0
        %3847 = vmatpush1.bf16.msra.mxu0 %v3825
        %3848 = vmatprep.subr.bf16.mxu0 0
        %3849 = vmatpush1.bf16.msra.mxu0 %v3826
        %3850 = vmatprep.subr.bf16.mxu0 0
        %3851 = vmatpush1.bf16.msra.mxu0 %v3827
        %3852 = vmatprep.subr.bf16.mxu0 0
        %3853 = vmatpush1.bf16.msra.mxu0 0
        %3854 = vmatprep.subr.bf16.mxu0 0
        %3855 = vmatpush1.bf16.msra.mxu0 0
        %3856 = vmatprep.subr.bf16.mxu0 0
        %3857 = vmatpush1.bf16.msra.mxu0 0
        %3858 = vmatprep.subr.bf16.mxu0 0
        %3859 = vmatpush1.bf16.msra.mxu0 0
        %3860 = vmatprep.subr.bf16.mxu0 0
        %3861 = vmatpush1.bf16.msra.mxu0 0
        %3862 = vmatprep.subr.bf16.mxu0 0
        %3863 = vmatpush1.bf16.msra.mxu0 0
        %3864 = vmatprep.subr.bf16.mxu0 0
        %3865 = vmatpush1.bf16.msra.mxu0 0
        %3866 = vmatprep.subr.bf16.mxu0 0
        %3867 = vmatpush1.bf16.msra.mxu0 0
        %3868 = vmatprep.mubr.bf16.mxu0 0
        %3869 = vmatmul.mubr.bf16.gmra.mrb[0].mxu0 %v3764
        %v3870 = vpop.f32.mrb[0].mxu0
        %v3871 = vadd.f32 %v3786, %v3870
        %v3872 = vpop.f32.mrb[0].mxu0
        %v3873 = vpop.f32.mrb[0].mxu0
        %v3874 = vpop.f32.mrb[0].mxu0
        %3875 = vdwg.mxu0
        %v3876 = vtanh.pop %v3871
        %3877 = vst [vmem:[%s1027] sm:$0x3] %v3876
      $region100: #{a_call__.1} parent=91 // pred_fallthru
        _
      %p3878 = scmp.lt.s32.totalorder %s33, 1
      %s3879 = scalar_select %p3878, %s33, 1
      %s3880 = smul.addr %s3879, 2
      %s3881 = scalar_lea.vmem %s18, %s3880
      // Predicated region
      $region101: #{a_call__.1} parent=91 // pred_check
        %p3882 = pneg %p551
      $region102: #{a_call__.1} parent=91 // pred_check_branch
        %3884 = sbr.rel (%p3882) target = $region104
      $region103: #{a_call__.1} parent=91 // pred_region
        _
      $region104: #{a_call__.1} parent=91 // pred_fallthru
        _
    $region92: #{a_call__.1} parent=5 // pred_fallthru
      _
    %p3885 = scmp.le.s32.totalorder 2, %s24
    // Predicated region
    $region105: #{a_call__.1} parent=5 // pred_check
      %p3886 = pneg %p3885
    $region106: #{a_call__.1} parent=5 // pred_check_branch
      %3888 = sbr.rel (%p3886) target = $region108
    $region107: #{a_call__.1} parent=5 // pred_region
      %s3889 = ssub.s32 %s24, 2
      // Predicated region
      $region109: #{a_call__.1} parent=107 // pred_check
        %p3890 = pneg %p557
      $region110: #{a_call__.1} parent=107 // pred_check_branch
        %3892 = sbr.rel (%p3890) target = $region112
      $region111: #{a_call__.1} parent=107 // pred_region
        %p3893 = scmp.lt.s32.totalorder %s35, 1
        %s3894 = scalar_select %p3893, %s35, 1
        %s3895 = smul.addr %s3894, 2
        %s3896 = scalar_lea.vmem %s18, %s3895
      $region112: #{a_call__.1} parent=107 // pred_fallthru
        _
    $region108: #{a_call__.1} parent=5 // pred_fallthru
      _
  $region6: #{a_call__.1} parent=0 // loop_footer
    %s28 = sadd.s32 1, %s24
  $region7: #{a_call__.1} parent=0 // loop_footer_branch
    %23 = sbr.rel target = $region3
  $region8: #{a_call__.1} parent=0 // loop_exit
    _

</llo_original>
